<compile_context>
chip_gen: v7x
topology: tpu7x:2x2x1
jax: 0.10.0
libtpu: 0.0.40
codegen_flags: <defaults>
</compile_context>

<pallas_src>
import functools
import math

import jax
import jax.numpy as jnp
from jax.experimental import pallas as pl
from jax.experimental.pallas import tpu as pltpu


def _attn_kernel(x_ref, w_in_ref, b_in_ref, w_out_h_ref, b_out_ref, o_ref,
                 *, num_heads: int):
    # x_ref:       (Bb, E, S)   f32   input block, features on sublanes
    # w_in_ref:    (3E, E)      f32   packed q/k/v projection (q rows pre-scaled by 1/sqrt(hd))
    # b_in_ref:    (3E, 1)      f32   packed bias (q part pre-scaled)
    # w_out_h_ref: (nh, E, hd)  bf16  output projection, per-head column blocks
    # b_out_ref:   (E, 1)       f32
    # o_ref:       (Bb, E, S)         output block, same (E, S) orientation as input
    Bb, E, S = x_ref.shape
    hd = E // num_heads

    w_in = w_in_ref[...]
    b_in = b_in_ref[...]
    w_out_h = w_out_h_ref[...]
    b_out = b_out_ref[...]

    def one_image(bi, carry):
        x_b = x_ref[bi]                                                    # (E, S) f32
        # Packed QKV projection, features on sublanes: (3E, E) @ (E, S).
        qkv = jnp.dot(w_in, x_b, preferred_element_type=jnp.float32) + b_in  # (3E, S) f32

        acc = None
        for h in range(num_heads):
            # hd = 8 sublane slices: tile-aligned for f32, no relayout.
            q_h = qkv[h * hd:(h + 1) * hd, :]                              # (hd, S), scale folded in
            k_h = qkv[E + h * hd:E + (h + 1) * hd, :]                      # (hd, S)
            v_h = qkv[2 * E + h * hd:2 * E + (h + 1) * hd, :]              # (hd, S)

            # Scores in (key, query) orientation; contraction over the hd sublanes.
            s = jnp.einsum('dk,dq->kq', k_h, q_h,
                           preferred_element_type=jnp.float32)             # (S, S) f32
            s = s - jnp.max(s, axis=0, keepdims=True)
            p = jnp.exp(s)                                                 # s not used again
            denom = jnp.sum(p, axis=0, keepdims=True)
            r = pl.reciprocal(denom, approx=True)
            r = r * (2.0 - denom * r)                                      # one Newton step
            p = (p * r).astype(jnp.bfloat16)                               # (S, S) bf16
            # TODO(synk): dropout(p=0.15) on attention weights is training-only;
            # this kernel is the deterministic eval-mode forward.

            # Fold the output projection into V, then one fat K=S contraction.
            vprojT = jnp.dot(w_out_h[h], v_h.astype(jnp.bfloat16),
                             preferred_element_type=jnp.float32)           # (E, S) f32
            contrib = jnp.dot(vprojT.astype(jnp.bfloat16), p,
                              preferred_element_type=jnp.float32)          # (E, S), K = S
            acc = contrib if acc is None else acc + contrib

        o_ref[bi] = (acc + b_out).astype(o_ref.dtype)                      # (E, S) store
        return carry

    jax.lax.fori_loop(0, Bb, one_image, 0, unroll=True)


def attn_layer_pallas(x_nchw, w_in, b_in, w_out, b_out, *, num_heads: int,
                      batch_blocks: int = 1):
    """Pallas implementation of AttnLayer.forward (eval mode, no dropout).

    batch_blocks=1 processes the whole batch in one grid step (preferred on
    single-TensorCore v5e/v6e).  On v7x, benchmark batch_blocks=2 to split the
    batch across the two TensorCores.
    """
    b, c, h, w = x_nchw.shape
    E, S = c, h * w
    assert E % num_heads == 0 and b % batch_blocks == 0
    hd = E // num_heads
    bb = b // batch_blocks
    scale = 1.0 / math.sqrt(hd)

    # Glue: NCHW -> (B, E, S) is a pure reshape (no transpose, no HBM round trip).
    x_bes = x_nchw.reshape(b, E, S)

    # --- trace-time weight preprocessing (constant work, nothing per-step) ---
    # Fold 1/sqrt(hd) into the q third of the packed projection weight/bias.
    scale_vec = jnp.concatenate([jnp.full((E,), scale, dtype=w_in.dtype),
                                 jnp.ones((2 * E,), dtype=w_in.dtype)])
    w_in_scaled = w_in * scale_vec[:, None]                       # (3E, E) f32
    b_in_col = (b_in * scale_vec).reshape(3 * E, 1)               # (3E, 1) f32
    # Per-head column blocks of the output projection, pre-cast to bf16.
    w_out_heads = (w_out.reshape(E, num_heads, hd)
                        .transpose(1, 0, 2)
                        .astype(jnp.bfloat16))                    # (nh, E, hd)
    b_out_col = b_out.reshape(E, 1)                               # (E, 1) f32

    kernel = functools.partial(_attn_kernel, num_heads=num_heads)

    out_bes = pl.pallas_call(
        kernel,
        out_shape=jax.ShapeDtypeStruct((b, E, S), x_bes.dtype),
        grid_spec=pltpu.PrefetchScalarGridSpec(
            num_scalar_prefetch=0,
            grid=(batch_blocks,),
            in_specs=[
                pl.BlockSpec((bb, E, S), lambda i: (i, 0, 0)),            # x (B, E, S)
                pl.BlockSpec((3 * E, E), lambda i: (0, 0)),               # w_in (q pre-scaled)
                pl.BlockSpec((3 * E, 1), lambda i: (0, 0)),               # b_in (q pre-scaled)
                pl.BlockSpec((num_heads, E, hd), lambda i: (0, 0, 0)),    # w_out per head (bf16)
                pl.BlockSpec((E, 1), lambda i: (0, 0)),                   # b_out
            ],
            out_specs=pl.BlockSpec((bb, E, S), lambda i: (i, 0, 0)),
        ),
        compiler_params=pltpu.CompilerParams(
            dimension_semantics=("parallel",)),
    )(x_bes, w_in_scaled, b_in_col, w_out_heads, b_out_col)

    # Glue: (B, E, S) -> NCHW is again a pure reshape.
    return out_bes.reshape(b, c, h, w)


def attn_layer_reference(x_nchw, w_in, b_in, w_out, b_out, *, num_heads: int):
    """Pure-JAX reference matching torch.nn.MultiheadAttention (eval mode)."""
    b, c, h, w = x_nchw.shape
    S, E = h * w, c
    hd = E // num_heads
    x = x_nchw.reshape(b, c, S).transpose(0, 2, 1)                   # (b, S, E)
    qkv = jnp.einsum('bse,fe->bsf', x, w_in) + b_in                  # (b, S, 3E)
    q, k, v = qkv[..., :E], qkv[..., E:2 * E], qkv[..., 2 * E:]

    def split(t):  # (b, S, E) -> (b, nh, S, hd)
        return t.reshape(b, S, num_heads, hd).transpose(0, 2, 1, 3)

    q, k, v = split(q) / math.sqrt(hd), split(k), split(v)
    s = jnp.einsum('bnqd,bnkd->bnqk', q, k)
    p = jax.nn.softmax(s, axis=-1)
    o = jnp.einsum('bnqk,bnkd->bnqd', p, v)                          # (b, nh, S, hd)
    o = o.transpose(0, 2, 1, 3).reshape(b, S, E)
    o = jnp.einsum('bse,fe->bsf', o, w_out) + b_out
    return o.transpose(0, 2, 1).reshape(b, c, h, w)


if __name__ == "__main__":
    # Small shapes consistent with AttnLayer: embed_dim = channels, 4 heads.
    # S = H*W = 128 keeps every in-kernel tensor's last dim lane-dense (>= 128).
    B, C, H, W = 2, 32, 8, 16          # seq = 128, head_dim = 8
    NUM_HEADS = 4

    key = jax.random.PRNGKey(0)
    kx, kw1, kb1, kw2, kb2 = jax.random.split(key, 5)

    x = jax.random.normal(kx, (B, C, H, W), dtype=jnp.float32)

    # Parameter shapes match nn.MultiheadAttention(C, 4):
    #   in_proj_weight (3C, C), in_proj_bias (3C,), out_proj.weight (C, C), out_proj.bias (C,)
    w_in = jax.random.normal(kw1, (3 * C, C), dtype=jnp.float32) * (1.0 / math.sqrt(C))
    b_in = jax.random.normal(kb1, (3 * C,), dtype=jnp.float32) * 0.02
    w_out = jax.random.normal(kw2, (C, C), dtype=jnp.float32) * (1.0 / math.sqrt(C))
    b_out = jax.random.normal(kb2, (C,), dtype=jnp.float32) * 0.02

    out = attn_layer_pallas(x, w_in, b_in, w_out, b_out, num_heads=NUM_HEADS)
    out = jax.block_until_ready(out)

    ref = attn_layer_reference(x, w_in, b_in, w_out, b_out, num_heads=NUM_HEADS)
    ref = jax.block_until_ready(ref)

    assert out.shape == (B, C, H, W)
    # Tolerance deliberately loosened from 1e-4: the AV / output-projection path
    # now uses bf16 MXU operands (f32 accumulation), per the performance review.
    assert jnp.allclose(out, ref, atol=2e-2, rtol=2e-2), "mismatch vs reference"

    print("KERNEL_OK")
</pallas_src>

<mosaic_0001>
module attributes {stable_mosaic.version = 11 : i64} {
  func.func @_attn_kernel(%arg0: i32, %arg1: memref<2x32x128xf32, #tpu.memory_space<vmem>>, %arg2: memref<96x32xf32, #tpu.memory_space<vmem>>, %arg3: memref<96x1xf32, #tpu.memory_space<vmem>>, %arg4: memref<4x32x8xbf16, #tpu.memory_space<vmem>>, %arg5: memref<32x1xf32, #tpu.memory_space<vmem>>, %arg6: memref<2x32x128xf32, #tpu.memory_space<vmem>>) attributes {dimension_semantics = [#tpu.dimension_semantics<parallel>], iteration_bounds = array<i64: 1>, scalar_prefetch = 0 : i64, scratch_operands = 0 : i64, tpu.core_type = #tpu.core_type<tc>, window_params = [{transform_indices = @transform_0, window_bounds = array<i64: 2, 32, 128>}, {pipeline_mode = #tpu.pipeline_mode<synchronous>, transform_indices = @transform_1, window_bounds = array<i64: 96, 32>}, {pipeline_mode = #tpu.pipeline_mode<synchronous>, transform_indices = @transform_2, window_bounds = array<i64: 96, 1>}, {pipeline_mode = #tpu.pipeline_mode<synchronous>, transform_indices = @transform_3, window_bounds = array<i64: 4, 32, 8>}, {pipeline_mode = #tpu.pipeline_mode<synchronous>, transform_indices = @transform_4, window_bounds = array<i64: 32, 1>}, {transform_indices = @transform_5, window_bounds = array<i64: 2, 32, 128>}]} {
    %c0 = arith.constant 0 : index
    %c0_0 = arith.constant 0 : index
    %0 = vector.load %arg2[%c0, %c0_0] : memref<96x32xf32, #tpu.memory_space<vmem>>, vector<96x32xf32>
    %c0_1 = arith.constant 0 : index
    %c0_2 = arith.constant 0 : index
    %1 = vector.load %arg3[%c0_1, %c0_2] : memref<96x1xf32, #tpu.memory_space<vmem>>, vector<96x1xf32>
    %c0_3 = arith.constant 0 : index
    %c0_4 = arith.constant 0 : index
    %c0_5 = arith.constant 0 : index
    %2 = vector.load %arg4[%c0_3, %c0_4, %c0_5] : memref<4x32x8xbf16, #tpu.memory_space<vmem>>, vector<4x32x8xbf16>
    %c0_6 = arith.constant 0 : index
    %c0_7 = arith.constant 0 : index
    %3 = vector.load %arg5[%c0_6, %c0_7] : memref<32x1xf32, #tpu.memory_space<vmem>>, vector<32x1xf32>
    %c0_i32 = arith.constant 0 : i32
    %4 = arith.index_cast %c0_i32 : i32 to index
    %c0_8 = arith.constant 0 : index
    %c0_9 = arith.constant 0 : index
    %5 = vector.load %arg1[%4, %c0_8, %c0_9] : memref<2x32x128xf32, #tpu.memory_space<vmem>>, vector<1x32x128xf32>
    %6 = vector.shape_cast %5 : vector<1x32x128xf32> to vector<32x128xf32>
    %cst = arith.constant dense<0.000000e+00> : vector<96x128xf32>
    %7 = tpu.matmul %0, %6, %cst {dimension_numbers = #tpu.dot_dimension_numbers<[1], [0], [0], [1], [0, 0, 1, 1], [], []>} : vector<96x32xf32>, vector<32x128xf32>, vector<96x128xf32> -> vector<96x128xf32>
    %8 = vector.broadcast %1 : vector<96x1xf32> to vector<96x128xf32>
    %9 = arith.addf %7, %8 : vector<96x128xf32>
    %10 = vector.extract_strided_slice %9 {offsets = [0, 0], sizes = [8, 128], strides = [1, 1]} : vector<96x128xf32> to vector<8x128xf32>
    %11 = vector.extract_strided_slice %9 {offsets = [32, 0], sizes = [8, 128], strides = [1, 1]} : vector<96x128xf32> to vector<8x128xf32>
    %12 = vector.extract_strided_slice %9 {offsets = [64, 0], sizes = [8, 128], strides = [1, 1]} : vector<96x128xf32> to vector<8x128xf32>
    "tpu.trace_start"() <{level = 10 : i32, message = "dk,dq->kq"}> : () -> ()
    %cst_10 = arith.constant dense<0.000000e+00> : vector<128x128xf32>
    %13 = tpu.matmul %11, %10, %cst_10 {dimension_numbers = #tpu.dot_dimension_numbers<[0], [0], [1], [1], [0, 1, 1, 1], [], []>} : vector<8x128xf32>, vector<8x128xf32>, vector<128x128xf32> -> vector<128x128xf32>
    "tpu.trace_stop"() : () -> ()
    %cst_11 = arith.constant dense<0xFF800000> : vector<128xf32>
    %14 = vector.multi_reduction <maximumf>, %13, %cst_11 [0] : vector<128x128xf32> to vector<128xf32>
    %15 = vector.shape_cast %14 : vector<128xf32> to vector<1x128xf32>
    %16 = vector.broadcast %15 : vector<1x128xf32> to vector<128x128xf32>
    %17 = arith.subf %13, %16 : vector<128x128xf32>
    %18 = math.exp %17 : vector<128x128xf32>
    %cst_12 = arith.constant dense<0.000000e+00> : vector<128xf32>
    %19 = vector.multi_reduction <add>, %18, %cst_12 [0] : vector<128x128xf32> to vector<128xf32>
    %20 = vector.shape_cast %19 : vector<128xf32> to vector<1x128xf32>
    %21 = tpu.reciprocal %20 {approx = true} : vector<1x128xf32> -> vector<1x128xf32>
    %22 = arith.mulf %20, %21 : vector<1x128xf32>
    %cst_13 = arith.constant 2.000000e+00 : f32
    %23 = vector.broadcast %cst_13 : f32 to vector<1x128xf32>
    %24 = arith.subf %23, %22 : vector<1x128xf32>
    %25 = arith.mulf %21, %24 : vector<1x128xf32>
    %26 = vector.broadcast %25 : vector<1x128xf32> to vector<128x128xf32>
    %27 = arith.mulf %18, %26 : vector<128x128xf32>
    %28 = arith.truncf %27 : vector<128x128xf32> to vector<128x128xbf16>
    %29 = vector.extract_strided_slice %2 {offsets = [0, 0, 0], sizes = [1, 32, 8], strides = [1, 1, 1]} : vector<4x32x8xbf16> to vector<1x32x8xbf16>
    %30 = vector.shape_cast %29 : vector<1x32x8xbf16> to vector<32x8xbf16>
    %31 = arith.truncf %12 : vector<8x128xf32> to vector<8x128xbf16>
    %cst_14 = arith.constant dense<0.000000e+00> : vector<32x128xf32>
    %32 = tpu.matmul %30, %31, %cst_14 {dimension_numbers = #tpu.dot_dimension_numbers<[1], [0], [0], [1], [0, 0, 1, 1], [], []>} : vector<32x8xbf16>, vector<8x128xbf16>, vector<32x128xf32> -> vector<32x128xf32>
    %33 = arith.truncf %32 : vector<32x128xf32> to vector<32x128xbf16>
    %cst_15 = arith.constant dense<0.000000e+00> : vector<32x128xf32>
    %34 = tpu.matmul %33, %28, %cst_15 {dimension_numbers = #tpu.dot_dimension_numbers<[1], [0], [0], [1], [0, 0, 1, 1], [], []>} : vector<32x128xbf16>, vector<128x128xbf16>, vector<32x128xf32> -> vector<32x128xf32>
    %35 = vector.extract_strided_slice %9 {offsets = [8, 0], sizes = [8, 128], strides = [1, 1]} : vector<96x128xf32> to vector<8x128xf32>
    %36 = vector.extract_strided_slice %9 {offsets = [40, 0], sizes = [8, 128], strides = [1, 1]} : vector<96x128xf32> to vector<8x128xf32>
    %37 = vector.extract_strided_slice %9 {offsets = [72, 0], sizes = [8, 128], strides = [1, 1]} : vector<96x128xf32> to vector<8x128xf32>
    "tpu.trace_start"() <{level = 10 : i32, message = "dk,dq->kq"}> : () -> ()
    %cst_16 = arith.constant dense<0.000000e+00> : vector<128x128xf32>
    %38 = tpu.matmul %36, %35, %cst_16 {dimension_numbers = #tpu.dot_dimension_numbers<[0], [0], [1], [1], [0, 1, 1, 1], [], []>} : vector<8x128xf32>, vector<8x128xf32>, vector<128x128xf32> -> vector<128x128xf32>
    "tpu.trace_stop"() : () -> ()
    %cst_17 = arith.constant dense<0xFF800000> : vector<128xf32>
    %39 = vector.multi_reduction <maximumf>, %38, %cst_17 [0] : vector<128x128xf32> to vector<128xf32>
    %40 = vector.shape_cast %39 : vector<128xf32> to vector<1x128xf32>
    %41 = vector.broadcast %40 : vector<1x128xf32> to vector<128x128xf32>
    %42 = arith.subf %38, %41 : vector<128x128xf32>
    %43 = math.exp %42 : vector<128x128xf32>
    %cst_18 = arith.constant dense<0.000000e+00> : vector<128xf32>
    %44 = vector.multi_reduction <add>, %43, %cst_18 [0] : vector<128x128xf32> to vector<128xf32>
    %45 = vector.shape_cast %44 : vector<128xf32> to vector<1x128xf32>
    %46 = tpu.reciprocal %45 {approx = true} : vector<1x128xf32> -> vector<1x128xf32>
    %47 = arith.mulf %45, %46 : vector<1x128xf32>
    %cst_19 = arith.constant 2.000000e+00 : f32
    %48 = vector.broadcast %cst_19 : f32 to vector<1x128xf32>
    %49 = arith.subf %48, %47 : vector<1x128xf32>
    %50 = arith.mulf %46, %49 : vector<1x128xf32>
    %51 = vector.broadcast %50 : vector<1x128xf32> to vector<128x128xf32>
    %52 = arith.mulf %43, %51 : vector<128x128xf32>
    %53 = arith.truncf %52 : vector<128x128xf32> to vector<128x128xbf16>
    %54 = vector.extract_strided_slice %2 {offsets = [1, 0, 0], sizes = [1, 32, 8], strides = [1, 1, 1]} : vector<4x32x8xbf16> to vector<1x32x8xbf16>
    %55 = vector.shape_cast %54 : vector<1x32x8xbf16> to vector<32x8xbf16>
    %56 = arith.truncf %37 : vector<8x128xf32> to vector<8x128xbf16>
    %cst_20 = arith.constant dense<0.000000e+00> : vector<32x128xf32>
    %57 = tpu.matmul %55, %56, %cst_20 {dimension_numbers = #tpu.dot_dimension_numbers<[1], [0], [0], [1], [0, 0, 1, 1], [], []>} : vector<32x8xbf16>, vector<8x128xbf16>, vector<32x128xf32> -> vector<32x128xf32>
    %58 = arith.truncf %57 : vector<32x128xf32> to vector<32x128xbf16>
    %cst_21 = arith.constant dense<0.000000e+00> : vector<32x128xf32>
    %59 = tpu.matmul %58, %53, %cst_21 {dimension_numbers = #tpu.dot_dimension_numbers<[1], [0], [0], [1], [0, 0, 1, 1], [], []>} : vector<32x128xbf16>, vector<128x128xbf16>, vector<32x128xf32> -> vector<32x128xf32>
    %60 = arith.addf %34, %59 : vector<32x128xf32>
    %61 = vector.extract_strided_slice %9 {offsets = [16, 0], sizes = [8, 128], strides = [1, 1]} : vector<96x128xf32> to vector<8x128xf32>
    %62 = vector.extract_strided_slice %9 {offsets = [48, 0], sizes = [8, 128], strides = [1, 1]} : vector<96x128xf32> to vector<8x128xf32>
    %63 = vector.extract_strided_slice %9 {offsets = [80, 0], sizes = [8, 128], strides = [1, 1]} : vector<96x128xf32> to vector<8x128xf32>
    "tpu.trace_start"() <{level = 10 : i32, message = "dk,dq->kq"}> : () -> ()
    %cst_22 = arith.constant dense<0.000000e+00> : vector<128x128xf32>
    %64 = tpu.matmul %62, %61, %cst_22 {dimension_numbers = #tpu.dot_dimension_numbers<[0], [0], [1], [1], [0, 1, 1, 1], [], []>} : vector<8x128xf32>, vector<8x128xf32>, vector<128x128xf32> -> vector<128x128xf32>
    "tpu.trace_stop"() : () -> ()
    %cst_23 = arith.constant dense<0xFF800000> : vector<128xf32>
    %65 = vector.multi_reduction <maximumf>, %64, %cst_23 [0] : vector<128x128xf32> to vector<128xf32>
    %66 = vector.shape_cast %65 : vector<128xf32> to vector<1x128xf32>
    %67 = vector.broadcast %66 : vector<1x128xf32> to vector<128x128xf32>
    %68 = arith.subf %64, %67 : vector<128x128xf32>
    %69 = math.exp %68 : vector<128x128xf32>
    %cst_24 = arith.constant dense<0.000000e+00> : vector<128xf32>
    %70 = vector.multi_reduction <add>, %69, %cst_24 [0] : vector<128x128xf32> to vector<128xf32>
    %71 = vector.shape_cast %70 : vector<128xf32> to vector<1x128xf32>
    %72 = tpu.reciprocal %71 {approx = true} : vector<1x128xf32> -> vector<1x128xf32>
    %73 = arith.mulf %71, %72 : vector<1x128xf32>
    %cst_25 = arith.constant 2.000000e+00 : f32
    %74 = vector.broadcast %cst_25 : f32 to vector<1x128xf32>
    %75 = arith.subf %74, %73 : vector<1x128xf32>
    %76 = arith.mulf %72, %75 : vector<1x128xf32>
    %77 = vector.broadcast %76 : vector<1x128xf32> to vector<128x128xf32>
    %78 = arith.mulf %69, %77 : vector<128x128xf32>
    %79 = arith.truncf %78 : vector<128x128xf32> to vector<128x128xbf16>
    %80 = vector.extract_strided_slice %2 {offsets = [2, 0, 0], sizes = [1, 32, 8], strides = [1, 1, 1]} : vector<4x32x8xbf16> to vector<1x32x8xbf16>
    %81 = vector.shape_cast %80 : vector<1x32x8xbf16> to vector<32x8xbf16>
    %82 = arith.truncf %63 : vector<8x128xf32> to vector<8x128xbf16>
    %cst_26 = arith.constant dense<0.000000e+00> : vector<32x128xf32>
    %83 = tpu.matmul %81, %82, %cst_26 {dimension_numbers = #tpu.dot_dimension_numbers<[1], [0], [0], [1], [0, 0, 1, 1], [], []>} : vector<32x8xbf16>, vector<8x128xbf16>, vector<32x128xf32> -> vector<32x128xf32>
    %84 = arith.truncf %83 : vector<32x128xf32> to vector<32x128xbf16>
    %cst_27 = arith.constant dense<0.000000e+00> : vector<32x128xf32>
    %85 = tpu.matmul %84, %79, %cst_27 {dimension_numbers = #tpu.dot_dimension_numbers<[1], [0], [0], [1], [0, 0, 1, 1], [], []>} : vector<32x128xbf16>, vector<128x128xbf16>, vector<32x128xf32> -> vector<32x128xf32>
    %86 = arith.addf %60, %85 : vector<32x128xf32>
    %87 = vector.extract_strided_slice %9 {offsets = [24, 0], sizes = [8, 128], strides = [1, 1]} : vector<96x128xf32> to vector<8x128xf32>
    %88 = vector.extract_strided_slice %9 {offsets = [56, 0], sizes = [8, 128], strides = [1, 1]} : vector<96x128xf32> to vector<8x128xf32>
    %89 = vector.extract_strided_slice %9 {offsets = [88, 0], sizes = [8, 128], strides = [1, 1]} : vector<96x128xf32> to vector<8x128xf32>
    "tpu.trace_start"() <{level = 10 : i32, message = "dk,dq->kq"}> : () -> ()
    %cst_28 = arith.constant dense<0.000000e+00> : vector<128x128xf32>
    %90 = tpu.matmul %88, %87, %cst_28 {dimension_numbers = #tpu.dot_dimension_numbers<[0], [0], [1], [1], [0, 1, 1, 1], [], []>} : vector<8x128xf32>, vector<8x128xf32>, vector<128x128xf32> -> vector<128x128xf32>
    "tpu.trace_stop"() : () -> ()
    %cst_29 = arith.constant dense<0xFF800000> : vector<128xf32>
    %91 = vector.multi_reduction <maximumf>, %90, %cst_29 [0] : vector<128x128xf32> to vector<128xf32>
    %92 = vector.shape_cast %91 : vector<128xf32> to vector<1x128xf32>
    %93 = vector.broadcast %92 : vector<1x128xf32> to vector<128x128xf32>
    %94 = arith.subf %90, %93 : vector<128x128xf32>
    %95 = math.exp %94 : vector<128x128xf32>
    %cst_30 = arith.constant dense<0.000000e+00> : vector<128xf32>
    %96 = vector.multi_reduction <add>, %95, %cst_30 [0] : vector<128x128xf32> to vector<128xf32>
    %97 = vector.shape_cast %96 : vector<128xf32> to vector<1x128xf32>
    %98 = tpu.reciprocal %97 {approx = true} : vector<1x128xf32> -> vector<1x128xf32>
    %99 = arith.mulf %97, %98 : vector<1x128xf32>
    %cst_31 = arith.constant 2.000000e+00 : f32
    %100 = vector.broadcast %cst_31 : f32 to vector<1x128xf32>
    %101 = arith.subf %100, %99 : vector<1x128xf32>
    %102 = arith.mulf %98, %101 : vector<1x128xf32>
    %103 = vector.broadcast %102 : vector<1x128xf32> to vector<128x128xf32>
    %104 = arith.mulf %95, %103 : vector<128x128xf32>
    %105 = arith.truncf %104 : vector<128x128xf32> to vector<128x128xbf16>
    %106 = vector.extract_strided_slice %2 {offsets = [3, 0, 0], sizes = [1, 32, 8], strides = [1, 1, 1]} : vector<4x32x8xbf16> to vector<1x32x8xbf16>
    %107 = vector.shape_cast %106 : vector<1x32x8xbf16> to vector<32x8xbf16>
    %108 = arith.truncf %89 : vector<8x128xf32> to vector<8x128xbf16>
    %cst_32 = arith.constant dense<0.000000e+00> : vector<32x128xf32>
    %109 = tpu.matmul %107, %108, %cst_32 {dimension_numbers = #tpu.dot_dimension_numbers<[1], [0], [0], [1], [0, 0, 1, 1], [], []>} : vector<32x8xbf16>, vector<8x128xbf16>, vector<32x128xf32> -> vector<32x128xf32>
    %110 = arith.truncf %109 : vector<32x128xf32> to vector<32x128xbf16>
    %cst_33 = arith.constant dense<0.000000e+00> : vector<32x128xf32>
    %111 = tpu.matmul %110, %105, %cst_33 {dimension_numbers = #tpu.dot_dimension_numbers<[1], [0], [0], [1], [0, 0, 1, 1], [], []>} : vector<32x128xbf16>, vector<128x128xbf16>, vector<32x128xf32> -> vector<32x128xf32>
    %112 = arith.addf %86, %111 : vector<32x128xf32>
    %113 = vector.broadcast %3 : vector<32x1xf32> to vector<32x128xf32>
    %114 = arith.addf %112, %113 : vector<32x128xf32>
    %115 = arith.index_cast %c0_i32 : i32 to index
    %c0_34 = arith.constant 0 : index
    %c0_35 = arith.constant 0 : index
    %116 = vector.load %arg6[%115, %c0_34, %c0_35] : memref<2x32x128xf32, #tpu.memory_space<vmem>>, vector<1x32x128xf32>
    %117 = vector.shape_cast %116 : vector<1x32x128xf32> to vector<32x128xf32>
    %118 = vector.shape_cast %114 : vector<32x128xf32> to vector<1x32x128xf32>
    tpu.vector_store %arg6[%115, %c0_34, %c0_35], %118 {strides = array<i32>} : memref<2x32x128xf32, #tpu.memory_space<vmem>>, vector<1x32x128xf32>,
    %c1_i32 = arith.constant 1 : i32
    %119 = arith.index_cast %c1_i32 : i32 to index
    %c0_36 = arith.constant 0 : index
    %c0_37 = arith.constant 0 : index
    %120 = vector.load %arg1[%119, %c0_36, %c0_37] : memref<2x32x128xf32, #tpu.memory_space<vmem>>, vector<1x32x128xf32>
    %121 = vector.shape_cast %120 : vector<1x32x128xf32> to vector<32x128xf32>
    %cst_38 = arith.constant dense<0.000000e+00> : vector<96x128xf32>
    %122 = tpu.matmul %0, %121, %cst_38 {dimension_numbers = #tpu.dot_dimension_numbers<[1], [0], [0], [1], [0, 0, 1, 1], [], []>} : vector<96x32xf32>, vector<32x128xf32>, vector<96x128xf32> -> vector<96x128xf32>
    %123 = vector.broadcast %1 : vector<96x1xf32> to vector<96x128xf32>
    %124 = arith.addf %122, %123 : vector<96x128xf32>
    %125 = vector.extract_strided_slice %124 {offsets = [0, 0], sizes = [8, 128], strides = [1, 1]} : vector<96x128xf32> to vector<8x128xf32>
    %126 = vector.extract_strided_slice %124 {offsets = [32, 0], sizes = [8, 128], strides = [1, 1]} : vector<96x128xf32> to vector<8x128xf32>
    %127 = vector.extract_strided_slice %124 {offsets = [64, 0], sizes = [8, 128], strides = [1, 1]} : vector<96x128xf32> to vector<8x128xf32>
    "tpu.trace_start"() <{level = 10 : i32, message = "dk,dq->kq"}> : () -> ()
    %cst_39 = arith.constant dense<0.000000e+00> : vector<128x128xf32>
    %128 = tpu.matmul %126, %125, %cst_39 {dimension_numbers = #tpu.dot_dimension_numbers<[0], [0], [1], [1], [0, 1, 1, 1], [], []>} : vector<8x128xf32>, vector<8x128xf32>, vector<128x128xf32> -> vector<128x128xf32>
    "tpu.trace_stop"() : () -> ()
    %cst_40 = arith.constant dense<0xFF800000> : vector<128xf32>
    %129 = vector.multi_reduction <maximumf>, %128, %cst_40 [0] : vector<128x128xf32> to vector<128xf32>
    %130 = vector.shape_cast %129 : vector<128xf32> to vector<1x128xf32>
    %131 = vector.broadcast %130 : vector<1x128xf32> to vector<128x128xf32>
    %132 = arith.subf %128, %131 : vector<128x128xf32>
    %133 = math.exp %132 : vector<128x128xf32>
    %cst_41 = arith.constant dense<0.000000e+00> : vector<128xf32>
    %134 = vector.multi_reduction <add>, %133, %cst_41 [0] : vector<128x128xf32> to vector<128xf32>
    %135 = vector.shape_cast %134 : vector<128xf32> to vector<1x128xf32>
    %136 = tpu.reciprocal %135 {approx = true} : vector<1x128xf32> -> vector<1x128xf32>
    %137 = arith.mulf %135, %136 : vector<1x128xf32>
    %cst_42 = arith.constant 2.000000e+00 : f32
    %138 = vector.broadcast %cst_42 : f32 to vector<1x128xf32>
    %139 = arith.subf %138, %137 : vector<1x128xf32>
    %140 = arith.mulf %136, %139 : vector<1x128xf32>
    %141 = vector.broadcast %140 : vector<1x128xf32> to vector<128x128xf32>
    %142 = arith.mulf %133, %141 : vector<128x128xf32>
    %143 = arith.truncf %142 : vector<128x128xf32> to vector<128x128xbf16>
    %144 = vector.extract_strided_slice %2 {offsets = [0, 0, 0], sizes = [1, 32, 8], strides = [1, 1, 1]} : vector<4x32x8xbf16> to vector<1x32x8xbf16>
    %145 = vector.shape_cast %144 : vector<1x32x8xbf16> to vector<32x8xbf16>
    %146 = arith.truncf %127 : vector<8x128xf32> to vector<8x128xbf16>
    %cst_43 = arith.constant dense<0.000000e+00> : vector<32x128xf32>
    %147 = tpu.matmul %145, %146, %cst_43 {dimension_numbers = #tpu.dot_dimension_numbers<[1], [0], [0], [1], [0, 0, 1, 1], [], []>} : vector<32x8xbf16>, vector<8x128xbf16>, vector<32x128xf32> -> vector<32x128xf32>
    %148 = arith.truncf %147 : vector<32x128xf32> to vector<32x128xbf16>
    %cst_44 = arith.constant dense<0.000000e+00> : vector<32x128xf32>
    %149 = tpu.matmul %148, %143, %cst_44 {dimension_numbers = #tpu.dot_dimension_numbers<[1], [0], [0], [1], [0, 0, 1, 1], [], []>} : vector<32x128xbf16>, vector<128x128xbf16>, vector<32x128xf32> -> vector<32x128xf32>
    %150 = vector.extract_strided_slice %124 {offsets = [8, 0], sizes = [8, 128], strides = [1, 1]} : vector<96x128xf32> to vector<8x128xf32>
    %151 = vector.extract_strided_slice %124 {offsets = [40, 0], sizes = [8, 128], strides = [1, 1]} : vector<96x128xf32> to vector<8x128xf32>
    %152 = vector.extract_strided_slice %124 {offsets = [72, 0], sizes = [8, 128], strides = [1, 1]} : vector<96x128xf32> to vector<8x128xf32>
    "tpu.trace_start"() <{level = 10 : i32, message = "dk,dq->kq"}> : () -> ()
    %cst_45 = arith.constant dense<0.000000e+00> : vector<128x128xf32>
    %153 = tpu.matmul %151, %150, %cst_45 {dimension_numbers = #tpu.dot_dimension_numbers<[0], [0], [1], [1], [0, 1, 1, 1], [], []>} : vector<8x128xf32>, vector<8x128xf32>, vector<128x128xf32> -> vector<128x128xf32>
    "tpu.trace_stop"() : () -> ()
    %cst_46 = arith.constant dense<0xFF800000> : vector<128xf32>
    %154 = vector.multi_reduction <maximumf>, %153, %cst_46 [0] : vector<128x128xf32> to vector<128xf32>
    %155 = vector.shape_cast %154 : vector<128xf32> to vector<1x128xf32>
    %156 = vector.broadcast %155 : vector<1x128xf32> to vector<128x128xf32>
    %157 = arith.subf %153, %156 : vector<128x128xf32>
    %158 = math.exp %157 : vector<128x128xf32>
    %cst_47 = arith.constant dense<0.000000e+00> : vector<128xf32>
    %159 = vector.multi_reduction <add>, %158, %cst_47 [0] : vector<128x128xf32> to vector<128xf32>
    %160 = vector.shape_cast %159 : vector<128xf32> to vector<1x128xf32>
    %161 = tpu.reciprocal %160 {approx = true} : vector<1x128xf32> -> vector<1x128xf32>
    %162 = arith.mulf %160, %161 : vector<1x128xf32>
    %cst_48 = arith.constant 2.000000e+00 : f32
    %163 = vector.broadcast %cst_48 : f32 to vector<1x128xf32>
    %164 = arith.subf %163, %162 : vector<1x128xf32>
    %165 = arith.mulf %161, %164 : vector<1x128xf32>
    %166 = vector.broadcast %165 : vector<1x128xf32> to vector<128x128xf32>
    %167 = arith.mulf %158, %166 : vector<128x128xf32>
    %168 = arith.truncf %167 : vector<128x128xf32> to vector<128x128xbf16>
    %169 = vector.extract_strided_slice %2 {offsets = [1, 0, 0], sizes = [1, 32, 8], strides = [1, 1, 1]} : vector<4x32x8xbf16> to vector<1x32x8xbf16>
    %170 = vector.shape_cast %169 : vector<1x32x8xbf16> to vector<32x8xbf16>
    %171 = arith.truncf %152 : vector<8x128xf32> to vector<8x128xbf16>
    %cst_49 = arith.constant dense<0.000000e+00> : vector<32x128xf32>
    %172 = tpu.matmul %170, %171, %cst_49 {dimension_numbers = #tpu.dot_dimension_numbers<[1], [0], [0], [1], [0, 0, 1, 1], [], []>} : vector<32x8xbf16>, vector<8x128xbf16>, vector<32x128xf32> -> vector<32x128xf32>
    %173 = arith.truncf %172 : vector<32x128xf32> to vector<32x128xbf16>
    %cst_50 = arith.constant dense<0.000000e+00> : vector<32x128xf32>
    %174 = tpu.matmul %173, %168, %cst_50 {dimension_numbers = #tpu.dot_dimension_numbers<[1], [0], [0], [1], [0, 0, 1, 1], [], []>} : vector<32x128xbf16>, vector<128x128xbf16>, vector<32x128xf32> -> vector<32x128xf32>
    %175 = arith.addf %149, %174 : vector<32x128xf32>
    %176 = vector.extract_strided_slice %124 {offsets = [16, 0], sizes = [8, 128], strides = [1, 1]} : vector<96x128xf32> to vector<8x128xf32>
    %177 = vector.extract_strided_slice %124 {offsets = [48, 0], sizes = [8, 128], strides = [1, 1]} : vector<96x128xf32> to vector<8x128xf32>
    %178 = vector.extract_strided_slice %124 {offsets = [80, 0], sizes = [8, 128], strides = [1, 1]} : vector<96x128xf32> to vector<8x128xf32>
    "tpu.trace_start"() <{level = 10 : i32, message = "dk,dq->kq"}> : () -> ()
    %cst_51 = arith.constant dense<0.000000e+00> : vector<128x128xf32>
    %179 = tpu.matmul %177, %176, %cst_51 {dimension_numbers = #tpu.dot_dimension_numbers<[0], [0], [1], [1], [0, 1, 1, 1], [], []>} : vector<8x128xf32>, vector<8x128xf32>, vector<128x128xf32> -> vector<128x128xf32>
    "tpu.trace_stop"() : () -> ()
    %cst_52 = arith.constant dense<0xFF800000> : vector<128xf32>
    %180 = vector.multi_reduction <maximumf>, %179, %cst_52 [0] : vector<128x128xf32> to vector<128xf32>
    %181 = vector.shape_cast %180 : vector<128xf32> to vector<1x128xf32>
    %182 = vector.broadcast %181 : vector<1x128xf32> to vector<128x128xf32>
    %183 = arith.subf %179, %182 : vector<128x128xf32>
    %184 = math.exp %183 : vector<128x128xf32>
    %cst_53 = arith.constant dense<0.000000e+00> : vector<128xf32>
    %185 = vector.multi_reduction <add>, %184, %cst_53 [0] : vector<128x128xf32> to vector<128xf32>
    %186 = vector.shape_cast %185 : vector<128xf32> to vector<1x128xf32>
    %187 = tpu.reciprocal %186 {approx = true} : vector<1x128xf32> -> vector<1x128xf32>
    %188 = arith.mulf %186, %187 : vector<1x128xf32>
    %cst_54 = arith.constant 2.000000e+00 : f32
    %189 = vector.broadcast %cst_54 : f32 to vector<1x128xf32>
    %190 = arith.subf %189, %188 : vector<1x128xf32>
    %191 = arith.mulf %187, %190 : vector<1x128xf32>
    %192 = vector.broadcast %191 : vector<1x128xf32> to vector<128x128xf32>
    %193 = arith.mulf %184, %192 : vector<128x128xf32>
    %194 = arith.truncf %193 : vector<128x128xf32> to vector<128x128xbf16>
    %195 = vector.extract_strided_slice %2 {offsets = [2, 0, 0], sizes = [1, 32, 8], strides = [1, 1, 1]} : vector<4x32x8xbf16> to vector<1x32x8xbf16>
    %196 = vector.shape_cast %195 : vector<1x32x8xbf16> to vector<32x8xbf16>
    %197 = arith.truncf %178 : vector<8x128xf32> to vector<8x128xbf16>
    %cst_55 = arith.constant dense<0.000000e+00> : vector<32x128xf32>
    %198 = tpu.matmul %196, %197, %cst_55 {dimension_numbers = #tpu.dot_dimension_numbers<[1], [0], [0], [1], [0, 0, 1, 1], [], []>} : vector<32x8xbf16>, vector<8x128xbf16>, vector<32x128xf32> -> vector<32x128xf32>
    %199 = arith.truncf %198 : vector<32x128xf32> to vector<32x128xbf16>
    %cst_56 = arith.constant dense<0.000000e+00> : vector<32x128xf32>
    %200 = tpu.matmul %199, %194, %cst_56 {dimension_numbers = #tpu.dot_dimension_numbers<[1], [0], [0], [1], [0, 0, 1, 1], [], []>} : vector<32x128xbf16>, vector<128x128xbf16>, vector<32x128xf32> -> vector<32x128xf32>
    %201 = arith.addf %175, %200 : vector<32x128xf32>
    %202 = vector.extract_strided_slice %124 {offsets = [24, 0], sizes = [8, 128], strides = [1, 1]} : vector<96x128xf32> to vector<8x128xf32>
    %203 = vector.extract_strided_slice %124 {offsets = [56, 0], sizes = [8, 128], strides = [1, 1]} : vector<96x128xf32> to vector<8x128xf32>
    %204 = vector.extract_strided_slice %124 {offsets = [88, 0], sizes = [8, 128], strides = [1, 1]} : vector<96x128xf32> to vector<8x128xf32>
    "tpu.trace_start"() <{level = 10 : i32, message = "dk,dq->kq"}> : () -> ()
    %cst_57 = arith.constant dense<0.000000e+00> : vector<128x128xf32>
    %205 = tpu.matmul %203, %202, %cst_57 {dimension_numbers = #tpu.dot_dimension_numbers<[0], [0], [1], [1], [0, 1, 1, 1], [], []>} : vector<8x128xf32>, vector<8x128xf32>, vector<128x128xf32> -> vector<128x128xf32>
    "tpu.trace_stop"() : () -> ()
    %cst_58 = arith.constant dense<0xFF800000> : vector<128xf32>
    %206 = vector.multi_reduction <maximumf>, %205, %cst_58 [0] : vector<128x128xf32> to vector<128xf32>
    %207 = vector.shape_cast %206 : vector<128xf32> to vector<1x128xf32>
    %208 = vector.broadcast %207 : vector<1x128xf32> to vector<128x128xf32>
    %209 = arith.subf %205, %208 : vector<128x128xf32>
    %210 = math.exp %209 : vector<128x128xf32>
    %cst_59 = arith.constant dense<0.000000e+00> : vector<128xf32>
    %211 = vector.multi_reduction <add>, %210, %cst_59 [0] : vector<128x128xf32> to vector<128xf32>
    %212 = vector.shape_cast %211 : vector<128xf32> to vector<1x128xf32>
    %213 = tpu.reciprocal %212 {approx = true} : vector<1x128xf32> -> vector<1x128xf32>
    %214 = arith.mulf %212, %213 : vector<1x128xf32>
    %cst_60 = arith.constant 2.000000e+00 : f32
    %215 = vector.broadcast %cst_60 : f32 to vector<1x128xf32>
    %216 = arith.subf %215, %214 : vector<1x128xf32>
    %217 = arith.mulf %213, %216 : vector<1x128xf32>
    %218 = vector.broadcast %217 : vector<1x128xf32> to vector<128x128xf32>
    %219 = arith.mulf %210, %218 : vector<128x128xf32>
    %220 = arith.truncf %219 : vector<128x128xf32> to vector<128x128xbf16>
    %221 = vector.extract_strided_slice %2 {offsets = [3, 0, 0], sizes = [1, 32, 8], strides = [1, 1, 1]} : vector<4x32x8xbf16> to vector<1x32x8xbf16>
    %222 = vector.shape_cast %221 : vector<1x32x8xbf16> to vector<32x8xbf16>
    %223 = arith.truncf %204 : vector<8x128xf32> to vector<8x128xbf16>
    %cst_61 = arith.constant dense<0.000000e+00> : vector<32x128xf32>
    %224 = tpu.matmul %222, %223, %cst_61 {dimension_numbers = #tpu.dot_dimension_numbers<[1], [0], [0], [1], [0, 0, 1, 1], [], []>} : vector<32x8xbf16>, vector<8x128xbf16>, vector<32x128xf32> -> vector<32x128xf32>
    %225 = arith.truncf %224 : vector<32x128xf32> to vector<32x128xbf16>
    %cst_62 = arith.constant dense<0.000000e+00> : vector<32x128xf32>
    %226 = tpu.matmul %225, %220, %cst_62 {dimension_numbers = #tpu.dot_dimension_numbers<[1], [0], [0], [1], [0, 0, 1, 1], [], []>} : vector<32x128xbf16>, vector<128x128xbf16>, vector<32x128xf32> -> vector<32x128xf32>
    %227 = arith.addf %201, %226 : vector<32x128xf32>
    %228 = vector.broadcast %3 : vector<32x1xf32> to vector<32x128xf32>
    %229 = arith.addf %227, %228 : vector<32x128xf32>
    %230 = arith.index_cast %c1_i32 : i32 to index
    %c0_63 = arith.constant 0 : index
    %c0_64 = arith.constant 0 : index
    %231 = vector.load %arg6[%230, %c0_63, %c0_64] : memref<2x32x128xf32, #tpu.memory_space<vmem>>, vector<1x32x128xf32>
    %232 = vector.shape_cast %231 : vector<1x32x128xf32> to vector<32x128xf32>
    %233 = vector.shape_cast %229 : vector<32x128xf32> to vector<1x32x128xf32>
    tpu.vector_store %arg6[%230, %c0_63, %c0_64], %233 {strides = array<i32>} : memref<2x32x128xf32, #tpu.memory_space<vmem>>, vector<1x32x128xf32>,
    %c2_i32 = arith.constant 2 : i32
    return
  }
  func.func @transform_0(%arg0: i32) -> (i32, i32, i32) {
    %c0_i32 = arith.constant 0 : i32
    %c0_i32_0 = arith.constant 0 : i32
    %c0_i32_1 = arith.constant 0 : i32
    return %arg0, %c0_i32, %c0_i32_0 : i32, i32, i32
  }
  func.func @transform_1(%arg0: i32) -> (i32, i32) {
    %c0_i32 = arith.constant 0 : i32
    %c0_i32_0 = arith.constant 0 : i32
    %c0_i32_1 = arith.constant 0 : i32
    return %c0_i32, %c0_i32_0 : i32, i32
  }
  func.func @transform_2(%arg0: i32) -> (i32, i32) {
    %c0_i32 = arith.constant 0 : i32
    %c0_i32_0 = arith.constant 0 : i32
    %c0_i32_1 = arith.constant 0 : i32
    return %c0_i32, %c0_i32_0 : i32, i32
  }
  func.func @transform_3(%arg0: i32) -> (i32, i32, i32) {
    %c0_i32 = arith.constant 0 : i32
    %c0_i32_0 = arith.constant 0 : i32
    %c0_i32_1 = arith.constant 0 : i32
    %c0_i32_2 = arith.constant 0 : i32
    return %c0_i32, %c0_i32_0, %c0_i32_1 : i32, i32, i32
  }
  func.func @transform_4(%arg0: i32) -> (i32, i32) {
    %c0_i32 = arith.constant 0 : i32
    %c0_i32_0 = arith.constant 0 : i32
    %c0_i32_1 = arith.constant 0 : i32
    return %c0_i32, %c0_i32_0 : i32, i32
  }
  func.func @transform_5(%arg0: i32) -> (i32, i32, i32) {
    %c0_i32 = arith.constant 0 : i32
    %c0_i32_0 = arith.constant 0 : i32
    %c0_i32_1 = arith.constant 0 : i32
    return %arg0, %c0_i32, %c0_i32_0 : i32, i32, i32
  }
}

</mosaic_0001>

<llo_original>
// kernel: tpu_custom_call.1
$region0: #{tpu_custom_call.1}
  #allocation0 [shape = 'u32[]', space=smem, size = 0x4, offset = 0x4, fixed_abs, tag = 'smem constant byte address 0x4 - core index']
  #allocation1 [shape = 'u32[144,128]{1,0:T(1,128)}', space=vmem, size = 0x12000, scoped, tag = 'internal scratch']
  %s0 = inlined_call_operand.vmem [shape: f32[2,32,128], index: 0, kind: input, shape index: {}]
  %s1 = inlined_call_operand.vmem [shape: f32[96,32], index: 1, kind: input, shape index: {}]
  %s2 = inlined_call_operand.vmem [shape: f32[96,1], index: 2, kind: input, shape index: {}]
  %s3 = inlined_call_operand.vmem [shape: bf16[4,32,8], index: 3, kind: input, shape index: {}]
  %s4 = inlined_call_operand.vmem [shape: f32[32,1], index: 4, kind: input, shape index: {}]
  %s5 = inlined_call_operand.hbm [shape: f32[2,32,128], index: 5, kind: output, shape index: {}]
  %s6 = sld [smem:[#allocation0]]
  $region30: #{tpu_custom_call.1} parent=0
    _
  %s8 = ssub.s32 1, %s6
  %s9 = scalar_select 0, %s8, %s6
  $region1: #{tpu_custom_call.1} parent=0
    #allocation2 [shape = 'u8[32768]{0}', space=vmem, size = 0x8000, scoped, tag = 'output window, operand 0, single buffered']
    #allocation3 [shape = 's32[1]{0}', space=sflag, size = 0x4, scoped, tag = 'scoped memory for tpu_custom_call.1']
    %10 = vsyncpa [#allocation3], 0
    // Predicated region
    $region2: #{tpu_custom_call.1} parent=1 // pred_check
      _
    $region3: #{tpu_custom_call.1} parent=1 // pred_check_branch
      %12 = sbr.rel (0) target = $region5
    $region4: #{tpu_custom_call.1} parent=1 // pred_region
      _
    $region5: #{tpu_custom_call.1} parent=1 // pred_fallthru
      _
    // Predicated region
    $region6: #{tpu_custom_call.1} parent=1 // pred_check
      _
    $region7: #{tpu_custom_call.1} parent=1 // pred_check_branch
      %14 = sbr.rel (0) target = $region9
    $region8: #{tpu_custom_call.1} parent=1 // pred_region
      _
    $region9: #{tpu_custom_call.1} parent=1 // pred_fallthru
      _
    // Predicated region
    $region10: #{tpu_custom_call.1} parent=1 // pred_check
      _
    $region11: #{tpu_custom_call.1} parent=1 // pred_check_branch
      %16 = sbr.rel (0) target = $region13
    $region12: #{tpu_custom_call.1} parent=1 // pred_region
      _
    $region13: #{tpu_custom_call.1} parent=1 // pred_fallthru
      _
    // Predicated region
    $region14: #{tpu_custom_call.1} parent=1 // pred_check
      _
    $region15: #{tpu_custom_call.1} parent=1 // pred_check_branch
      %18 = sbr.rel (0) target = $region17
    $region16: #{tpu_custom_call.1} parent=1 // pred_region
      _
    $region17: #{tpu_custom_call.1} parent=1 // pred_fallthru
      _
    // Predicated region
    $region18: #{tpu_custom_call.1} parent=1 // pred_check
      _
    $region19: #{tpu_custom_call.1} parent=1 // pred_check_branch
      %20 = sbr.rel (0) target = $region21
    $region20: #{tpu_custom_call.1} parent=1 // pred_region
      _
    $region21: #{tpu_custom_call.1} parent=1 // pred_fallthru
      _
    %v22 = vld [vmem:[%s1] sm:$0xff]
    %v23 = vld [vmem:[%s1 + $0x8] sm:$0xff]
    %v24 = vld [vmem:[%s1 + $0x10] sm:$0xff]
    %v25 = vld [vmem:[%s1 + $0x18] sm:$0xff]
    %v26 = vld [vmem:[%s1 + $0x20] sm:$0xff]
    %v27 = vld [vmem:[%s1 + $0x28] sm:$0xff]
    %v28 = vld [vmem:[%s1 + $0x30] sm:$0xff]
    %v29 = vld [vmem:[%s1 + $0x38] sm:$0xff]
    %v30 = vld [vmem:[%s1 + $0x40] sm:$0xff]
    %v31 = vld [vmem:[%s1 + $0x48] sm:$0xff]
    %v32 = vld [vmem:[%s1 + $0x50] sm:$0xff]
    %v33 = vld [vmem:[%s1 + $0x58] sm:$0xff]
    %v34 = vld [vmem:[%s2] sm:$0xff]
    %v35 = vld [vmem:[%s2 + $0x8] sm:$0xff]
    %v36 = vld [vmem:[%s2 + $0x10] sm:$0xff]
    %v37 = vld [vmem:[%s2 + $0x18] sm:$0xff]
    %v38 = vld [vmem:[%s2 + $0x20] sm:$0xff]
    %v39 = vld [vmem:[%s2 + $0x28] sm:$0xff]
    %v40 = vld [vmem:[%s2 + $0x30] sm:$0xff]
    %v41 = vld [vmem:[%s2 + $0x38] sm:$0xff]
    %v42 = vld [vmem:[%s2 + $0x40] sm:$0xff]
    %v43 = vld [vmem:[%s2 + $0x48] sm:$0xff]
    %v44 = vld [vmem:[%s2 + $0x50] sm:$0xff]
    %v45 = vld [vmem:[%s2 + $0x58] sm:$0xff]
    %v46 = vld [vmem:[%s3] sm:$0xf]
    %v47 = vld [vmem:[%s3 + $0x4] sm:$0xf]
    %v48 = vld [vmem:[%s3 + $0x8] sm:$0xf]
    %v49 = vld [vmem:[%s3 + $0xc] sm:$0xf]
    %v50 = vld [vmem:[%s3 + $0x10] sm:$0xf]
    %v51 = vld [vmem:[%s3 + $0x14] sm:$0xf]
    %v52 = vld [vmem:[%s3 + $0x18] sm:$0xf]
    %v53 = vld [vmem:[%s3 + $0x1c] sm:$0xf]
    %v54 = vld [vmem:[%s3 + $0x20] sm:$0xf]
    %v55 = vld [vmem:[%s3 + $0x24] sm:$0xf]
    %v56 = vld [vmem:[%s3 + $0x28] sm:$0xf]
    %v57 = vld [vmem:[%s3 + $0x2c] sm:$0xf]
    %v58 = vld [vmem:[%s3 + $0x30] sm:$0xf]
    %v59 = vld [vmem:[%s3 + $0x34] sm:$0xf]
    %v60 = vld [vmem:[%s3 + $0x38] sm:$0xf]
    %v61 = vld [vmem:[%s3 + $0x3c] sm:$0xf]
    %v62 = vld [vmem:[%s4] sm:$0xff]
    %v63 = vld [vmem:[%s4 + $0x8] sm:$0xff]
    %v64 = vld [vmem:[%s4 + $0x10] sm:$0xff]
    %v65 = vld [vmem:[%s4 + $0x18] sm:$0xff]
    %v66 = vld [vmem:[%s0] sm:$0xff]
    %v67 = vld [vmem:[%s0 + $0x8] sm:$0xff]
    %v68 = vld [vmem:[%s0 + $0x10] sm:$0xff]
    %v69 = vld [vmem:[%s0 + $0x18] sm:$0xff]
    %71 = vset.pattern.permute.xlu0 0
    %72 = vperm.xlu0 %71, %v34
    %v73 = vpop.permute.xlu0 %72
    %76 = vset.pattern.permute.xlu0 0
    %77 = vperm.xlu0 %76, %v35
    %v78 = vpop.permute.xlu0 %77
    %81 = vset.pattern.permute.xlu0 0
    %82 = vperm.xlu0 %81, %v36
    %v83 = vpop.permute.xlu0 %82
    %86 = vset.pattern.permute.xlu0 0
    %87 = vperm.xlu0 %86, %v37
    %v88 = vpop.permute.xlu0 %87
    %91 = vset.pattern.permute.xlu0 0
    %92 = vperm.xlu0 %91, %v38
    %v93 = vpop.permute.xlu0 %92
    %96 = vset.pattern.permute.xlu0 0
    %97 = vperm.xlu0 %96, %v39
    %v98 = vpop.permute.xlu0 %97
    %101 = vset.pattern.permute.xlu0 0
    %102 = vperm.xlu0 %101, %v40
    %v103 = vpop.permute.xlu0 %102
    %106 = vset.pattern.permute.xlu0 0
    %107 = vperm.xlu0 %106, %v41
    %v108 = vpop.permute.xlu0 %107
    %111 = vset.pattern.permute.xlu0 0
    %112 = vperm.xlu0 %111, %v42
    %v113 = vpop.permute.xlu0 %112
    %116 = vset.pattern.permute.xlu0 0
    %117 = vperm.xlu0 %116, %v43
    %v118 = vpop.permute.xlu0 %117
    %121 = vset.pattern.permute.xlu0 0
    %122 = vperm.xlu0 %121, %v44
    %v123 = vpop.permute.xlu0 %122
    %126 = vset.pattern.permute.xlu0 0
    %127 = vperm.xlu0 %126, %v45
    %v128 = vpop.permute.xlu0 %127
    %vm130 = vcmask 261120
    %v132 = vsel %vm130, %v22, 0
    %v135 = vsel %vm130, %v23, 0
    %v138 = vsel %vm130, %v24, 0
    %v141 = vsel %vm130, %v25, 0
    %v144 = vsel %vm130, %v26, 0
    %v147 = vsel %vm130, %v27, 0
    %v150 = vsel %vm130, %v28, 0
    %v153 = vsel %vm130, %v29, 0
    %v156 = vsel %vm130, %v30, 0
    %v159 = vsel %vm130, %v31, 0
    %v162 = vsel %vm130, %v32, 0
    %v165 = vsel %vm130, %v33, 0
    %167 = vmatprep.subr.mxu0 0.0
    %168 = vmatpush1.msra.mxu0 %v66
    %169 = vmatprep.subr.mxu0 0.0
    %170 = vmatpush1.msra.mxu0 %v67
    %171 = vmatprep.subr.mxu0 0.0
    %172 = vmatpush1.msra.mxu0 %v68
    %173 = vmatprep.subr.mxu0 0.0
    %174 = vmatpush1.msra.mxu0 %v69
    %175 = vmatprep.subr.mxu0 0.0
    %176 = vmatpush1.msra.mxu0 0.0
    %177 = vmatprep.subr.mxu0 0.0
    %178 = vmatpush1.msra.mxu0 0.0
    %179 = vmatprep.subr.mxu0 0.0
    %180 = vmatpush1.msra.mxu0 0.0
    %181 = vmatprep.subr.mxu0 0.0
    %182 = vmatpush1.msra.mxu0 0.0
    %183 = vmatprep.subr.mxu0 0.0
    %184 = vmatpush1.msra.mxu0 0.0
    %185 = vmatprep.subr.mxu0 0.0
    %186 = vmatpush1.msra.mxu0 0.0
    %187 = vmatprep.subr.mxu0 0.0
    %188 = vmatpush1.msra.mxu0 0.0
    %189 = vmatprep.subr.mxu0 0.0
    %190 = vmatpush1.msra.mxu0 0.0
    %191 = vmatprep.subr.mxu0 0.0
    %192 = vmatpush1.msra.mxu0 0.0
    %193 = vmatprep.subr.mxu0 0.0
    %194 = vmatpush1.msra.mxu0 0.0
    %195 = vmatprep.subr.mxu0 0.0
    %196 = vmatpush1.msra.mxu0 0.0
    %197 = vmatprep.subr.mxu0 0.0
    %198 = vmatpush1.msra.mxu0 0.0
    %199 = vmatprep.subr.mxu0 0.0
    %200 = vmatpush1.msra.mxu0 0.0
    %201 = vmatprep.subr.mxu0 0.0
    %202 = vmatpush1.msra.mxu0 0.0
    %203 = vmatprep.subr.mxu0 0.0
    %204 = vmatpush1.msra.mxu0 0.0
    %205 = vmatprep.subr.mxu0 0.0
    %206 = vmatpush1.msra.mxu0 0.0
    %207 = vmatprep.subr.mxu0 0.0
    %208 = vmatpush1.msra.mxu0 0.0
    %209 = vmatprep.subr.mxu0 0.0
    %210 = vmatpush1.msra.mxu0 0.0
    %211 = vmatprep.subr.mxu0 0.0
    %212 = vmatpush1.msra.mxu0 0.0
    %213 = vmatprep.subr.mxu0 0.0
    %214 = vmatpush1.msra.mxu0 0.0
    %215 = vmatprep.subr.mxu0 0.0
    %216 = vmatpush1.msra.mxu0 0.0
    %217 = vmatprep.subr.mxu0 0.0
    %218 = vmatpush1.msra.mxu0 0.0
    %219 = vmatprep.subr.mxu0 0.0
    %220 = vmatpush1.msra.mxu0 0.0
    %221 = vmatprep.subr.mxu0 0.0
    %222 = vmatpush1.msra.mxu0 0.0
    %223 = vmatprep.subr.mxu0 0.0
    %224 = vmatpush1.msra.mxu0 0.0
    %225 = vmatprep.subr.mxu0 0.0
    %226 = vmatpush1.msra.mxu0 0.0
    %227 = vmatprep.subr.mxu0 0.0
    %228 = vmatpush1.msra.mxu0 0.0
    %229 = vmatprep.subr.mxu0 0.0
    %230 = vmatpush1.msra.mxu0 0.0
    %231 = vmatprep.mubr.f32.mxu0 0.0
    %232 = vmatmul.mubr.f32.gmra.mrb[0].mxu0 %v132
    %v233 = vpop.f32.mrb[0].mxu0
    %v234 = vadd.f32 %v73, %v233
    %v235 = vpop.f32.mrb[0].mxu0
    %236 = vmatprep.mubr.f32.mxu0 0.0
    %237 = vmatmul.mubr.f32.gmra.mrb[0].mxu0 %v135
    %v238 = vpop.f32.mrb[0].mxu0
    %v239 = vadd.f32 %v78, %v238
    %v240 = vpop.f32.mrb[0].mxu0
    %241 = vmatprep.mubr.f32.mxu0 0.0
    %242 = vmatmul.mubr.f32.gmra.mrb[0].mxu0 %v138
    %v243 = vpop.f32.mrb[0].mxu0
    %v244 = vadd.f32 %v83, %v243
    %v245 = vpop.f32.mrb[0].mxu0
    %246 = vmatprep.mubr.f32.mxu0 0.0
    %247 = vmatmul.mubr.f32.gmra.mrb[0].mxu0 %v141
    %v248 = vpop.f32.mrb[0].mxu0
    %v249 = vadd.f32 %v88, %v248
    %v250 = vpop.f32.mrb[0].mxu0
    %251 = vmatprep.mubr.f32.mxu0 0.0
    %252 = vmatmul.mubr.f32.gmra.mrb[0].mxu0 %v144
    %v253 = vpop.f32.mrb[0].mxu0
    %v254 = vadd.f32 %v93, %v253
    %v255 = vpop.f32.mrb[0].mxu0
    %256 = vmatprep.mubr.f32.mxu0 0.0
    %257 = vmatmul.mubr.f32.gmra.mrb[0].mxu0 %v147
    %v258 = vpop.f32.mrb[0].mxu0
    %v259 = vadd.f32 %v98, %v258
    %v260 = vpop.f32.mrb[0].mxu0
    %261 = vmatprep.mubr.f32.mxu0 0.0
    %262 = vmatmul.mubr.f32.gmra.mrb[0].mxu0 %v150
    %v263 = vpop.f32.mrb[0].mxu0
    %v264 = vadd.f32 %v103, %v263
    %v265 = vpop.f32.mrb[0].mxu0
    %266 = vmatprep.mubr.f32.mxu0 0.0
    %267 = vmatmul.mubr.f32.gmra.mrb[0].mxu0 %v153
    %v268 = vpop.f32.mrb[0].mxu0
    %v269 = vadd.f32 %v108, %v268
    %v270 = vpop.f32.mrb[0].mxu0
    %271 = vmatprep.mubr.f32.mxu0 0.0
    %272 = vmatmul.mubr.f32.gmra.mrb[0].mxu0 %v156
    %v273 = vpop.f32.mrb[0].mxu0
    %v274 = vadd.f32 %v113, %v273
    %v275 = vpop.f32.mrb[0].mxu0
    %276 = vmatprep.mubr.f32.mxu0 0.0
    %277 = vmatmul.mubr.f32.gmra.mrb[0].mxu0 %v159
    %v278 = vpop.f32.mrb[0].mxu0
    %v279 = vadd.f32 %v118, %v278
    %v280 = vpop.f32.mrb[0].mxu0
    %281 = vmatprep.mubr.f32.mxu0 0.0
    %282 = vmatmul.mubr.f32.gmra.mrb[0].mxu0 %v162
    %v283 = vpop.f32.mrb[0].mxu0
    %v284 = vadd.f32 %v123, %v283
    %v285 = vpop.f32.mrb[0].mxu0
    %286 = vmatprep.mubr.f32.mxu0 0.0
    %287 = vmatmul.mubr.f32.gmra.mrb[0].mxu0 %v165
    %v288 = vpop.f32.mrb[0].mxu0
    %v289 = vadd.f32 %v128, %v288
    %v290 = vpop.f32.mrb[0].mxu0
    %291 = vdwg.mxu0
    %292 = vxpose.xlu0.b32.start [1/16] %v254, 128
    %293 = vxpose.xlu0.b32.cont [2/16] 0.0, 128
    %294 = vxpose.xlu0.b32.cont [3/16] 0.0, 128
    %295 = vxpose.xlu0.b32.cont [4/16] 0.0, 128
    %296 = vxpose.xlu0.b32.cont [5/16] 0.0, 128
    %297 = vxpose.xlu0.b32.cont [6/16] 0.0, 128
    %298 = vxpose.xlu0.b32.cont [7/16] 0.0, 128
    %299 = vxpose.xlu0.b32.cont [8/16] 0.0, 128
    %300 = vxpose.xlu0.b32.cont [9/16] 0.0, 128
    %301 = vxpose.xlu0.b32.cont [10/16] 0.0, 128
    %302 = vxpose.xlu0.b32.cont [11/16] 0.0, 128
    %303 = vxpose.xlu0.b32.cont [12/16] 0.0, 128
    %304 = vxpose.xlu0.b32.cont [13/16] 0.0, 128
    %305 = vxpose.xlu0.b32.cont [14/16] 0.0, 128
    %306 = vxpose.xlu0.b32.cont [15/16] 0.0, 128
    %307 = vxpose.xlu0.b32.end [16/16] 0.0, 128
    %v308 = vpop.trf.xlu0
    %v309 = vpop.trf.xlu0
    %v310 = vpop.trf.xlu0
    %v311 = vpop.trf.xlu0
    %v312 = vpop.trf.xlu0
    %v313 = vpop.trf.xlu0
    %v314 = vpop.trf.xlu0
    %v315 = vpop.trf.xlu0
    %v316 = vpop.trf.xlu0
    %v317 = vpop.trf.xlu0
    %v318 = vpop.trf.xlu0
    %v319 = vpop.trf.xlu0
    %v320 = vpop.trf.xlu0
    %v321 = vpop.trf.xlu0
    %v322 = vpop.trf.xlu0
    %v323 = vpop.trf.xlu0
    %vm324 = vcmask 64512
    %v326 = vsel %vm324, %v308, 0
    %v329 = vsel %vm324, %v309, 0
    %v332 = vsel %vm324, %v310, 0
    %v335 = vsel %vm324, %v311, 0
    %v338 = vsel %vm324, %v312, 0
    %v341 = vsel %vm324, %v313, 0
    %v344 = vsel %vm324, %v314, 0
    %v347 = vsel %vm324, %v315, 0
    %v350 = vsel %vm324, %v316, 0
    %v353 = vsel %vm324, %v317, 0
    %v356 = vsel %vm324, %v318, 0
    %v359 = vsel %vm324, %v319, 0
    %v362 = vsel %vm324, %v320, 0
    %v365 = vsel %vm324, %v321, 0
    %v368 = vsel %vm324, %v322, 0
    %v371 = vsel %vm324, %v323, 0
    %373 = vmatprep.subr.mxu0 0.0
    %374 = vmatpush1.msra.mxu0 %v234
    %375 = vmatprep.subr.mxu0 0.0
    %376 = vmatpush1.msra.mxu0 0.0
    %377 = vmatprep.subr.mxu0 0.0
    %378 = vmatpush1.msra.mxu0 0.0
    %379 = vmatprep.subr.mxu0 0.0
    %380 = vmatpush1.msra.mxu0 0.0
    %381 = vmatprep.subr.mxu0 0.0
    %382 = vmatpush1.msra.mxu0 0.0
    %383 = vmatprep.subr.mxu0 0.0
    %384 = vmatpush1.msra.mxu0 0.0
    %385 = vmatprep.subr.mxu0 0.0
    %386 = vmatpush1.msra.mxu0 0.0
    %387 = vmatprep.subr.mxu0 0.0
    %388 = vmatpush1.msra.mxu0 0.0
    %389 = vmatprep.subr.mxu0 0.0
    %390 = vmatpush1.msra.mxu0 0.0
    %391 = vmatprep.subr.mxu0 0.0
    %392 = vmatpush1.msra.mxu0 0.0
    %393 = vmatprep.subr.mxu0 0.0
    %394 = vmatpush1.msra.mxu0 0.0
    %395 = vmatprep.subr.mxu0 0.0
    %396 = vmatpush1.msra.mxu0 0.0
    %397 = vmatprep.subr.mxu0 0.0
    %398 = vmatpush1.msra.mxu0 0.0
    %399 = vmatprep.subr.mxu0 0.0
    %400 = vmatpush1.msra.mxu0 0.0
    %401 = vmatprep.subr.mxu0 0.0
    %402 = vmatpush1.msra.mxu0 0.0
    %403 = vmatprep.subr.mxu0 0.0
    %404 = vmatpush1.msra.mxu0 0.0
    %405 = vmatprep.subr.mxu0 0.0
    %406 = vmatpush1.msra.mxu0 0.0
    %407 = vmatprep.subr.mxu0 0.0
    %408 = vmatpush1.msra.mxu0 0.0
    %409 = vmatprep.subr.mxu0 0.0
    %410 = vmatpush1.msra.mxu0 0.0
    %411 = vmatprep.subr.mxu0 0.0
    %412 = vmatpush1.msra.mxu0 0.0
    %413 = vmatprep.subr.mxu0 0.0
    %414 = vmatpush1.msra.mxu0 0.0
    %415 = vmatprep.subr.mxu0 0.0
    %416 = vmatpush1.msra.mxu0 0.0
    %417 = vmatprep.subr.mxu0 0.0
    %418 = vmatpush1.msra.mxu0 0.0
    %419 = vmatprep.subr.mxu0 0.0
    %420 = vmatpush1.msra.mxu0 0.0
    %421 = vmatprep.subr.mxu0 0.0
    %422 = vmatpush1.msra.mxu0 0.0
    %423 = vmatprep.subr.mxu0 0.0
    %424 = vmatpush1.msra.mxu0 0.0
    %425 = vmatprep.subr.mxu0 0.0
    %426 = vmatpush1.msra.mxu0 0.0
    %427 = vmatprep.subr.mxu0 0.0
    %428 = vmatpush1.msra.mxu0 0.0
    %429 = vmatprep.subr.mxu0 0.0
    %430 = vmatpush1.msra.mxu0 0.0
    %431 = vmatprep.subr.mxu0 0.0
    %432 = vmatpush1.msra.mxu0 0.0
    %433 = vmatprep.subr.mxu0 0.0
    %434 = vmatpush1.msra.mxu0 0.0
    %435 = vmatprep.subr.mxu0 0.0
    %436 = vmatpush1.msra.mxu0 0.0
    %437 = vmatprep.mubr.f32.mxu0 0.0
    %438 = vmatmul.mubr.f32.gmra.mrb[0].mxu0 %v326
    %v439 = vpop.f32.mrb[0].mxu0
    %v440 = vadd.f32 0.0, %v439
    %v441 = vpop.f32.mrb[0].mxu0
    %442 = vmatprep.mubr.f32.mxu0 0.0
    %443 = vmatmul.mubr.f32.gmra.mrb[0].mxu0 %v329
    %v444 = vpop.f32.mrb[0].mxu0
    %v445 = vadd.f32 0.0, %v444
    %v446 = vpop.f32.mrb[0].mxu0
    %447 = vmatprep.mubr.f32.mxu0 0.0
    %448 = vmatmul.mubr.f32.gmra.mrb[0].mxu0 %v332
    %v449 = vpop.f32.mrb[0].mxu0
    %v450 = vadd.f32 0.0, %v449
    %v451 = vpop.f32.mrb[0].mxu0
    %452 = vmatprep.mubr.f32.mxu0 0.0
    %453 = vmatmul.mubr.f32.gmra.mrb[0].mxu0 %v335
    %v454 = vpop.f32.mrb[0].mxu0
    %v455 = vadd.f32 0.0, %v454
    %v456 = vpop.f32.mrb[0].mxu0
    %457 = vmatprep.mubr.f32.mxu0 0.0
    %458 = vmatmul.mubr.f32.gmra.mrb[0].mxu0 %v338
    %v459 = vpop.f32.mrb[0].mxu0
    %v460 = vadd.f32 0.0, %v459
    %v461 = vpop.f32.mrb[0].mxu0
    %462 = vmatprep.mubr.f32.mxu0 0.0
    %463 = vmatmul.mubr.f32.gmra.mrb[0].mxu0 %v341
    %v464 = vpop.f32.mrb[0].mxu0
    %v465 = vadd.f32 0.0, %v464
    %v466 = vpop.f32.mrb[0].mxu0
    %467 = vmatprep.mubr.f32.mxu0 0.0
    %468 = vmatmul.mubr.f32.gmra.mrb[0].mxu0 %v344
    %v469 = vpop.f32.mrb[0].mxu0
    %v470 = vadd.f32 0.0, %v469
    %v471 = vpop.f32.mrb[0].mxu0
    %472 = vmatprep.mubr.f32.mxu0 0.0
    %473 = vmatmul.mubr.f32.gmra.mrb[0].mxu0 %v347
    %v474 = vpop.f32.mrb[0].mxu0
    %v475 = vadd.f32 0.0, %v474
    %v476 = vpop.f32.mrb[0].mxu0
    %477 = vmatprep.mubr.f32.mxu0 0.0
    %478 = vmatmul.mubr.f32.gmra.mrb[0].mxu0 %v350
    %v479 = vpop.f32.mrb[0].mxu0
    %v480 = vadd.f32 0.0, %v479
    %v481 = vpop.f32.mrb[0].mxu0
    %482 = vmatprep.mubr.f32.mxu0 0.0
    %483 = vmatmul.mubr.f32.gmra.mrb[0].mxu0 %v353
    %v484 = vpop.f32.mrb[0].mxu0
    %v485 = vadd.f32 0.0, %v484
    %v486 = vpop.f32.mrb[0].mxu0
    %487 = vmatprep.mubr.f32.mxu0 0.0
    %488 = vmatmul.mubr.f32.gmra.mrb[0].mxu0 %v356
    %v489 = vpop.f32.mrb[0].mxu0
    %v490 = vadd.f32 0.0, %v489
    %v491 = vpop.f32.mrb[0].mxu0
    %492 = vmatprep.mubr.f32.mxu0 0.0
    %493 = vmatmul.mubr.f32.gmra.mrb[0].mxu0 %v359
    %v494 = vpop.f32.mrb[0].mxu0
    %v495 = vadd.f32 0.0, %v494
    %v496 = vpop.f32.mrb[0].mxu0
    %497 = vmatprep.mubr.f32.mxu0 0.0
    %498 = vmatmul.mubr.f32.gmra.mrb[0].mxu0 %v362
    %v499 = vpop.f32.mrb[0].mxu0
    %v500 = vadd.f32 0.0, %v499
    %v501 = vpop.f32.mrb[0].mxu0
    %502 = vmatprep.mubr.f32.mxu0 0.0
    %503 = vmatmul.mubr.f32.gmra.mrb[0].mxu0 %v365
    %v504 = vpop.f32.mrb[0].mxu0
    %v505 = vadd.f32 0.0, %v504
    %v506 = vpop.f32.mrb[0].mxu0
    %507 = vmatprep.mubr.f32.mxu0 0.0
    %508 = vmatmul.mubr.f32.gmra.mrb[0].mxu0 %v368
    %v509 = vpop.f32.mrb[0].mxu0
    %v510 = vadd.f32 0.0, %v509
    %v511 = vpop.f32.mrb[0].mxu0
    %512 = vmatprep.mubr.f32.mxu0 0.0
    %513 = vmatmul.mubr.f32.gmra.mrb[0].mxu0 %v371
    %v514 = vpop.f32.mrb[0].mxu0
    %v515 = vadd.f32 0.0, %v514
    %v516 = vpop.f32.mrb[0].mxu0
    %517 = vdwg.mxu0
    %v518 = vmax.f32 %v440, %v460
    %v519 = vmax.f32 %v445, %v465
    %v520 = vmax.f32 %v450, %v470
    %v521 = vmax.f32 %v455, %v475
    %v522 = vmax.f32 %v518, %v480
    %v523 = vmax.f32 %v519, %v485
    %v524 = vmax.f32 %v520, %v490
    %v525 = vmax.f32 %v521, %v495
    %v526 = vmax.f32 %v522, %v500
    %v527 = vmax.f32 %v523, %v505
    %v528 = vmax.f32 %v524, %v510
    %v529 = vmax.f32 %v525, %v515
    %v530 = vmax.f32 %v526, %v527
    %v531 = vmax.f32 %v528, %v529
    %v532 = vmax.f32 %v530, %v531
    %v533 = vrot.slane %v532, 4
    %v534 = vmax.f32 %v532, %v533
    %v535 = vrot.slane %v534, 2
    %v536 = vmax.f32 %v534, %v535
    %v537 = vrot.slane %v536, 1
    %v538 = vmax.f32 %v536, %v537
    %v539 = vsub.f32 %v440, %v538
    %v540 = vsub.f32 %v445, %v538
    %v541 = vsub.f32 %v450, %v538
    %v542 = vsub.f32 %v455, %v538
    %v543 = vsub.f32 %v460, %v538
    %v544 = vsub.f32 %v465, %v538
    %v545 = vsub.f32 %v470, %v538
    %v546 = vsub.f32 %v475, %v538
    %v547 = vsub.f32 %v480, %v538
    %v548 = vsub.f32 %v485, %v538
    %v549 = vsub.f32 %v490, %v538
    %v550 = vsub.f32 %v495, %v538
    %v551 = vsub.f32 %v500, %v538
    %v552 = vsub.f32 %v505, %v538
    %v553 = vsub.f32 %v510, %v538
    %v554 = vsub.f32 %v515, %v538
    %v555 = vmul.f32 %v539, 1.442695
    %v556 = vpow.pop %v555
    %v557 = vmul.f32 %v540, 1.442695
    %v558 = vpow.pop %v557
    %v559 = vmul.f32 %v541, 1.442695
    %v560 = vpow.pop %v559
    %v561 = vmul.f32 %v542, 1.442695
    %v562 = vpow.pop %v561
    %v563 = vmul.f32 %v543, 1.442695
    %v564 = vpow.pop %v563
    %v565 = vmul.f32 %v544, 1.442695
    %v566 = vpow.pop %v565
    %v567 = vmul.f32 %v545, 1.442695
    %v568 = vpow.pop %v567
    %v569 = vmul.f32 %v546, 1.442695
    %v570 = vpow.pop %v569
    %v571 = vmul.f32 %v547, 1.442695
    %v572 = vpow.pop %v571
    %v573 = vmul.f32 %v548, 1.442695
    %v574 = vpow.pop %v573
    %v575 = vmul.f32 %v549, 1.442695
    %v576 = vpow.pop %v575
    %v577 = vmul.f32 %v550, 1.442695
    %v578 = vpow.pop %v577
    %v579 = vmul.f32 %v551, 1.442695
    %v580 = vpow.pop %v579
    %v581 = vmul.f32 %v552, 1.442695
    %v582 = vpow.pop %v581
    %v583 = vmul.f32 %v553, 1.442695
    %v584 = vpow.pop %v583
    %v585 = vmul.f32 %v554, 1.442695
    %v586 = vpow.pop %v585
    %v587 = vadd.f32 %v556, %v558
    %v588 = vadd.f32 %v587, %v560
    %v589 = vadd.f32 %v588, %v562
    %v590 = vadd.f32 %v589, %v564
    %v591 = vadd.f32 %v590, %v566
    %v592 = vadd.f32 %v591, %v568
    %v593 = vadd.f32 %v592, %v570
    %v594 = vadd.f32 %v593, %v572
    %v595 = vadd.f32 %v594, %v574
    %v596 = vadd.f32 %v595, %v576
    %v597 = vadd.f32 %v596, %v578
    %v598 = vadd.f32 %v597, %v580
    %v599 = vadd.f32 %v598, %v582
    %v600 = vadd.f32 %v599, %v584
    %v601 = vadd.f32 %v600, %v586
    %v602 = vrot.slane %v601, 4
    %v603 = vadd.f32 %v601, %v602
    %v604 = vrot.slane %v603, 2
    %v605 = vadd.f32 %v603, %v604
    %v606 = vrot.slane %v605, 1
    %v607 = vadd.f32 %v605, %v606
    %v608 = vrcp.pop %v607
    %v609 = vmul.f32 %v607, %v608
    %v610 = vsub.f32 2.0, %v609
    %v611 = vmul.f32 %v608, %v610
    %v612 = vmul.f32 %v556, %v611
    %v613 = vmul.f32 %v558, %v611
    %v614 = vmul.f32 %v560, %v611
    %v615 = vmul.f32 %v562, %v611
    %v616 = vmul.f32 %v564, %v611
    %v617 = vmul.f32 %v566, %v611
    %v618 = vmul.f32 %v568, %v611
    %v619 = vmul.f32 %v570, %v611
    %v620 = vmul.f32 %v572, %v611
    %v621 = vmul.f32 %v574, %v611
    %v622 = vmul.f32 %v576, %v611
    %v623 = vmul.f32 %v578, %v611
    %v624 = vmul.f32 %v580, %v611
    %v625 = vmul.f32 %v582, %v611
    %v626 = vmul.f32 %v584, %v611
    %v627 = vmul.f32 %v586, %v611
    %v628 = vpack.c.bf16 %v613, %v612
    %v629 = vpack.c.bf16 %v615, %v614
    %v630 = vpack.c.bf16 %v617, %v616
    %v631 = vpack.c.bf16 %v619, %v618
    %v632 = vpack.c.bf16 %v621, %v620
    %v633 = vpack.c.bf16 %v623, %v622
    %v634 = vpack.c.bf16 %v625, %v624
    %v635 = vpack.c.bf16 %v627, %v626
    %v636 = vpack.c.bf16 %v274, %v274
    %v641 = vunpack.c.l.b16 %v46
    %v642 = vunpack.c.l.b16 %v47
    %v643 = vunpack.c.l.b16 %v48
    %v644 = vunpack.c.l.b16 %v49
    %v645 = vpack.c.b16 %v642, %v641
    %v646 = vpack.c.b16 %v644, %v643
    %v648 = vsel %vm324, %v645, 0
    %v651 = vsel %vm324, %v646, 0
    %vm653 = vcmask 1043456
    %v655 = vsel %vm653, %v636, 0
    %657 = vmatprep.subr.bf16.mxu0 0
    %658 = vmatpush1.bf16.msra.mxu0 %v655
    %659 = vmatprep.subr.bf16.mxu0 0
    %660 = vmatpush1.bf16.msra.mxu0 0
    %661 = vmatprep.subr.bf16.mxu0 0
    %662 = vmatpush1.bf16.msra.mxu0 0
    %663 = vmatprep.subr.bf16.mxu0 0
    %664 = vmatpush1.bf16.msra.mxu0 0
    %665 = vmatprep.subr.bf16.mxu0 0
    %666 = vmatpush1.bf16.msra.mxu0 0
    %667 = vmatprep.subr.bf16.mxu0 0
    %668 = vmatpush1.bf16.msra.mxu0 0
    %669 = vmatprep.subr.bf16.mxu0 0
    %670 = vmatpush1.bf16.msra.mxu0 0
    %671 = vmatprep.subr.bf16.mxu0 0
    %672 = vmatpush1.bf16.msra.mxu0 0
    %673 = vmatprep.subr.bf16.mxu0 0
    %674 = vmatpush1.bf16.msra.mxu0 0
    %675 = vmatprep.subr.bf16.mxu0 0
    %676 = vmatpush1.bf16.msra.mxu0 0
    %677 = vmatprep.subr.bf16.mxu0 0
    %678 = vmatpush1.bf16.msra.mxu0 0
    %679 = vmatprep.subr.bf16.mxu0 0
    %680 = vmatpush1.bf16.msra.mxu0 0
    %681 = vmatprep.subr.bf16.mxu0 0
    %682 = vmatpush1.bf16.msra.mxu0 0
    %683 = vmatprep.subr.bf16.mxu0 0
    %684 = vmatpush1.bf16.msra.mxu0 0
    %685 = vmatprep.subr.bf16.mxu0 0
    %686 = vmatpush1.bf16.msra.mxu0 0
    %687 = vmatprep.subr.bf16.mxu0 0
    %688 = vmatpush1.bf16.msra.mxu0 0
    %689 = vmatprep.mubr.bf16.mxu0 0
    %690 = vmatmul.mubr.bf16.gmra.mrb[0].mxu0 %v648
    %v691 = vpop.f32.mrb[0].mxu0
    %v692 = vadd.f32 0.0, %v691
    %v693 = vpop.f32.mrb[0].mxu0
    %v694 = vpop.f32.mrb[0].mxu0
    %v695 = vadd.f32 0.0, %v694
    %v696 = vpop.f32.mrb[0].mxu0
    %697 = vmatprep.mubr.bf16.mxu0 0
    %698 = vmatmul.mubr.bf16.gmra.mrb[0].mxu0 %v651
    %v699 = vpop.f32.mrb[0].mxu0
    %v700 = vadd.f32 0.0, %v699
    %v701 = vpop.f32.mrb[0].mxu0
    %v702 = vpop.f32.mrb[0].mxu0
    %v703 = vadd.f32 0.0, %v702
    %v704 = vpop.f32.mrb[0].mxu0
    %705 = vdwg.mxu0
    %v706 = vpack.c.bf16 %v695, %v692
    %v707 = vpack.c.bf16 %v703, %v700
    %708 = vxpose.xlu0.b32.start [1/16] %v259, 128
    %709 = vxpose.xlu0.b32.cont [2/16] 0.0, 128
    %710 = vxpose.xlu0.b32.cont [3/16] 0.0, 128
    %711 = vxpose.xlu0.b32.cont [4/16] 0.0, 128
    %712 = vxpose.xlu0.b32.cont [5/16] 0.0, 128
    %713 = vxpose.xlu0.b32.cont [6/16] 0.0, 128
    %714 = vxpose.xlu0.b32.cont [7/16] 0.0, 128
    %715 = vxpose.xlu0.b32.cont [8/16] 0.0, 128
    %716 = vxpose.xlu0.b32.cont [9/16] 0.0, 128
    %717 = vxpose.xlu0.b32.cont [10/16] 0.0, 128
    %718 = vxpose.xlu0.b32.cont [11/16] 0.0, 128
    %719 = vxpose.xlu0.b32.cont [12/16] 0.0, 128
    %720 = vxpose.xlu0.b32.cont [13/16] 0.0, 128
    %721 = vxpose.xlu0.b32.cont [14/16] 0.0, 128
    %722 = vxpose.xlu0.b32.cont [15/16] 0.0, 128
    %723 = vxpose.xlu0.b32.end [16/16] 0.0, 128
    %v724 = vpop.trf.xlu0
    %v725 = vpop.trf.xlu0
    %v726 = vpop.trf.xlu0
    %v727 = vpop.trf.xlu0
    %v728 = vpop.trf.xlu0
    %v729 = vpop.trf.xlu0
    %v730 = vpop.trf.xlu0
    %v731 = vpop.trf.xlu0
    %v732 = vpop.trf.xlu0
    %v733 = vpop.trf.xlu0
    %v734 = vpop.trf.xlu0
    %v735 = vpop.trf.xlu0
    %v736 = vpop.trf.xlu0
    %v737 = vpop.trf.xlu0
    %v738 = vpop.trf.xlu0
    %v739 = vpop.trf.xlu0
    %v741 = vsel %vm324, %v724, 0
    %v744 = vsel %vm324, %v725, 0
    %v747 = vsel %vm324, %v726, 0
    %v750 = vsel %vm324, %v727, 0
    %v753 = vsel %vm324, %v728, 0
    %v756 = vsel %vm324, %v729, 0
    %v759 = vsel %vm324, %v730, 0
    %v762 = vsel %vm324, %v731, 0
    %v765 = vsel %vm324, %v732, 0
    %v768 = vsel %vm324, %v733, 0
    %v771 = vsel %vm324, %v734, 0
    %v774 = vsel %vm324, %v735, 0
    %v777 = vsel %vm324, %v736, 0
    %v780 = vsel %vm324, %v737, 0
    %v783 = vsel %vm324, %v738, 0
    %v786 = vsel %vm324, %v739, 0
    %788 = vmatprep.subr.mxu0 0.0
    %789 = vmatpush1.msra.mxu0 %v239
    %790 = vmatprep.subr.mxu0 0.0
    %791 = vmatpush1.msra.mxu0 0.0
    %792 = vmatprep.subr.mxu0 0.0
    %793 = vmatpush1.msra.mxu0 0.0
    %794 = vmatprep.subr.mxu0 0.0
    %795 = vmatpush1.msra.mxu0 0.0
    %796 = vmatprep.subr.mxu0 0.0
    %797 = vmatpush1.msra.mxu0 0.0
    %798 = vmatprep.subr.mxu0 0.0
    %799 = vmatpush1.msra.mxu0 0.0
    %800 = vmatprep.subr.mxu0 0.0
    %801 = vmatpush1.msra.mxu0 0.0
    %802 = vmatprep.subr.mxu0 0.0
    %803 = vmatpush1.msra.mxu0 0.0
    %804 = vmatprep.subr.mxu0 0.0
    %805 = vmatpush1.msra.mxu0 0.0
    %806 = vmatprep.subr.mxu0 0.0
    %807 = vmatpush1.msra.mxu0 0.0
    %808 = vmatprep.subr.mxu0 0.0
    %809 = vmatpush1.msra.mxu0 0.0
    %810 = vmatprep.subr.mxu0 0.0
    %811 = vmatpush1.msra.mxu0 0.0
    %812 = vmatprep.subr.mxu0 0.0
    %813 = vmatpush1.msra.mxu0 0.0
    %814 = vmatprep.subr.mxu0 0.0
    %815 = vmatpush1.msra.mxu0 0.0
    %816 = vmatprep.subr.mxu0 0.0
    %817 = vmatpush1.msra.mxu0 0.0
    %818 = vmatprep.subr.mxu0 0.0
    %819 = vmatpush1.msra.mxu0 0.0
    %820 = vmatprep.subr.mxu0 0.0
    %821 = vmatpush1.msra.mxu0 0.0
    %822 = vmatprep.subr.mxu0 0.0
    %823 = vmatpush1.msra.mxu0 0.0
    %824 = vmatprep.subr.mxu0 0.0
    %825 = vmatpush1.msra.mxu0 0.0
    %826 = vmatprep.subr.mxu0 0.0
    %827 = vmatpush1.msra.mxu0 0.0
    %828 = vmatprep.subr.mxu0 0.0
    %829 = vmatpush1.msra.mxu0 0.0
    %830 = vmatprep.subr.mxu0 0.0
    %831 = vmatpush1.msra.mxu0 0.0
    %832 = vmatprep.subr.mxu0 0.0
    %833 = vmatpush1.msra.mxu0 0.0
    %834 = vmatprep.subr.mxu0 0.0
    %835 = vmatpush1.msra.mxu0 0.0
    %836 = vmatprep.subr.mxu0 0.0
    %837 = vmatpush1.msra.mxu0 0.0
    %838 = vmatprep.subr.mxu0 0.0
    %839 = vmatpush1.msra.mxu0 0.0
    %840 = vmatprep.subr.mxu0 0.0
    %841 = vmatpush1.msra.mxu0 0.0
    %842 = vmatprep.subr.mxu0 0.0
    %843 = vmatpush1.msra.mxu0 0.0
    %844 = vmatprep.subr.mxu0 0.0
    %845 = vmatpush1.msra.mxu0 0.0
    %846 = vmatprep.subr.mxu0 0.0
    %847 = vmatpush1.msra.mxu0 0.0
    %848 = vmatprep.subr.mxu0 0.0
    %849 = vmatpush1.msra.mxu0 0.0
    %850 = vmatprep.subr.mxu0 0.0
    %851 = vmatpush1.msra.mxu0 0.0
    %852 = vmatprep.mubr.f32.mxu0 0.0
    %853 = vmatmul.mubr.f32.gmra.mrb[0].mxu0 %v741
    %v854 = vpop.f32.mrb[0].mxu0
    %v855 = vadd.f32 0.0, %v854
    %v856 = vpop.f32.mrb[0].mxu0
    %857 = vmatprep.mubr.f32.mxu0 0.0
    %858 = vmatmul.mubr.f32.gmra.mrb[0].mxu0 %v744
    %v859 = vpop.f32.mrb[0].mxu0
    %v860 = vadd.f32 0.0, %v859
    %v861 = vpop.f32.mrb[0].mxu0
    %862 = vmatprep.mubr.f32.mxu0 0.0
    %863 = vmatmul.mubr.f32.gmra.mrb[0].mxu0 %v747
    %v864 = vpop.f32.mrb[0].mxu0
    %v865 = vadd.f32 0.0, %v864
    %v866 = vpop.f32.mrb[0].mxu0
    %867 = vmatprep.mubr.f32.mxu0 0.0
    %868 = vmatmul.mubr.f32.gmra.mrb[0].mxu0 %v750
    %v869 = vpop.f32.mrb[0].mxu0
    %v870 = vadd.f32 0.0, %v869
    %v871 = vpop.f32.mrb[0].mxu0
    %872 = vmatprep.mubr.f32.mxu0 0.0
    %873 = vmatmul.mubr.f32.gmra.mrb[0].mxu0 %v753
    %v874 = vpop.f32.mrb[0].mxu0
    %v875 = vadd.f32 0.0, %v874
    %v876 = vpop.f32.mrb[0].mxu0
    %877 = vmatprep.mubr.f32.mxu0 0.0
    %878 = vmatmul.mubr.f32.gmra.mrb[0].mxu0 %v756
    %v879 = vpop.f32.mrb[0].mxu0
    %v880 = vadd.f32 0.0, %v879
    %v881 = vpop.f32.mrb[0].mxu0
    %882 = vmatprep.mubr.f32.mxu0 0.0
    %883 = vmatmul.mubr.f32.gmra.mrb[0].mxu0 %v759
    %v884 = vpop.f32.mrb[0].mxu0
    %v885 = vadd.f32 0.0, %v884
    %v886 = vpop.f32.mrb[0].mxu0
    %887 = vmatprep.mubr.f32.mxu0 0.0
    %888 = vmatmul.mubr.f32.gmra.mrb[0].mxu0 %v762
    %v889 = vpop.f32.mrb[0].mxu0
    %v890 = vadd.f32 0.0, %v889
    %v891 = vpop.f32.mrb[0].mxu0
    %892 = vmatprep.mubr.f32.mxu0 0.0
    %893 = vmatmul.mubr.f32.gmra.mrb[0].mxu0 %v765
    %v894 = vpop.f32.mrb[0].mxu0
    %v895 = vadd.f32 0.0, %v894
    %v896 = vpop.f32.mrb[0].mxu0
    %897 = vmatprep.mubr.f32.mxu0 0.0
    %898 = vmatmul.mubr.f32.gmra.mrb[0].mxu0 %v768
    %v899 = vpop.f32.mrb[0].mxu0
    %v900 = vadd.f32 0.0, %v899
    %v901 = vpop.f32.mrb[0].mxu0
    %902 = vmatprep.mubr.f32.mxu0 0.0
    %903 = vmatmul.mubr.f32.gmra.mrb[0].mxu0 %v771
    %v904 = vpop.f32.mrb[0].mxu0
    %v905 = vadd.f32 0.0, %v904
    %v906 = vpop.f32.mrb[0].mxu0
    %907 = vmatprep.mubr.f32.mxu0 0.0
    %908 = vmatmul.mubr.f32.gmra.mrb[0].mxu0 %v774
    %v909 = vpop.f32.mrb[0].mxu0
    %v910 = vadd.f32 0.0, %v909
    %v911 = vpop.f32.mrb[0].mxu0
    %912 = vmatprep.mubr.f32.mxu0 0.0
    %913 = vmatmul.mubr.f32.gmra.mrb[0].mxu0 %v777
    %v914 = vpop.f32.mrb[0].mxu0
    %v915 = vadd.f32 0.0, %v914
    %v916 = vpop.f32.mrb[0].mxu0
    %917 = vmatprep.mubr.f32.mxu0 0.0
    %918 = vmatmul.mubr.f32.gmra.mrb[0].mxu0 %v780
    %v919 = vpop.f32.mrb[0].mxu0
    %v920 = vadd.f32 0.0, %v919
    %v921 = vpop.f32.mrb[0].mxu0
    %922 = vmatprep.mubr.f32.mxu0 0.0
    %923 = vmatmul.mubr.f32.gmra.mrb[0].mxu0 %v783
    %v924 = vpop.f32.mrb[0].mxu0
    %v925 = vadd.f32 0.0, %v924
    %v926 = vpop.f32.mrb[0].mxu0
    %927 = vmatprep.mubr.f32.mxu0 0.0
    %928 = vmatmul.mubr.f32.gmra.mrb[0].mxu0 %v786
    %v929 = vpop.f32.mrb[0].mxu0
    %v930 = vadd.f32 0.0, %v929
    %v931 = vpop.f32.mrb[0].mxu0
    %932 = vdwg.mxu0
    %v933 = vmax.f32 %v855, %v875
    %v934 = vmax.f32 %v860, %v880
    %v935 = vmax.f32 %v865, %v885
    %v936 = vmax.f32 %v870, %v890
    %v937 = vmax.f32 %v933, %v895
    %v938 = vmax.f32 %v934, %v900
    %v939 = vmax.f32 %v935, %v905
    %v940 = vmax.f32 %v936, %v910
    %v941 = vmax.f32 %v937, %v915
    %v942 = vmax.f32 %v938, %v920
    %v943 = vmax.f32 %v939, %v925
    %v944 = vmax.f32 %v940, %v930
    %v945 = vmax.f32 %v941, %v942
    %v946 = vmax.f32 %v943, %v944
    %v947 = vmax.f32 %v945, %v946
    %v948 = vrot.slane %v947, 4
    %v949 = vmax.f32 %v947, %v948
    %v950 = vrot.slane %v949, 2
    %v951 = vmax.f32 %v949, %v950
    %v952 = vrot.slane %v951, 1
    %v953 = vmax.f32 %v951, %v952
    %v954 = vsub.f32 %v855, %v953
    %v955 = vsub.f32 %v860, %v953
    %v956 = vsub.f32 %v865, %v953
    %v957 = vsub.f32 %v870, %v953
    %v958 = vsub.f32 %v875, %v953
    %v959 = vsub.f32 %v880, %v953
    %v960 = vsub.f32 %v885, %v953
    %v961 = vsub.f32 %v890, %v953
    %v962 = vsub.f32 %v895, %v953
    %v963 = vsub.f32 %v900, %v953
    %v964 = vsub.f32 %v905, %v953
    %v965 = vsub.f32 %v910, %v953
    %v966 = vsub.f32 %v915, %v953
    %v967 = vsub.f32 %v920, %v953
    %v968 = vsub.f32 %v925, %v953
    %v969 = vsub.f32 %v930, %v953
    %v970 = vmul.f32 %v954, 1.442695
    %v971 = vpow.pop %v970
    %v972 = vmul.f32 %v955, 1.442695
    %v973 = vpow.pop %v972
    %v974 = vmul.f32 %v956, 1.442695
    %v975 = vpow.pop %v974
    %v976 = vmul.f32 %v957, 1.442695
    %v977 = vpow.pop %v976
    %v978 = vmul.f32 %v958, 1.442695
    %v979 = vpow.pop %v978
    %v980 = vmul.f32 %v959, 1.442695
    %v981 = vpow.pop %v980
    %v982 = vmul.f32 %v960, 1.442695
    %v983 = vpow.pop %v982
    %v984 = vmul.f32 %v961, 1.442695
    %v985 = vpow.pop %v984
    %v986 = vmul.f32 %v962, 1.442695
    %v987 = vpow.pop %v986
    %v988 = vmul.f32 %v963, 1.442695
    %v989 = vpow.pop %v988
    %v990 = vmul.f32 %v964, 1.442695
    %v991 = vpow.pop %v990
    %v992 = vmul.f32 %v965, 1.442695
    %v993 = vpow.pop %v992
    %v994 = vmul.f32 %v966, 1.442695
    %v995 = vpow.pop %v994
    %v996 = vmul.f32 %v967, 1.442695
    %v997 = vpow.pop %v996
    %v998 = vmul.f32 %v968, 1.442695
    %v999 = vpow.pop %v998
    %v1000 = vmul.f32 %v969, 1.442695
    %v1001 = vpow.pop %v1000
    %v1002 = vadd.f32 %v971, %v973
    %v1003 = vadd.f32 %v1002, %v975
    %v1004 = vadd.f32 %v1003, %v977
    %v1005 = vadd.f32 %v1004, %v979
    %v1006 = vadd.f32 %v1005, %v981
    %v1007 = vadd.f32 %v1006, %v983
    %v1008 = vadd.f32 %v1007, %v985
    %v1009 = vadd.f32 %v1008, %v987
    %v1010 = vadd.f32 %v1009, %v989
    %v1011 = vadd.f32 %v1010, %v991
    %v1012 = vadd.f32 %v1011, %v993
    %v1013 = vadd.f32 %v1012, %v995
    %v1014 = vadd.f32 %v1013, %v997
    %v1015 = vadd.f32 %v1014, %v999
    %v1016 = vadd.f32 %v1015, %v1001
    %v1017 = vrot.slane %v1016, 4
    %v1018 = vadd.f32 %v1016, %v1017
    %v1019 = vrot.slane %v1018, 2
    %v1020 = vadd.f32 %v1018, %v1019
    %v1021 = vrot.slane %v1020, 1
    %v1022 = vadd.f32 %v1020, %v1021
    %v1023 = vrcp.pop %v1022
    %v1024 = vmul.f32 %v1022, %v1023
    %v1025 = vsub.f32 2.0, %v1024
    %v1026 = vmul.f32 %v1023, %v1025
    %v1027 = vmul.f32 %v971, %v1026
    %v1028 = vmul.f32 %v973, %v1026
    %v1029 = vmul.f32 %v975, %v1026
    %v1030 = vmul.f32 %v977, %v1026
    %v1031 = vmul.f32 %v979, %v1026
    %v1032 = vmul.f32 %v981, %v1026
    %v1033 = vmul.f32 %v983, %v1026
    %v1034 = vmul.f32 %v985, %v1026
    %v1035 = vmul.f32 %v987, %v1026
    %v1036 = vmul.f32 %v989, %v1026
    %v1037 = vmul.f32 %v991, %v1026
    %v1038 = vmul.f32 %v993, %v1026
    %v1039 = vmul.f32 %v995, %v1026
    %v1040 = vmul.f32 %v997, %v1026
    %v1041 = vmul.f32 %v999, %v1026
    %v1042 = vmul.f32 %v1001, %v1026
    %v1043 = vpack.c.bf16 %v1028, %v1027
    %v1044 = vpack.c.bf16 %v1030, %v1029
    %v1045 = vpack.c.bf16 %v1032, %v1031
    %v1046 = vpack.c.bf16 %v1034, %v1033
    %v1047 = vpack.c.bf16 %v1036, %v1035
    %v1048 = vpack.c.bf16 %v1038, %v1037
    %v1049 = vpack.c.bf16 %v1040, %v1039
    %v1050 = vpack.c.bf16 %v1042, %v1041
    %v1051 = vpack.c.bf16 %v279, %v279
    %v1056 = vunpack.c.l.b16 %v50
    %v1057 = vunpack.c.l.b16 %v51
    %v1058 = vunpack.c.l.b16 %v52
    %v1059 = vunpack.c.l.b16 %v53
    %v1060 = vpack.c.b16 %v1057, %v1056
    %v1061 = vpack.c.b16 %v1059, %v1058
    %v1063 = vsel %vm324, %v1060, 0
    %v1066 = vsel %vm324, %v1061, 0
    %v1069 = vsel %vm653, %v1051, 0
    %1071 = vmatprep.subr.bf16.mxu0 0
    %1072 = vmatpush1.bf16.msra.mxu0 %v1069
    %1073 = vmatprep.subr.bf16.mxu0 0
    %1074 = vmatpush1.bf16.msra.mxu0 0
    %1075 = vmatprep.subr.bf16.mxu0 0
    %1076 = vmatpush1.bf16.msra.mxu0 0
    %1077 = vmatprep.subr.bf16.mxu0 0
    %1078 = vmatpush1.bf16.msra.mxu0 0
    %1079 = vmatprep.subr.bf16.mxu0 0
    %1080 = vmatpush1.bf16.msra.mxu0 0
    %1081 = vmatprep.subr.bf16.mxu0 0
    %1082 = vmatpush1.bf16.msra.mxu0 0
    %1083 = vmatprep.subr.bf16.mxu0 0
    %1084 = vmatpush1.bf16.msra.mxu0 0
    %1085 = vmatprep.subr.bf16.mxu0 0
    %1086 = vmatpush1.bf16.msra.mxu0 0
    %1087 = vmatprep.subr.bf16.mxu0 0
    %1088 = vmatpush1.bf16.msra.mxu0 0
    %1089 = vmatprep.subr.bf16.mxu0 0
    %1090 = vmatpush1.bf16.msra.mxu0 0
    %1091 = vmatprep.subr.bf16.mxu0 0
    %1092 = vmatpush1.bf16.msra.mxu0 0
    %1093 = vmatprep.subr.bf16.mxu0 0
    %1094 = vmatpush1.bf16.msra.mxu0 0
    %1095 = vmatprep.subr.bf16.mxu0 0
    %1096 = vmatpush1.bf16.msra.mxu0 0
    %1097 = vmatprep.subr.bf16.mxu0 0
    %1098 = vmatpush1.bf16.msra.mxu0 0
    %1099 = vmatprep.subr.bf16.mxu0 0
    %1100 = vmatpush1.bf16.msra.mxu0 0
    %1101 = vmatprep.subr.bf16.mxu0 0
    %1102 = vmatpush1.bf16.msra.mxu0 0
    %1103 = vmatprep.mubr.bf16.mxu0 0
    %1104 = vmatmul.mubr.bf16.gmra.mrb[0].mxu0 %v1063
    %v1105 = vpop.f32.mrb[0].mxu0
    %v1106 = vadd.f32 0.0, %v1105
    %v1107 = vpop.f32.mrb[0].mxu0
    %v1108 = vpop.f32.mrb[0].mxu0
    %v1109 = vadd.f32 0.0, %v1108
    %v1110 = vpop.f32.mrb[0].mxu0
    %1111 = vmatprep.mubr.bf16.mxu0 0
    %1112 = vmatmul.mubr.bf16.gmra.mrb[0].mxu0 %v1066
    %v1113 = vpop.f32.mrb[0].mxu0
    %v1114 = vadd.f32 0.0, %v1113
    %v1115 = vpop.f32.mrb[0].mxu0
    %v1116 = vpop.f32.mrb[0].mxu0
    %v1117 = vadd.f32 0.0, %v1116
    %v1118 = vpop.f32.mrb[0].mxu0
    %1119 = vdwg.mxu0
    %v1120 = vpack.c.bf16 %v1109, %v1106
    %v1121 = vpack.c.bf16 %v1117, %v1114
    %1122 = vmatprep.subr.bf16.mxu0 0
    %1123 = vmatpush1.bf16.msra.mxu0 %v1043
    %1124 = vmatprep.subr.bf16.mxu0 0
    %1125 = vmatpush1.bf16.msra.mxu0 %v1044
    %1126 = vmatprep.subr.bf16.mxu0 0
    %1127 = vmatpush1.bf16.msra.mxu0 %v1045
    %1128 = vmatprep.subr.bf16.mxu0 0
    %1129 = vmatpush1.bf16.msra.mxu0 %v1046
    %1130 = vmatprep.subr.bf16.mxu0 0
    %1131 = vmatpush1.bf16.msra.mxu0 %v1047
    %1132 = vmatprep.subr.bf16.mxu0 0
    %1133 = vmatpush1.bf16.msra.mxu0 %v1048
    %1134 = vmatprep.subr.bf16.mxu0 0
    %1135 = vmatpush1.bf16.msra.mxu0 %v1049
    %1136 = vmatprep.subr.bf16.mxu0 0
    %1137 = vmatpush1.bf16.msra.mxu0 %v1050
    %1138 = vmatprep.subr.bf16.mxu0 0
    %1139 = vmatpush1.bf16.msra.mxu0 0
    %1140 = vmatprep.subr.bf16.mxu0 0
    %1141 = vmatpush1.bf16.msra.mxu0 0
    %1142 = vmatprep.subr.bf16.mxu0 0
    %1143 = vmatpush1.bf16.msra.mxu0 0
    %1144 = vmatprep.subr.bf16.mxu0 0
    %1145 = vmatpush1.bf16.msra.mxu0 0
    %1146 = vmatprep.subr.bf16.mxu0 0
    %1147 = vmatpush1.bf16.msra.mxu0 0
    %1148 = vmatprep.subr.bf16.mxu0 0
    %1149 = vmatpush1.bf16.msra.mxu0 0
    %1150 = vmatprep.subr.bf16.mxu0 0
    %1151 = vmatpush1.bf16.msra.mxu0 0
    %1152 = vmatprep.subr.bf16.mxu0 0
    %1153 = vmatpush1.bf16.msra.mxu0 0
    %1154 = vmatprep.mubr.bf16.mxu0 0
    %1155 = vmatmul.mubr.bf16.gmra.mrb[0].mxu0 %v1120
    %v1156 = vpop.f32.mrb[0].mxu0
    %v1157 = vadd.f32 0.0, %v1156
    %v1158 = vpop.f32.mrb[0].mxu0
    %v1159 = vpop.f32.mrb[0].mxu0
    %v1160 = vadd.f32 0.0, %v1159
    %v1161 = vpop.f32.mrb[0].mxu0
    %1162 = vmatprep.mubr.bf16.mxu0 0
    %1163 = vmatmul.mubr.bf16.gmra.mrb[0].mxu0 %v1121
    %v1164 = vpop.f32.mrb[0].mxu0
    %v1165 = vadd.f32 0.0, %v1164
    %v1166 = vpop.f32.mrb[0].mxu0
    %v1167 = vpop.f32.mrb[0].mxu0
    %v1168 = vadd.f32 0.0, %v1167
    %v1169 = vpop.f32.mrb[0].mxu0
    %1170 = vdwg.mxu0
    %1171 = vmatprep.subr.bf16.mxu0 0
    %1172 = vmatpush1.bf16.msra.mxu0 %v628
    %1173 = vmatprep.subr.bf16.mxu0 0
    %1174 = vmatpush1.bf16.msra.mxu0 %v629
    %1175 = vmatprep.subr.bf16.mxu0 0
    %1176 = vmatpush1.bf16.msra.mxu0 %v630
    %1177 = vmatprep.subr.bf16.mxu0 0
    %1178 = vmatpush1.bf16.msra.mxu0 %v631
    %1179 = vmatprep.subr.bf16.mxu0 0
    %1180 = vmatpush1.bf16.msra.mxu0 %v632
    %1181 = vmatprep.subr.bf16.mxu0 0
    %1182 = vmatpush1.bf16.msra.mxu0 %v633
    %1183 = vmatprep.subr.bf16.mxu0 0
    %1184 = vmatpush1.bf16.msra.mxu0 %v634
    %1185 = vmatprep.subr.bf16.mxu0 0
    %1186 = vmatpush1.bf16.msra.mxu0 %v635
    %1187 = vmatprep.subr.bf16.mxu0 0
    %1188 = vmatpush1.bf16.msra.mxu0 0
    %1189 = vmatprep.subr.bf16.mxu0 0
    %1190 = vmatpush1.bf16.msra.mxu0 0
    %1191 = vmatprep.subr.bf16.mxu0 0
    %1192 = vmatpush1.bf16.msra.mxu0 0
    %1193 = vmatprep.subr.bf16.mxu0 0
    %1194 = vmatpush1.bf16.msra.mxu0 0
    %1195 = vmatprep.subr.bf16.mxu0 0
    %1196 = vmatpush1.bf16.msra.mxu0 0
    %1197 = vmatprep.subr.bf16.mxu0 0
    %1198 = vmatpush1.bf16.msra.mxu0 0
    %1199 = vmatprep.subr.bf16.mxu0 0
    %1200 = vmatpush1.bf16.msra.mxu0 0
    %1201 = vmatprep.subr.bf16.mxu0 0
    %1202 = vmatpush1.bf16.msra.mxu0 0
    %1203 = vmatprep.mubr.bf16.mxu0 0
    %1204 = vmatmul.mubr.bf16.gmra.mrb[0].mxu0 %v706
    %v1205 = vpop.f32.mrb[0].mxu0
    %v1206 = vadd.f32 %v1157, %v1205
    %v1207 = vpop.f32.mrb[0].mxu0
    %v1208 = vpop.f32.mrb[0].mxu0
    %v1209 = vadd.f32 %v1160, %v1208
    %v1210 = vpop.f32.mrb[0].mxu0
    %1211 = vmatprep.mubr.bf16.mxu0 0
    %1212 = vmatmul.mubr.bf16.gmra.mrb[0].mxu0 %v707
    %v1213 = vpop.f32.mrb[0].mxu0
    %v1214 = vadd.f32 %v1165, %v1213
    %v1215 = vpop.f32.mrb[0].mxu0
    %v1216 = vpop.f32.mrb[0].mxu0
    %v1217 = vadd.f32 %v1168, %v1216
    %v1218 = vpop.f32.mrb[0].mxu0
    %1219 = vdwg.mxu0
    %1220 = vxpose.xlu0.b32.start [1/16] %v264, 128
    %1221 = vxpose.xlu0.b32.cont [2/16] 0.0, 128
    %1222 = vxpose.xlu0.b32.cont [3/16] 0.0, 128
    %1223 = vxpose.xlu0.b32.cont [4/16] 0.0, 128
    %1224 = vxpose.xlu0.b32.cont [5/16] 0.0, 128
    %1225 = vxpose.xlu0.b32.cont [6/16] 0.0, 128
    %1226 = vxpose.xlu0.b32.cont [7/16] 0.0, 128
    %1227 = vxpose.xlu0.b32.cont [8/16] 0.0, 128
    %1228 = vxpose.xlu0.b32.cont [9/16] 0.0, 128
    %1229 = vxpose.xlu0.b32.cont [10/16] 0.0, 128
    %1230 = vxpose.xlu0.b32.cont [11/16] 0.0, 128
    %1231 = vxpose.xlu0.b32.cont [12/16] 0.0, 128
    %1232 = vxpose.xlu0.b32.cont [13/16] 0.0, 128
    %1233 = vxpose.xlu0.b32.cont [14/16] 0.0, 128
    %1234 = vxpose.xlu0.b32.cont [15/16] 0.0, 128
    %1235 = vxpose.xlu0.b32.end [16/16] 0.0, 128
    %v1236 = vpop.trf.xlu0
    %v1237 = vpop.trf.xlu0
    %v1238 = vpop.trf.xlu0
    %v1239 = vpop.trf.xlu0
    %v1240 = vpop.trf.xlu0
    %v1241 = vpop.trf.xlu0
    %v1242 = vpop.trf.xlu0
    %v1243 = vpop.trf.xlu0
    %v1244 = vpop.trf.xlu0
    %v1245 = vpop.trf.xlu0
    %v1246 = vpop.trf.xlu0
    %v1247 = vpop.trf.xlu0
    %v1248 = vpop.trf.xlu0
    %v1249 = vpop.trf.xlu0
    %v1250 = vpop.trf.xlu0
    %v1251 = vpop.trf.xlu0
    %v1253 = vsel %vm324, %v1236, 0
    %v1256 = vsel %vm324, %v1237, 0
    %v1259 = vsel %vm324, %v1238, 0
    %v1262 = vsel %vm324, %v1239, 0
    %v1265 = vsel %vm324, %v1240, 0
    %v1268 = vsel %vm324, %v1241, 0
    %v1271 = vsel %vm324, %v1242, 0
    %v1274 = vsel %vm324, %v1243, 0
    %v1277 = vsel %vm324, %v1244, 0
    %v1280 = vsel %vm324, %v1245, 0
    %v1283 = vsel %vm324, %v1246, 0
    %v1286 = vsel %vm324, %v1247, 0
    %v1289 = vsel %vm324, %v1248, 0
    %v1292 = vsel %vm324, %v1249, 0
    %v1295 = vsel %vm324, %v1250, 0
    %v1298 = vsel %vm324, %v1251, 0
    %1300 = vmatprep.subr.mxu0 0.0
    %1301 = vmatpush1.msra.mxu0 %v244
    %1302 = vmatprep.subr.mxu0 0.0
    %1303 = vmatpush1.msra.mxu0 0.0
    %1304 = vmatprep.subr.mxu0 0.0
    %1305 = vmatpush1.msra.mxu0 0.0
    %1306 = vmatprep.subr.mxu0 0.0
    %1307 = vmatpush1.msra.mxu0 0.0
    %1308 = vmatprep.subr.mxu0 0.0
    %1309 = vmatpush1.msra.mxu0 0.0
    %1310 = vmatprep.subr.mxu0 0.0
    %1311 = vmatpush1.msra.mxu0 0.0
    %1312 = vmatprep.subr.mxu0 0.0
    %1313 = vmatpush1.msra.mxu0 0.0
    %1314 = vmatprep.subr.mxu0 0.0
    %1315 = vmatpush1.msra.mxu0 0.0
    %1316 = vmatprep.subr.mxu0 0.0
    %1317 = vmatpush1.msra.mxu0 0.0
    %1318 = vmatprep.subr.mxu0 0.0
    %1319 = vmatpush1.msra.mxu0 0.0
    %1320 = vmatprep.subr.mxu0 0.0
    %1321 = vmatpush1.msra.mxu0 0.0
    %1322 = vmatprep.subr.mxu0 0.0
    %1323 = vmatpush1.msra.mxu0 0.0
    %1324 = vmatprep.subr.mxu0 0.0
    %1325 = vmatpush1.msra.mxu0 0.0
    %1326 = vmatprep.subr.mxu0 0.0
    %1327 = vmatpush1.msra.mxu0 0.0
    %1328 = vmatprep.subr.mxu0 0.0
    %1329 = vmatpush1.msra.mxu0 0.0
    %1330 = vmatprep.subr.mxu0 0.0
    %1331 = vmatpush1.msra.mxu0 0.0
    %1332 = vmatprep.subr.mxu0 0.0
    %1333 = vmatpush1.msra.mxu0 0.0
    %1334 = vmatprep.subr.mxu0 0.0
    %1335 = vmatpush1.msra.mxu0 0.0
    %1336 = vmatprep.subr.mxu0 0.0
    %1337 = vmatpush1.msra.mxu0 0.0
    %1338 = vmatprep.subr.mxu0 0.0
    %1339 = vmatpush1.msra.mxu0 0.0
    %1340 = vmatprep.subr.mxu0 0.0
    %1341 = vmatpush1.msra.mxu0 0.0
    %1342 = vmatprep.subr.mxu0 0.0
    %1343 = vmatpush1.msra.mxu0 0.0
    %1344 = vmatprep.subr.mxu0 0.0
    %1345 = vmatpush1.msra.mxu0 0.0
    %1346 = vmatprep.subr.mxu0 0.0
    %1347 = vmatpush1.msra.mxu0 0.0
    %1348 = vmatprep.subr.mxu0 0.0
    %1349 = vmatpush1.msra.mxu0 0.0
    %1350 = vmatprep.subr.mxu0 0.0
    %1351 = vmatpush1.msra.mxu0 0.0
    %1352 = vmatprep.subr.mxu0 0.0
    %1353 = vmatpush1.msra.mxu0 0.0
    %1354 = vmatprep.subr.mxu0 0.0
    %1355 = vmatpush1.msra.mxu0 0.0
    %1356 = vmatprep.subr.mxu0 0.0
    %1357 = vmatpush1.msra.mxu0 0.0
    %1358 = vmatprep.subr.mxu0 0.0
    %1359 = vmatpush1.msra.mxu0 0.0
    %1360 = vmatprep.subr.mxu0 0.0
    %1361 = vmatpush1.msra.mxu0 0.0
    %1362 = vmatprep.subr.mxu0 0.0
    %1363 = vmatpush1.msra.mxu0 0.0
    %1364 = vmatprep.mubr.f32.mxu0 0.0
    %1365 = vmatmul.mubr.f32.gmra.mrb[0].mxu0 %v1253
    %v1366 = vpop.f32.mrb[0].mxu0
    %v1367 = vadd.f32 0.0, %v1366
    %v1368 = vpop.f32.mrb[0].mxu0
    %1369 = vmatprep.mubr.f32.mxu0 0.0
    %1370 = vmatmul.mubr.f32.gmra.mrb[0].mxu0 %v1256
    %v1371 = vpop.f32.mrb[0].mxu0
    %v1372 = vadd.f32 0.0, %v1371
    %v1373 = vpop.f32.mrb[0].mxu0
    %1374 = vmatprep.mubr.f32.mxu0 0.0
    %1375 = vmatmul.mubr.f32.gmra.mrb[0].mxu0 %v1259
    %v1376 = vpop.f32.mrb[0].mxu0
    %v1377 = vadd.f32 0.0, %v1376
    %v1378 = vpop.f32.mrb[0].mxu0
    %1379 = vmatprep.mubr.f32.mxu0 0.0
    %1380 = vmatmul.mubr.f32.gmra.mrb[0].mxu0 %v1262
    %v1381 = vpop.f32.mrb[0].mxu0
    %v1382 = vadd.f32 0.0, %v1381
    %v1383 = vpop.f32.mrb[0].mxu0
    %1384 = vmatprep.mubr.f32.mxu0 0.0
    %1385 = vmatmul.mubr.f32.gmra.mrb[0].mxu0 %v1265
    %v1386 = vpop.f32.mrb[0].mxu0
    %v1387 = vadd.f32 0.0, %v1386
    %v1388 = vpop.f32.mrb[0].mxu0
    %1389 = vmatprep.mubr.f32.mxu0 0.0
    %1390 = vmatmul.mubr.f32.gmra.mrb[0].mxu0 %v1268
    %v1391 = vpop.f32.mrb[0].mxu0
    %v1392 = vadd.f32 0.0, %v1391
    %v1393 = vpop.f32.mrb[0].mxu0
    %1394 = vmatprep.mubr.f32.mxu0 0.0
    %1395 = vmatmul.mubr.f32.gmra.mrb[0].mxu0 %v1271
    %v1396 = vpop.f32.mrb[0].mxu0
    %v1397 = vadd.f32 0.0, %v1396
    %v1398 = vpop.f32.mrb[0].mxu0
    %1399 = vmatprep.mubr.f32.mxu0 0.0
    %1400 = vmatmul.mubr.f32.gmra.mrb[0].mxu0 %v1274
    %v1401 = vpop.f32.mrb[0].mxu0
    %v1402 = vadd.f32 0.0, %v1401
    %v1403 = vpop.f32.mrb[0].mxu0
    %1404 = vmatprep.mubr.f32.mxu0 0.0
    %1405 = vmatmul.mubr.f32.gmra.mrb[0].mxu0 %v1277
    %v1406 = vpop.f32.mrb[0].mxu0
    %v1407 = vadd.f32 0.0, %v1406
    %v1408 = vpop.f32.mrb[0].mxu0
    %1409 = vmatprep.mubr.f32.mxu0 0.0
    %1410 = vmatmul.mubr.f32.gmra.mrb[0].mxu0 %v1280
    %v1411 = vpop.f32.mrb[0].mxu0
    %v1412 = vadd.f32 0.0, %v1411
    %v1413 = vpop.f32.mrb[0].mxu0
    %1414 = vmatprep.mubr.f32.mxu0 0.0
    %1415 = vmatmul.mubr.f32.gmra.mrb[0].mxu0 %v1283
    %v1416 = vpop.f32.mrb[0].mxu0
    %v1417 = vadd.f32 0.0, %v1416
    %v1418 = vpop.f32.mrb[0].mxu0
    %1419 = vmatprep.mubr.f32.mxu0 0.0
    %1420 = vmatmul.mubr.f32.gmra.mrb[0].mxu0 %v1286
    %v1421 = vpop.f32.mrb[0].mxu0
    %v1422 = vadd.f32 0.0, %v1421
    %v1423 = vpop.f32.mrb[0].mxu0
    %1424 = vmatprep.mubr.f32.mxu0 0.0
    %1425 = vmatmul.mubr.f32.gmra.mrb[0].mxu0 %v1289
    %v1426 = vpop.f32.mrb[0].mxu0
    %v1427 = vadd.f32 0.0, %v1426
    %v1428 = vpop.f32.mrb[0].mxu0
    %1429 = vmatprep.mubr.f32.mxu0 0.0
    %1430 = vmatmul.mubr.f32.gmra.mrb[0].mxu0 %v1292
    %v1431 = vpop.f32.mrb[0].mxu0
    %v1432 = vadd.f32 0.0, %v1431
    %v1433 = vpop.f32.mrb[0].mxu0
    %1434 = vmatprep.mubr.f32.mxu0 0.0
    %1435 = vmatmul.mubr.f32.gmra.mrb[0].mxu0 %v1295
    %v1436 = vpop.f32.mrb[0].mxu0
    %v1437 = vadd.f32 0.0, %v1436
    %v1438 = vpop.f32.mrb[0].mxu0
    %1439 = vmatprep.mubr.f32.mxu0 0.0
    %1440 = vmatmul.mubr.f32.gmra.mrb[0].mxu0 %v1298
    %v1441 = vpop.f32.mrb[0].mxu0
    %v1442 = vadd.f32 0.0, %v1441
    %v1443 = vpop.f32.mrb[0].mxu0
    %1444 = vdwg.mxu0
    %v1445 = vmax.f32 %v1367, %v1387
    %v1446 = vmax.f32 %v1372, %v1392
    %v1447 = vmax.f32 %v1377, %v1397
    %v1448 = vmax.f32 %v1382, %v1402
    %v1449 = vmax.f32 %v1445, %v1407
    %v1450 = vmax.f32 %v1446, %v1412
    %v1451 = vmax.f32 %v1447, %v1417
    %v1452 = vmax.f32 %v1448, %v1422
    %v1453 = vmax.f32 %v1449, %v1427
    %v1454 = vmax.f32 %v1450, %v1432
    %v1455 = vmax.f32 %v1451, %v1437
    %v1456 = vmax.f32 %v1452, %v1442
    %v1457 = vmax.f32 %v1453, %v1454
    %v1458 = vmax.f32 %v1455, %v1456
    %v1459 = vmax.f32 %v1457, %v1458
    %v1460 = vrot.slane %v1459, 4
    %v1461 = vmax.f32 %v1459, %v1460
    %v1462 = vrot.slane %v1461, 2
    %v1463 = vmax.f32 %v1461, %v1462
    %v1464 = vrot.slane %v1463, 1
    %v1465 = vmax.f32 %v1463, %v1464
    %v1466 = vsub.f32 %v1367, %v1465
    %v1467 = vsub.f32 %v1372, %v1465
    %v1468 = vsub.f32 %v1377, %v1465
    %v1469 = vsub.f32 %v1382, %v1465
    %v1470 = vsub.f32 %v1387, %v1465
    %v1471 = vsub.f32 %v1392, %v1465
    %v1472 = vsub.f32 %v1397, %v1465
    %v1473 = vsub.f32 %v1402, %v1465
    %v1474 = vsub.f32 %v1407, %v1465
    %v1475 = vsub.f32 %v1412, %v1465
    %v1476 = vsub.f32 %v1417, %v1465
    %v1477 = vsub.f32 %v1422, %v1465
    %v1478 = vsub.f32 %v1427, %v1465
    %v1479 = vsub.f32 %v1432, %v1465
    %v1480 = vsub.f32 %v1437, %v1465
    %v1481 = vsub.f32 %v1442, %v1465
    %v1482 = vmul.f32 %v1466, 1.442695
    %v1483 = vpow.pop %v1482
    %v1484 = vmul.f32 %v1467, 1.442695
    %v1485 = vpow.pop %v1484
    %v1486 = vmul.f32 %v1468, 1.442695
    %v1487 = vpow.pop %v1486
    %v1488 = vmul.f32 %v1469, 1.442695
    %v1489 = vpow.pop %v1488
    %v1490 = vmul.f32 %v1470, 1.442695
    %v1491 = vpow.pop %v1490
    %v1492 = vmul.f32 %v1471, 1.442695
    %v1493 = vpow.pop %v1492
    %v1494 = vmul.f32 %v1472, 1.442695
    %v1495 = vpow.pop %v1494
    %v1496 = vmul.f32 %v1473, 1.442695
    %v1497 = vpow.pop %v1496
    %v1498 = vmul.f32 %v1474, 1.442695
    %v1499 = vpow.pop %v1498
    %v1500 = vmul.f32 %v1475, 1.442695
    %v1501 = vpow.pop %v1500
    %v1502 = vmul.f32 %v1476, 1.442695
    %v1503 = vpow.pop %v1502
    %v1504 = vmul.f32 %v1477, 1.442695
    %v1505 = vpow.pop %v1504
    %v1506 = vmul.f32 %v1478, 1.442695
    %v1507 = vpow.pop %v1506
    %v1508 = vmul.f32 %v1479, 1.442695
    %v1509 = vpow.pop %v1508
    %v1510 = vmul.f32 %v1480, 1.442695
    %v1511 = vpow.pop %v1510
    %v1512 = vmul.f32 %v1481, 1.442695
    %v1513 = vpow.pop %v1512
    %v1514 = vadd.f32 %v1483, %v1485
    %v1515 = vadd.f32 %v1514, %v1487
    %v1516 = vadd.f32 %v1515, %v1489
    %v1517 = vadd.f32 %v1516, %v1491
    %v1518 = vadd.f32 %v1517, %v1493
    %v1519 = vadd.f32 %v1518, %v1495
    %v1520 = vadd.f32 %v1519, %v1497
    %v1521 = vadd.f32 %v1520, %v1499
    %v1522 = vadd.f32 %v1521, %v1501
    %v1523 = vadd.f32 %v1522, %v1503
    %v1524 = vadd.f32 %v1523, %v1505
    %v1525 = vadd.f32 %v1524, %v1507
    %v1526 = vadd.f32 %v1525, %v1509
    %v1527 = vadd.f32 %v1526, %v1511
    %v1528 = vadd.f32 %v1527, %v1513
    %v1529 = vrot.slane %v1528, 4
    %v1530 = vadd.f32 %v1528, %v1529
    %v1531 = vrot.slane %v1530, 2
    %v1532 = vadd.f32 %v1530, %v1531
    %v1533 = vrot.slane %v1532, 1
    %v1534 = vadd.f32 %v1532, %v1533
    %v1535 = vrcp.pop %v1534
    %v1536 = vmul.f32 %v1534, %v1535
    %v1537 = vsub.f32 2.0, %v1536
    %v1538 = vmul.f32 %v1535, %v1537
    %v1539 = vmul.f32 %v1483, %v1538
    %v1540 = vmul.f32 %v1485, %v1538
    %v1541 = vmul.f32 %v1487, %v1538
    %v1542 = vmul.f32 %v1489, %v1538
    %v1543 = vmul.f32 %v1491, %v1538
    %v1544 = vmul.f32 %v1493, %v1538
    %v1545 = vmul.f32 %v1495, %v1538
    %v1546 = vmul.f32 %v1497, %v1538
    %v1547 = vmul.f32 %v1499, %v1538
    %v1548 = vmul.f32 %v1501, %v1538
    %v1549 = vmul.f32 %v1503, %v1538
    %v1550 = vmul.f32 %v1505, %v1538
    %v1551 = vmul.f32 %v1507, %v1538
    %v1552 = vmul.f32 %v1509, %v1538
    %v1553 = vmul.f32 %v1511, %v1538
    %v1554 = vmul.f32 %v1513, %v1538
    %v1555 = vpack.c.bf16 %v1540, %v1539
    %v1556 = vpack.c.bf16 %v1542, %v1541
    %v1557 = vpack.c.bf16 %v1544, %v1543
    %v1558 = vpack.c.bf16 %v1546, %v1545
    %v1559 = vpack.c.bf16 %v1548, %v1547
    %v1560 = vpack.c.bf16 %v1550, %v1549
    %v1561 = vpack.c.bf16 %v1552, %v1551
    %v1562 = vpack.c.bf16 %v1554, %v1553
    %v1563 = vpack.c.bf16 %v284, %v284
    %v1568 = vunpack.c.l.b16 %v54
    %v1569 = vunpack.c.l.b16 %v55
    %v1570 = vunpack.c.l.b16 %v56
    %v1571 = vunpack.c.l.b16 %v57
    %v1572 = vpack.c.b16 %v1569, %v1568
    %v1573 = vpack.c.b16 %v1571, %v1570
    %v1575 = vsel %vm324, %v1572, 0
    %v1578 = vsel %vm324, %v1573, 0
    %v1581 = vsel %vm653, %v1563, 0
    %1583 = vmatprep.subr.bf16.mxu0 0
    %1584 = vmatpush1.bf16.msra.mxu0 %v1581
    %1585 = vmatprep.subr.bf16.mxu0 0
    %1586 = vmatpush1.bf16.msra.mxu0 0
    %1587 = vmatprep.subr.bf16.mxu0 0
    %1588 = vmatpush1.bf16.msra.mxu0 0
    %1589 = vmatprep.subr.bf16.mxu0 0
    %1590 = vmatpush1.bf16.msra.mxu0 0
    %1591 = vmatprep.subr.bf16.mxu0 0
    %1592 = vmatpush1.bf16.msra.mxu0 0
    %1593 = vmatprep.subr.bf16.mxu0 0
    %1594 = vmatpush1.bf16.msra.mxu0 0
    %1595 = vmatprep.subr.bf16.mxu0 0
    %1596 = vmatpush1.bf16.msra.mxu0 0
    %1597 = vmatprep.subr.bf16.mxu0 0
    %1598 = vmatpush1.bf16.msra.mxu0 0
    %1599 = vmatprep.subr.bf16.mxu0 0
    %1600 = vmatpush1.bf16.msra.mxu0 0
    %1601 = vmatprep.subr.bf16.mxu0 0
    %1602 = vmatpush1.bf16.msra.mxu0 0
    %1603 = vmatprep.subr.bf16.mxu0 0
    %1604 = vmatpush1.bf16.msra.mxu0 0
    %1605 = vmatprep.subr.bf16.mxu0 0
    %1606 = vmatpush1.bf16.msra.mxu0 0
    %1607 = vmatprep.subr.bf16.mxu0 0
    %1608 = vmatpush1.bf16.msra.mxu0 0
    %1609 = vmatprep.subr.bf16.mxu0 0
    %1610 = vmatpush1.bf16.msra.mxu0 0
    %1611 = vmatprep.subr.bf16.mxu0 0
    %1612 = vmatpush1.bf16.msra.mxu0 0
    %1613 = vmatprep.subr.bf16.mxu0 0
    %1614 = vmatpush1.bf16.msra.mxu0 0
    %1615 = vmatprep.mubr.bf16.mxu0 0
    %1616 = vmatmul.mubr.bf16.gmra.mrb[0].mxu0 %v1575
    %v1617 = vpop.f32.mrb[0].mxu0
    %v1618 = vadd.f32 0.0, %v1617
    %v1619 = vpop.f32.mrb[0].mxu0
    %v1620 = vpop.f32.mrb[0].mxu0
    %v1621 = vadd.f32 0.0, %v1620
    %v1622 = vpop.f32.mrb[0].mxu0
    %1623 = vmatprep.mubr.bf16.mxu0 0
    %1624 = vmatmul.mubr.bf16.gmra.mrb[0].mxu0 %v1578
    %v1625 = vpop.f32.mrb[0].mxu0
    %v1626 = vadd.f32 0.0, %v1625
    %v1627 = vpop.f32.mrb[0].mxu0
    %v1628 = vpop.f32.mrb[0].mxu0
    %v1629 = vadd.f32 0.0, %v1628
    %v1630 = vpop.f32.mrb[0].mxu0
    %1631 = vdwg.mxu0
    %v1632 = vpack.c.bf16 %v1621, %v1618
    %v1633 = vpack.c.bf16 %v1629, %v1626
    %1634 = vmatprep.subr.bf16.mxu0 0
    %1635 = vmatpush1.bf16.msra.mxu0 %v1555
    %1636 = vmatprep.subr.bf16.mxu0 0
    %1637 = vmatpush1.bf16.msra.mxu0 %v1556
    %1638 = vmatprep.subr.bf16.mxu0 0
    %1639 = vmatpush1.bf16.msra.mxu0 %v1557
    %1640 = vmatprep.subr.bf16.mxu0 0
    %1641 = vmatpush1.bf16.msra.mxu0 %v1558
    %1642 = vmatprep.subr.bf16.mxu0 0
    %1643 = vmatpush1.bf16.msra.mxu0 %v1559
    %1644 = vmatprep.subr.bf16.mxu0 0
    %1645 = vmatpush1.bf16.msra.mxu0 %v1560
    %1646 = vmatprep.subr.bf16.mxu0 0
    %1647 = vmatpush1.bf16.msra.mxu0 %v1561
    %1648 = vmatprep.subr.bf16.mxu0 0
    %1649 = vmatpush1.bf16.msra.mxu0 %v1562
    %1650 = vmatprep.subr.bf16.mxu0 0
    %1651 = vmatpush1.bf16.msra.mxu0 0
    %1652 = vmatprep.subr.bf16.mxu0 0
    %1653 = vmatpush1.bf16.msra.mxu0 0
    %1654 = vmatprep.subr.bf16.mxu0 0
    %1655 = vmatpush1.bf16.msra.mxu0 0
    %1656 = vmatprep.subr.bf16.mxu0 0
    %1657 = vmatpush1.bf16.msra.mxu0 0
    %1658 = vmatprep.subr.bf16.mxu0 0
    %1659 = vmatpush1.bf16.msra.mxu0 0
    %1660 = vmatprep.subr.bf16.mxu0 0
    %1661 = vmatpush1.bf16.msra.mxu0 0
    %1662 = vmatprep.subr.bf16.mxu0 0
    %1663 = vmatpush1.bf16.msra.mxu0 0
    %1664 = vmatprep.subr.bf16.mxu0 0
    %1665 = vmatpush1.bf16.msra.mxu0 0
    %1666 = vmatprep.mubr.bf16.mxu0 0
    %1667 = vmatmul.mubr.bf16.gmra.mrb[0].mxu0 %v1632
    %v1668 = vpop.f32.mrb[0].mxu0
    %v1669 = vadd.f32 0.0, %v1668
    %v1670 = vpop.f32.mrb[0].mxu0
    %v1671 = vpop.f32.mrb[0].mxu0
    %v1672 = vadd.f32 0.0, %v1671
    %v1673 = vpop.f32.mrb[0].mxu0
    %1674 = vmatprep.mubr.bf16.mxu0 0
    %1675 = vmatmul.mubr.bf16.gmra.mrb[0].mxu0 %v1633
    %v1676 = vpop.f32.mrb[0].mxu0
    %v1677 = vadd.f32 0.0, %v1676
    %v1678 = vpop.f32.mrb[0].mxu0
    %v1679 = vpop.f32.mrb[0].mxu0
    %v1680 = vadd.f32 0.0, %v1679
    %v1681 = vpop.f32.mrb[0].mxu0
    %1682 = vdwg.mxu0
    %v1683 = vadd.f32 %v1206, %v1669
    %v1684 = vadd.f32 %v1209, %v1672
    %v1685 = vadd.f32 %v1214, %v1677
    %v1686 = vadd.f32 %v1217, %v1680
    %1687 = vxpose.xlu0.b32.start [1/16] %v269, 128
    %1688 = vxpose.xlu0.b32.cont [2/16] 0.0, 128
    %1689 = vxpose.xlu0.b32.cont [3/16] 0.0, 128
    %1690 = vxpose.xlu0.b32.cont [4/16] 0.0, 128
    %1691 = vxpose.xlu0.b32.cont [5/16] 0.0, 128
    %1692 = vxpose.xlu0.b32.cont [6/16] 0.0, 128
    %1693 = vxpose.xlu0.b32.cont [7/16] 0.0, 128
    %1694 = vxpose.xlu0.b32.cont [8/16] 0.0, 128
    %1695 = vxpose.xlu0.b32.cont [9/16] 0.0, 128
    %1696 = vxpose.xlu0.b32.cont [10/16] 0.0, 128
    %1697 = vxpose.xlu0.b32.cont [11/16] 0.0, 128
    %1698 = vxpose.xlu0.b32.cont [12/16] 0.0, 128
    %1699 = vxpose.xlu0.b32.cont [13/16] 0.0, 128
    %1700 = vxpose.xlu0.b32.cont [14/16] 0.0, 128
    %1701 = vxpose.xlu0.b32.cont [15/16] 0.0, 128
    %1702 = vxpose.xlu0.b32.end [16/16] 0.0, 128
    %v1703 = vpop.trf.xlu0
    %v1704 = vpop.trf.xlu0
    %v1705 = vpop.trf.xlu0
    %v1706 = vpop.trf.xlu0
    %v1707 = vpop.trf.xlu0
    %v1708 = vpop.trf.xlu0
    %v1709 = vpop.trf.xlu0
    %v1710 = vpop.trf.xlu0
    %v1711 = vpop.trf.xlu0
    %v1712 = vpop.trf.xlu0
    %v1713 = vpop.trf.xlu0
    %v1714 = vpop.trf.xlu0
    %v1715 = vpop.trf.xlu0
    %v1716 = vpop.trf.xlu0
    %v1717 = vpop.trf.xlu0
    %v1718 = vpop.trf.xlu0
    %v1720 = vsel %vm324, %v1703, 0
    %v1723 = vsel %vm324, %v1704, 0
    %v1726 = vsel %vm324, %v1705, 0
    %v1729 = vsel %vm324, %v1706, 0
    %v1732 = vsel %vm324, %v1707, 0
    %v1735 = vsel %vm324, %v1708, 0
    %v1738 = vsel %vm324, %v1709, 0
    %v1741 = vsel %vm324, %v1710, 0
    %v1744 = vsel %vm324, %v1711, 0
    %v1747 = vsel %vm324, %v1712, 0
    %v1750 = vsel %vm324, %v1713, 0
    %v1753 = vsel %vm324, %v1714, 0
    %v1756 = vsel %vm324, %v1715, 0
    %v1759 = vsel %vm324, %v1716, 0
    %v1762 = vsel %vm324, %v1717, 0
    %v1765 = vsel %vm324, %v1718, 0
    %1767 = vmatprep.subr.mxu0 0.0
    %1768 = vmatpush1.msra.mxu0 %v249
    %1769 = vmatprep.subr.mxu0 0.0
    %1770 = vmatpush1.msra.mxu0 0.0
    %1771 = vmatprep.subr.mxu0 0.0
    %1772 = vmatpush1.msra.mxu0 0.0
    %1773 = vmatprep.subr.mxu0 0.0
    %1774 = vmatpush1.msra.mxu0 0.0
    %1775 = vmatprep.subr.mxu0 0.0
    %1776 = vmatpush1.msra.mxu0 0.0
    %1777 = vmatprep.subr.mxu0 0.0
    %1778 = vmatpush1.msra.mxu0 0.0
    %1779 = vmatprep.subr.mxu0 0.0
    %1780 = vmatpush1.msra.mxu0 0.0
    %1781 = vmatprep.subr.mxu0 0.0
    %1782 = vmatpush1.msra.mxu0 0.0
    %1783 = vmatprep.subr.mxu0 0.0
    %1784 = vmatpush1.msra.mxu0 0.0
    %1785 = vmatprep.subr.mxu0 0.0
    %1786 = vmatpush1.msra.mxu0 0.0
    %1787 = vmatprep.subr.mxu0 0.0
    %1788 = vmatpush1.msra.mxu0 0.0
    %1789 = vmatprep.subr.mxu0 0.0
    %1790 = vmatpush1.msra.mxu0 0.0
    %1791 = vmatprep.subr.mxu0 0.0
    %1792 = vmatpush1.msra.mxu0 0.0
    %1793 = vmatprep.subr.mxu0 0.0
    %1794 = vmatpush1.msra.mxu0 0.0
    %1795 = vmatprep.subr.mxu0 0.0
    %1796 = vmatpush1.msra.mxu0 0.0
    %1797 = vmatprep.subr.mxu0 0.0
    %1798 = vmatpush1.msra.mxu0 0.0
    %1799 = vmatprep.subr.mxu0 0.0
    %1800 = vmatpush1.msra.mxu0 0.0
    %1801 = vmatprep.subr.mxu0 0.0
    %1802 = vmatpush1.msra.mxu0 0.0
    %1803 = vmatprep.subr.mxu0 0.0
    %1804 = vmatpush1.msra.mxu0 0.0
    %1805 = vmatprep.subr.mxu0 0.0
    %1806 = vmatpush1.msra.mxu0 0.0
    %1807 = vmatprep.subr.mxu0 0.0
    %1808 = vmatpush1.msra.mxu0 0.0
    %1809 = vmatprep.subr.mxu0 0.0
    %1810 = vmatpush1.msra.mxu0 0.0
    %1811 = vmatprep.subr.mxu0 0.0
    %1812 = vmatpush1.msra.mxu0 0.0
    %1813 = vmatprep.subr.mxu0 0.0
    %1814 = vmatpush1.msra.mxu0 0.0
    %1815 = vmatprep.subr.mxu0 0.0
    %1816 = vmatpush1.msra.mxu0 0.0
    %1817 = vmatprep.subr.mxu0 0.0
    %1818 = vmatpush1.msra.mxu0 0.0
    %1819 = vmatprep.subr.mxu0 0.0
    %1820 = vmatpush1.msra.mxu0 0.0
    %1821 = vmatprep.subr.mxu0 0.0
    %1822 = vmatpush1.msra.mxu0 0.0
    %1823 = vmatprep.subr.mxu0 0.0
    %1824 = vmatpush1.msra.mxu0 0.0
    %1825 = vmatprep.subr.mxu0 0.0
    %1826 = vmatpush1.msra.mxu0 0.0
    %1827 = vmatprep.subr.mxu0 0.0
    %1828 = vmatpush1.msra.mxu0 0.0
    %1829 = vmatprep.subr.mxu0 0.0
    %1830 = vmatpush1.msra.mxu0 0.0
    %1831 = vmatprep.mubr.f32.mxu0 0.0
    %1832 = vmatmul.mubr.f32.gmra.mrb[0].mxu0 %v1720
    %v1833 = vpop.f32.mrb[0].mxu0
    %v1834 = vadd.f32 0.0, %v1833
    %v1835 = vpop.f32.mrb[0].mxu0
    %1836 = vmatprep.mubr.f32.mxu0 0.0
    %1837 = vmatmul.mubr.f32.gmra.mrb[0].mxu0 %v1723
    %v1838 = vpop.f32.mrb[0].mxu0
    %v1839 = vadd.f32 0.0, %v1838
    %v1840 = vpop.f32.mrb[0].mxu0
    %1841 = vmatprep.mubr.f32.mxu0 0.0
    %1842 = vmatmul.mubr.f32.gmra.mrb[0].mxu0 %v1726
    %v1843 = vpop.f32.mrb[0].mxu0
    %v1844 = vadd.f32 0.0, %v1843
    %v1845 = vpop.f32.mrb[0].mxu0
    %1846 = vmatprep.mubr.f32.mxu0 0.0
    %1847 = vmatmul.mubr.f32.gmra.mrb[0].mxu0 %v1729
    %v1848 = vpop.f32.mrb[0].mxu0
    %v1849 = vadd.f32 0.0, %v1848
    %v1850 = vpop.f32.mrb[0].mxu0
    %1851 = vmatprep.mubr.f32.mxu0 0.0
    %1852 = vmatmul.mubr.f32.gmra.mrb[0].mxu0 %v1732
    %v1853 = vpop.f32.mrb[0].mxu0
    %v1854 = vadd.f32 0.0, %v1853
    %v1855 = vpop.f32.mrb[0].mxu0
    %1856 = vmatprep.mubr.f32.mxu0 0.0
    %1857 = vmatmul.mubr.f32.gmra.mrb[0].mxu0 %v1735
    %v1858 = vpop.f32.mrb[0].mxu0
    %v1859 = vadd.f32 0.0, %v1858
    %v1860 = vpop.f32.mrb[0].mxu0
    %1861 = vmatprep.mubr.f32.mxu0 0.0
    %1862 = vmatmul.mubr.f32.gmra.mrb[0].mxu0 %v1738
    %v1863 = vpop.f32.mrb[0].mxu0
    %v1864 = vadd.f32 0.0, %v1863
    %v1865 = vpop.f32.mrb[0].mxu0
    %1866 = vmatprep.mubr.f32.mxu0 0.0
    %1867 = vmatmul.mubr.f32.gmra.mrb[0].mxu0 %v1741
    %v1868 = vpop.f32.mrb[0].mxu0
    %v1869 = vadd.f32 0.0, %v1868
    %v1870 = vpop.f32.mrb[0].mxu0
    %1871 = vmatprep.mubr.f32.mxu0 0.0
    %1872 = vmatmul.mubr.f32.gmra.mrb[0].mxu0 %v1744
    %v1873 = vpop.f32.mrb[0].mxu0
    %v1874 = vadd.f32 0.0, %v1873
    %v1875 = vpop.f32.mrb[0].mxu0
    %1876 = vmatprep.mubr.f32.mxu0 0.0
    %1877 = vmatmul.mubr.f32.gmra.mrb[0].mxu0 %v1747
    %v1878 = vpop.f32.mrb[0].mxu0
    %v1879 = vadd.f32 0.0, %v1878
    %v1880 = vpop.f32.mrb[0].mxu0
    %1881 = vmatprep.mubr.f32.mxu0 0.0
    %1882 = vmatmul.mubr.f32.gmra.mrb[0].mxu0 %v1750
    %v1883 = vpop.f32.mrb[0].mxu0
    %v1884 = vadd.f32 0.0, %v1883
    %v1885 = vpop.f32.mrb[0].mxu0
    %1886 = vmatprep.mubr.f32.mxu0 0.0
    %1887 = vmatmul.mubr.f32.gmra.mrb[0].mxu0 %v1753
    %v1888 = vpop.f32.mrb[0].mxu0
    %v1889 = vadd.f32 0.0, %v1888
    %v1890 = vpop.f32.mrb[0].mxu0
    %1891 = vmatprep.mubr.f32.mxu0 0.0
    %1892 = vmatmul.mubr.f32.gmra.mrb[0].mxu0 %v1756
    %v1893 = vpop.f32.mrb[0].mxu0
    %v1894 = vadd.f32 0.0, %v1893
    %v1895 = vpop.f32.mrb[0].mxu0
    %1896 = vmatprep.mubr.f32.mxu0 0.0
    %1897 = vmatmul.mubr.f32.gmra.mrb[0].mxu0 %v1759
    %v1898 = vpop.f32.mrb[0].mxu0
    %v1899 = vadd.f32 0.0, %v1898
    %v1900 = vpop.f32.mrb[0].mxu0
    %1901 = vmatprep.mubr.f32.mxu0 0.0
    %1902 = vmatmul.mubr.f32.gmra.mrb[0].mxu0 %v1762
    %v1903 = vpop.f32.mrb[0].mxu0
    %v1904 = vadd.f32 0.0, %v1903
    %v1905 = vpop.f32.mrb[0].mxu0
    %1906 = vmatprep.mubr.f32.mxu0 0.0
    %1907 = vmatmul.mubr.f32.gmra.mrb[0].mxu0 %v1765
    %v1908 = vpop.f32.mrb[0].mxu0
    %v1909 = vadd.f32 0.0, %v1908
    %v1910 = vpop.f32.mrb[0].mxu0
    %1911 = vdwg.mxu0
    %v1912 = vmax.f32 %v1834, %v1854
    %v1913 = vmax.f32 %v1839, %v1859
    %v1914 = vmax.f32 %v1844, %v1864
    %v1915 = vmax.f32 %v1849, %v1869
    %v1916 = vmax.f32 %v1912, %v1874
    %v1917 = vmax.f32 %v1913, %v1879
    %v1918 = vmax.f32 %v1914, %v1884
    %v1919 = vmax.f32 %v1915, %v1889
    %v1920 = vmax.f32 %v1916, %v1894
    %v1921 = vmax.f32 %v1917, %v1899
    %v1922 = vmax.f32 %v1918, %v1904
    %v1923 = vmax.f32 %v1919, %v1909
    %v1924 = vmax.f32 %v1920, %v1921
    %v1925 = vmax.f32 %v1922, %v1923
    %v1926 = vmax.f32 %v1924, %v1925
    %v1927 = vrot.slane %v1926, 4
    %v1928 = vmax.f32 %v1926, %v1927
    %v1929 = vrot.slane %v1928, 2
    %v1930 = vmax.f32 %v1928, %v1929
    %v1931 = vrot.slane %v1930, 1
    %v1932 = vmax.f32 %v1930, %v1931
    %v1933 = vsub.f32 %v1834, %v1932
    %v1934 = vsub.f32 %v1839, %v1932
    %v1935 = vsub.f32 %v1844, %v1932
    %v1936 = vsub.f32 %v1849, %v1932
    %v1937 = vsub.f32 %v1854, %v1932
    %v1938 = vsub.f32 %v1859, %v1932
    %v1939 = vsub.f32 %v1864, %v1932
    %v1940 = vsub.f32 %v1869, %v1932
    %v1941 = vsub.f32 %v1874, %v1932
    %v1942 = vsub.f32 %v1879, %v1932
    %v1943 = vsub.f32 %v1884, %v1932
    %v1944 = vsub.f32 %v1889, %v1932
    %v1945 = vsub.f32 %v1894, %v1932
    %v1946 = vsub.f32 %v1899, %v1932
    %v1947 = vsub.f32 %v1904, %v1932
    %v1948 = vsub.f32 %v1909, %v1932
    %v1949 = vmul.f32 %v1933, 1.442695
    %v1950 = vpow.pop %v1949
    %v1951 = vmul.f32 %v1934, 1.442695
    %v1952 = vpow.pop %v1951
    %v1953 = vmul.f32 %v1935, 1.442695
    %v1954 = vpow.pop %v1953
    %v1955 = vmul.f32 %v1936, 1.442695
    %v1956 = vpow.pop %v1955
    %v1957 = vmul.f32 %v1937, 1.442695
    %v1958 = vpow.pop %v1957
    %v1959 = vmul.f32 %v1938, 1.442695
    %v1960 = vpow.pop %v1959
    %v1961 = vmul.f32 %v1939, 1.442695
    %v1962 = vpow.pop %v1961
    %v1963 = vmul.f32 %v1940, 1.442695
    %v1964 = vpow.pop %v1963
    %v1965 = vmul.f32 %v1941, 1.442695
    %v1966 = vpow.pop %v1965
    %v1967 = vmul.f32 %v1942, 1.442695
    %v1968 = vpow.pop %v1967
    %v1969 = vmul.f32 %v1943, 1.442695
    %v1970 = vpow.pop %v1969
    %v1971 = vmul.f32 %v1944, 1.442695
    %v1972 = vpow.pop %v1971
    %v1973 = vmul.f32 %v1945, 1.442695
    %v1974 = vpow.pop %v1973
    %v1975 = vmul.f32 %v1946, 1.442695
    %v1976 = vpow.pop %v1975
    %v1977 = vmul.f32 %v1947, 1.442695
    %v1978 = vpow.pop %v1977
    %v1979 = vmul.f32 %v1948, 1.442695
    %v1980 = vpow.pop %v1979
    %v1981 = vadd.f32 %v1950, %v1952
    %v1982 = vadd.f32 %v1981, %v1954
    %v1983 = vadd.f32 %v1982, %v1956
    %v1984 = vadd.f32 %v1983, %v1958
    %v1985 = vadd.f32 %v1984, %v1960
    %v1986 = vadd.f32 %v1985, %v1962
    %v1987 = vadd.f32 %v1986, %v1964
    %v1988 = vadd.f32 %v1987, %v1966
    %v1989 = vadd.f32 %v1988, %v1968
    %v1990 = vadd.f32 %v1989, %v1970
    %v1991 = vadd.f32 %v1990, %v1972
    %v1992 = vadd.f32 %v1991, %v1974
    %v1993 = vadd.f32 %v1992, %v1976
    %v1994 = vadd.f32 %v1993, %v1978
    %v1995 = vadd.f32 %v1994, %v1980
    %v1996 = vrot.slane %v1995, 4
    %v1997 = vadd.f32 %v1995, %v1996
    %v1998 = vrot.slane %v1997, 2
    %v1999 = vadd.f32 %v1997, %v1998
    %v2000 = vrot.slane %v1999, 1
    %v2001 = vadd.f32 %v1999, %v2000
    %v2002 = vrcp.pop %v2001
    %v2003 = vmul.f32 %v2001, %v2002
    %v2004 = vsub.f32 2.0, %v2003
    %v2005 = vmul.f32 %v2002, %v2004
    %v2006 = vmul.f32 %v1950, %v2005
    %v2007 = vmul.f32 %v1952, %v2005
    %v2008 = vmul.f32 %v1954, %v2005
    %v2009 = vmul.f32 %v1956, %v2005
    %v2010 = vmul.f32 %v1958, %v2005
    %v2011 = vmul.f32 %v1960, %v2005
    %v2012 = vmul.f32 %v1962, %v2005
    %v2013 = vmul.f32 %v1964, %v2005
    %v2014 = vmul.f32 %v1966, %v2005
    %v2015 = vmul.f32 %v1968, %v2005
    %v2016 = vmul.f32 %v1970, %v2005
    %v2017 = vmul.f32 %v1972, %v2005
    %v2018 = vmul.f32 %v1974, %v2005
    %v2019 = vmul.f32 %v1976, %v2005
    %v2020 = vmul.f32 %v1978, %v2005
    %v2021 = vmul.f32 %v1980, %v2005
    %v2022 = vpack.c.bf16 %v2007, %v2006
    %v2023 = vpack.c.bf16 %v2009, %v2008
    %v2024 = vpack.c.bf16 %v2011, %v2010
    %v2025 = vpack.c.bf16 %v2013, %v2012
    %v2026 = vpack.c.bf16 %v2015, %v2014
    %v2027 = vpack.c.bf16 %v2017, %v2016
    %v2028 = vpack.c.bf16 %v2019, %v2018
    %v2029 = vpack.c.bf16 %v2021, %v2020
    %v2030 = vpack.c.bf16 %v289, %v289
    %v2035 = vunpack.c.l.b16 %v58
    %v2036 = vunpack.c.l.b16 %v59
    %v2037 = vunpack.c.l.b16 %v60
    %v2038 = vunpack.c.l.b16 %v61
    %v2039 = vpack.c.b16 %v2036, %v2035
    %v2040 = vpack.c.b16 %v2038, %v2037
    %v2042 = vsel %vm324, %v2039, 0
    %v2045 = vsel %vm324, %v2040, 0
    %v2048 = vsel %vm653, %v2030, 0
    %2050 = vmatprep.subr.bf16.mxu0 0
    %2051 = vmatpush1.bf16.msra.mxu0 %v2048
    %2052 = vmatprep.subr.bf16.mxu0 0
    %2053 = vmatpush1.bf16.msra.mxu0 0
    %2054 = vmatprep.subr.bf16.mxu0 0
    %2055 = vmatpush1.bf16.msra.mxu0 0
    %2056 = vmatprep.subr.bf16.mxu0 0
    %2057 = vmatpush1.bf16.msra.mxu0 0
    %2058 = vmatprep.subr.bf16.mxu0 0
    %2059 = vmatpush1.bf16.msra.mxu0 0
    %2060 = vmatprep.subr.bf16.mxu0 0
    %2061 = vmatpush1.bf16.msra.mxu0 0
    %2062 = vmatprep.subr.bf16.mxu0 0
    %2063 = vmatpush1.bf16.msra.mxu0 0
    %2064 = vmatprep.subr.bf16.mxu0 0
    %2065 = vmatpush1.bf16.msra.mxu0 0
    %2066 = vmatprep.subr.bf16.mxu0 0
    %2067 = vmatpush1.bf16.msra.mxu0 0
    %2068 = vmatprep.subr.bf16.mxu0 0
    %2069 = vmatpush1.bf16.msra.mxu0 0
    %2070 = vmatprep.subr.bf16.mxu0 0
    %2071 = vmatpush1.bf16.msra.mxu0 0
    %2072 = vmatprep.subr.bf16.mxu0 0
    %2073 = vmatpush1.bf16.msra.mxu0 0
    %2074 = vmatprep.subr.bf16.mxu0 0
    %2075 = vmatpush1.bf16.msra.mxu0 0
    %2076 = vmatprep.subr.bf16.mxu0 0
    %2077 = vmatpush1.bf16.msra.mxu0 0
    %2078 = vmatprep.subr.bf16.mxu0 0
    %2079 = vmatpush1.bf16.msra.mxu0 0
    %2080 = vmatprep.subr.bf16.mxu0 0
    %2081 = vmatpush1.bf16.msra.mxu0 0
    %2082 = vmatprep.mubr.bf16.mxu0 0
    %2083 = vmatmul.mubr.bf16.gmra.mrb[0].mxu0 %v2042
    %v2084 = vpop.f32.mrb[0].mxu0
    %v2085 = vadd.f32 0.0, %v2084
    %v2086 = vpop.f32.mrb[0].mxu0
    %v2087 = vpop.f32.mrb[0].mxu0
    %v2088 = vadd.f32 0.0, %v2087
    %v2089 = vpop.f32.mrb[0].mxu0
    %2090 = vmatprep.mubr.bf16.mxu0 0
    %2091 = vmatmul.mubr.bf16.gmra.mrb[0].mxu0 %v2045
    %v2092 = vpop.f32.mrb[0].mxu0
    %v2093 = vadd.f32 0.0, %v2092
    %v2094 = vpop.f32.mrb[0].mxu0
    %v2095 = vpop.f32.mrb[0].mxu0
    %v2096 = vadd.f32 0.0, %v2095
    %v2097 = vpop.f32.mrb[0].mxu0
    %2098 = vdwg.mxu0
    %v2099 = vpack.c.bf16 %v2088, %v2085
    %v2100 = vpack.c.bf16 %v2096, %v2093
    %2101 = vmatprep.subr.bf16.mxu0 0
    %2102 = vmatpush1.bf16.msra.mxu0 %v2022
    %2103 = vmatprep.subr.bf16.mxu0 0
    %2104 = vmatpush1.bf16.msra.mxu0 %v2023
    %2105 = vmatprep.subr.bf16.mxu0 0
    %2106 = vmatpush1.bf16.msra.mxu0 %v2024
    %2107 = vmatprep.subr.bf16.mxu0 0
    %2108 = vmatpush1.bf16.msra.mxu0 %v2025
    %2109 = vmatprep.subr.bf16.mxu0 0
    %2110 = vmatpush1.bf16.msra.mxu0 %v2026
    %2111 = vmatprep.subr.bf16.mxu0 0
    %2112 = vmatpush1.bf16.msra.mxu0 %v2027
    %2113 = vmatprep.subr.bf16.mxu0 0
    %2114 = vmatpush1.bf16.msra.mxu0 %v2028
    %2115 = vmatprep.subr.bf16.mxu0 0
    %2116 = vmatpush1.bf16.msra.mxu0 %v2029
    %2117 = vmatprep.subr.bf16.mxu0 0
    %2118 = vmatpush1.bf16.msra.mxu0 0
    %2119 = vmatprep.subr.bf16.mxu0 0
    %2120 = vmatpush1.bf16.msra.mxu0 0
    %2121 = vmatprep.subr.bf16.mxu0 0
    %2122 = vmatpush1.bf16.msra.mxu0 0
    %2123 = vmatprep.subr.bf16.mxu0 0
    %2124 = vmatpush1.bf16.msra.mxu0 0
    %2125 = vmatprep.subr.bf16.mxu0 0
    %2126 = vmatpush1.bf16.msra.mxu0 0
    %2127 = vmatprep.subr.bf16.mxu0 0
    %2128 = vmatpush1.bf16.msra.mxu0 0
    %2129 = vmatprep.subr.bf16.mxu0 0
    %2130 = vmatpush1.bf16.msra.mxu0 0
    %2131 = vmatprep.subr.bf16.mxu0 0
    %2132 = vmatpush1.bf16.msra.mxu0 0
    %2133 = vmatprep.mubr.bf16.mxu0 0
    %2134 = vmatmul.mubr.bf16.gmra.mrb[0].mxu0 %v2099
    %v2135 = vpop.f32.mrb[0].mxu0
    %v2136 = vadd.f32 0.0, %v2135
    %v2137 = vpop.f32.mrb[0].mxu0
    %v2138 = vpop.f32.mrb[0].mxu0
    %v2139 = vadd.f32 0.0, %v2138
    %v2140 = vpop.f32.mrb[0].mxu0
    %2141 = vmatprep.mubr.bf16.mxu0 0
    %2142 = vmatmul.mubr.bf16.gmra.mrb[0].mxu0 %v2100
    %v2143 = vpop.f32.mrb[0].mxu0
    %v2144 = vadd.f32 0.0, %v2143
    %v2145 = vpop.f32.mrb[0].mxu0
    %v2146 = vpop.f32.mrb[0].mxu0
    %v2147 = vadd.f32 0.0, %v2146
    %v2148 = vpop.f32.mrb[0].mxu0
    %2149 = vdwg.mxu0
    %v2150 = vadd.f32 %v1683, %v2136
    %v2151 = vadd.f32 %v1684, %v2139
    %v2152 = vadd.f32 %v1685, %v2144
    %v2153 = vadd.f32 %v1686, %v2147
    %2155 = vset.pattern.permute.xlu0 0
    %2156 = vperm.xlu0 %2155, %v62
    %v2157 = vpop.permute.xlu0 %2156
    %2160 = vset.pattern.permute.xlu0 0
    %2161 = vperm.xlu0 %2160, %v63
    %v2162 = vpop.permute.xlu0 %2161
    %2165 = vset.pattern.permute.xlu0 0
    %2166 = vperm.xlu0 %2165, %v64
    %v2167 = vpop.permute.xlu0 %2166
    %2170 = vset.pattern.permute.xlu0 0
    %2171 = vperm.xlu0 %2170, %v65
    %v2172 = vpop.permute.xlu0 %2171
    %v2174 = vadd.f32 %v2150, %v2157
    %v2175 = vadd.f32 %v2151, %v2162
    %v2176 = vadd.f32 %v2152, %v2167
    %v2177 = vadd.f32 %v2153, %v2172
    %2178 = vst [vmem:[#allocation2] sm:$0xff] %v2174
    %2179 = vst [vmem:[#allocation2 + $0x8] sm:$0xff] %v2175
    %2180 = vst [vmem:[#allocation2 + $0x10] sm:$0xff] %v2176
    %2181 = vst [vmem:[#allocation2 + $0x18] sm:$0xff] %v2177
    %s2182 = scalar_lea.vmem %s0, 32
    %v2183 = vld [vmem:[%s2182] sm:$0xff]
    %v2184 = vld [vmem:[%s2182 + $0x8] sm:$0xff]
    %v2185 = vld [vmem:[%s2182 + $0x10] sm:$0xff]
    %v2186 = vld [vmem:[%s2182 + $0x18] sm:$0xff]
    %2187 = vmatprep.subr.mxu0 0.0
    %2188 = vmatpush1.msra.mxu0 %v2183
    %2189 = vmatprep.subr.mxu0 0.0
    %2190 = vmatpush1.msra.mxu0 %v2184
    %2191 = vmatprep.subr.mxu0 0.0
    %2192 = vmatpush1.msra.mxu0 %v2185
    %2193 = vmatprep.subr.mxu0 0.0
    %2194 = vmatpush1.msra.mxu0 %v2186
    %2195 = vmatprep.subr.mxu0 0.0
    %2196 = vmatpush1.msra.mxu0 0.0
    %2197 = vmatprep.subr.mxu0 0.0
    %2198 = vmatpush1.msra.mxu0 0.0
    %2199 = vmatprep.subr.mxu0 0.0
    %2200 = vmatpush1.msra.mxu0 0.0
    %2201 = vmatprep.subr.mxu0 0.0
    %2202 = vmatpush1.msra.mxu0 0.0
    %2203 = vmatprep.subr.mxu0 0.0
    %2204 = vmatpush1.msra.mxu0 0.0
    %2205 = vmatprep.subr.mxu0 0.0
    %2206 = vmatpush1.msra.mxu0 0.0
    %2207 = vmatprep.subr.mxu0 0.0
    %2208 = vmatpush1.msra.mxu0 0.0
    %2209 = vmatprep.subr.mxu0 0.0
    %2210 = vmatpush1.msra.mxu0 0.0
    %2211 = vmatprep.subr.mxu0 0.0
    %2212 = vmatpush1.msra.mxu0 0.0
    %2213 = vmatprep.subr.mxu0 0.0
    %2214 = vmatpush1.msra.mxu0 0.0
    %2215 = vmatprep.subr.mxu0 0.0
    %2216 = vmatpush1.msra.mxu0 0.0
    %2217 = vmatprep.subr.mxu0 0.0
    %2218 = vmatpush1.msra.mxu0 0.0
    %2219 = vmatprep.subr.mxu0 0.0
    %2220 = vmatpush1.msra.mxu0 0.0
    %2221 = vmatprep.subr.mxu0 0.0
    %2222 = vmatpush1.msra.mxu0 0.0
    %2223 = vmatprep.subr.mxu0 0.0
    %2224 = vmatpush1.msra.mxu0 0.0
    %2225 = vmatprep.subr.mxu0 0.0
    %2226 = vmatpush1.msra.mxu0 0.0
    %2227 = vmatprep.subr.mxu0 0.0
    %2228 = vmatpush1.msra.mxu0 0.0
    %2229 = vmatprep.subr.mxu0 0.0
    %2230 = vmatpush1.msra.mxu0 0.0
    %2231 = vmatprep.subr.mxu0 0.0
    %2232 = vmatpush1.msra.mxu0 0.0
    %2233 = vmatprep.subr.mxu0 0.0
    %2234 = vmatpush1.msra.mxu0 0.0
    %2235 = vmatprep.subr.mxu0 0.0
    %2236 = vmatpush1.msra.mxu0 0.0
    %2237 = vmatprep.subr.mxu0 0.0
    %2238 = vmatpush1.msra.mxu0 0.0
    %2239 = vmatprep.subr.mxu0 0.0
    %2240 = vmatpush1.msra.mxu0 0.0
    %2241 = vmatprep.subr.mxu0 0.0
    %2242 = vmatpush1.msra.mxu0 0.0
    %2243 = vmatprep.subr.mxu0 0.0
    %2244 = vmatpush1.msra.mxu0 0.0
    %2245 = vmatprep.subr.mxu0 0.0
    %2246 = vmatpush1.msra.mxu0 0.0
    %2247 = vmatprep.subr.mxu0 0.0
    %2248 = vmatpush1.msra.mxu0 0.0
    %2249 = vmatprep.subr.mxu0 0.0
    %2250 = vmatpush1.msra.mxu0 0.0
    %2251 = vmatprep.mubr.f32.mxu0 0.0
    %2252 = vmatmul.mubr.f32.gmra.mrb[0].mxu0 %v132
    %v2253 = vpop.f32.mrb[0].mxu0
    %v2254 = vadd.f32 %v73, %v2253
    %v2255 = vpop.f32.mrb[0].mxu0
    %2256 = vmatprep.mubr.f32.mxu0 0.0
    %2257 = vmatmul.mubr.f32.gmra.mrb[0].mxu0 %v135
    %v2258 = vpop.f32.mrb[0].mxu0
    %v2259 = vadd.f32 %v78, %v2258
    %v2260 = vpop.f32.mrb[0].mxu0
    %2261 = vmatprep.mubr.f32.mxu0 0.0
    %2262 = vmatmul.mubr.f32.gmra.mrb[0].mxu0 %v138
    %v2263 = vpop.f32.mrb[0].mxu0
    %v2264 = vadd.f32 %v83, %v2263
    %v2265 = vpop.f32.mrb[0].mxu0
    %2266 = vmatprep.mubr.f32.mxu0 0.0
    %2267 = vmatmul.mubr.f32.gmra.mrb[0].mxu0 %v141
    %v2268 = vpop.f32.mrb[0].mxu0
    %v2269 = vadd.f32 %v88, %v2268
    %v2270 = vpop.f32.mrb[0].mxu0
    %2271 = vmatprep.mubr.f32.mxu0 0.0
    %2272 = vmatmul.mubr.f32.gmra.mrb[0].mxu0 %v144
    %v2273 = vpop.f32.mrb[0].mxu0
    %v2274 = vadd.f32 %v93, %v2273
    %v2275 = vpop.f32.mrb[0].mxu0
    %2276 = vmatprep.mubr.f32.mxu0 0.0
    %2277 = vmatmul.mubr.f32.gmra.mrb[0].mxu0 %v147
    %v2278 = vpop.f32.mrb[0].mxu0
    %v2279 = vadd.f32 %v98, %v2278
    %v2280 = vpop.f32.mrb[0].mxu0
    %2281 = vmatprep.mubr.f32.mxu0 0.0
    %2282 = vmatmul.mubr.f32.gmra.mrb[0].mxu0 %v150
    %v2283 = vpop.f32.mrb[0].mxu0
    %v2284 = vadd.f32 %v103, %v2283
    %v2285 = vpop.f32.mrb[0].mxu0
    %2286 = vmatprep.mubr.f32.mxu0 0.0
    %2287 = vmatmul.mubr.f32.gmra.mrb[0].mxu0 %v153
    %v2288 = vpop.f32.mrb[0].mxu0
    %v2289 = vadd.f32 %v108, %v2288
    %v2290 = vpop.f32.mrb[0].mxu0
    %2291 = vmatprep.mubr.f32.mxu0 0.0
    %2292 = vmatmul.mubr.f32.gmra.mrb[0].mxu0 %v156
    %v2293 = vpop.f32.mrb[0].mxu0
    %v2294 = vadd.f32 %v113, %v2293
    %v2295 = vpop.f32.mrb[0].mxu0
    %2296 = vmatprep.mubr.f32.mxu0 0.0
    %2297 = vmatmul.mubr.f32.gmra.mrb[0].mxu0 %v159
    %v2298 = vpop.f32.mrb[0].mxu0
    %v2299 = vadd.f32 %v118, %v2298
    %v2300 = vpop.f32.mrb[0].mxu0
    %2301 = vmatprep.mubr.f32.mxu0 0.0
    %2302 = vmatmul.mubr.f32.gmra.mrb[0].mxu0 %v162
    %v2303 = vpop.f32.mrb[0].mxu0
    %v2304 = vadd.f32 %v123, %v2303
    %v2305 = vpop.f32.mrb[0].mxu0
    %2306 = vmatprep.mubr.f32.mxu0 0.0
    %2307 = vmatmul.mubr.f32.gmra.mrb[0].mxu0 %v165
    %v2308 = vpop.f32.mrb[0].mxu0
    %v2309 = vadd.f32 %v128, %v2308
    %v2310 = vpop.f32.mrb[0].mxu0
    %2311 = vdwg.mxu0
    %2312 = vxpose.xlu0.b32.start [1/16] %v2274, 128
    %2313 = vxpose.xlu0.b32.cont [2/16] 0.0, 128
    %2314 = vxpose.xlu0.b32.cont [3/16] 0.0, 128
    %2315 = vxpose.xlu0.b32.cont [4/16] 0.0, 128
    %2316 = vxpose.xlu0.b32.cont [5/16] 0.0, 128
    %2317 = vxpose.xlu0.b32.cont [6/16] 0.0, 128
    %2318 = vxpose.xlu0.b32.cont [7/16] 0.0, 128
    %2319 = vxpose.xlu0.b32.cont [8/16] 0.0, 128
    %2320 = vxpose.xlu0.b32.cont [9/16] 0.0, 128
    %2321 = vxpose.xlu0.b32.cont [10/16] 0.0, 128
    %2322 = vxpose.xlu0.b32.cont [11/16] 0.0, 128
    %2323 = vxpose.xlu0.b32.cont [12/16] 0.0, 128
    %2324 = vxpose.xlu0.b32.cont [13/16] 0.0, 128
    %2325 = vxpose.xlu0.b32.cont [14/16] 0.0, 128
    %2326 = vxpose.xlu0.b32.cont [15/16] 0.0, 128
    %2327 = vxpose.xlu0.b32.end [16/16] 0.0, 128
    %v2328 = vpop.trf.xlu0
    %v2329 = vpop.trf.xlu0
    %v2330 = vpop.trf.xlu0
    %v2331 = vpop.trf.xlu0
    %v2332 = vpop.trf.xlu0
    %v2333 = vpop.trf.xlu0
    %v2334 = vpop.trf.xlu0
    %v2335 = vpop.trf.xlu0
    %v2336 = vpop.trf.xlu0
    %v2337 = vpop.trf.xlu0
    %v2338 = vpop.trf.xlu0
    %v2339 = vpop.trf.xlu0
    %v2340 = vpop.trf.xlu0
    %v2341 = vpop.trf.xlu0
    %v2342 = vpop.trf.xlu0
    %v2343 = vpop.trf.xlu0
    %v2345 = vsel %vm324, %v2328, 0
    %v2348 = vsel %vm324, %v2329, 0
    %v2351 = vsel %vm324, %v2330, 0
    %v2354 = vsel %vm324, %v2331, 0
    %v2357 = vsel %vm324, %v2332, 0
    %v2360 = vsel %vm324, %v2333, 0
    %v2363 = vsel %vm324, %v2334, 0
    %v2366 = vsel %vm324, %v2335, 0
    %v2369 = vsel %vm324, %v2336, 0
    %v2372 = vsel %vm324, %v2337, 0
    %v2375 = vsel %vm324, %v2338, 0
    %v2378 = vsel %vm324, %v2339, 0
    %v2381 = vsel %vm324, %v2340, 0
    %v2384 = vsel %vm324, %v2341, 0
    %v2387 = vsel %vm324, %v2342, 0
    %v2390 = vsel %vm324, %v2343, 0
    %2392 = vmatprep.subr.mxu0 0.0
    %2393 = vmatpush1.msra.mxu0 %v2254
    %2394 = vmatprep.subr.mxu0 0.0
    %2395 = vmatpush1.msra.mxu0 0.0
    %2396 = vmatprep.subr.mxu0 0.0
    %2397 = vmatpush1.msra.mxu0 0.0
    %2398 = vmatprep.subr.mxu0 0.0
    %2399 = vmatpush1.msra.mxu0 0.0
    %2400 = vmatprep.subr.mxu0 0.0
    %2401 = vmatpush1.msra.mxu0 0.0
    %2402 = vmatprep.subr.mxu0 0.0
    %2403 = vmatpush1.msra.mxu0 0.0
    %2404 = vmatprep.subr.mxu0 0.0
    %2405 = vmatpush1.msra.mxu0 0.0
    %2406 = vmatprep.subr.mxu0 0.0
    %2407 = vmatpush1.msra.mxu0 0.0
    %2408 = vmatprep.subr.mxu0 0.0
    %2409 = vmatpush1.msra.mxu0 0.0
    %2410 = vmatprep.subr.mxu0 0.0
    %2411 = vmatpush1.msra.mxu0 0.0
    %2412 = vmatprep.subr.mxu0 0.0
    %2413 = vmatpush1.msra.mxu0 0.0
    %2414 = vmatprep.subr.mxu0 0.0
    %2415 = vmatpush1.msra.mxu0 0.0
    %2416 = vmatprep.subr.mxu0 0.0
    %2417 = vmatpush1.msra.mxu0 0.0
    %2418 = vmatprep.subr.mxu0 0.0
    %2419 = vmatpush1.msra.mxu0 0.0
    %2420 = vmatprep.subr.mxu0 0.0
    %2421 = vmatpush1.msra.mxu0 0.0
    %2422 = vmatprep.subr.mxu0 0.0
    %2423 = vmatpush1.msra.mxu0 0.0
    %2424 = vmatprep.subr.mxu0 0.0
    %2425 = vmatpush1.msra.mxu0 0.0
    %2426 = vmatprep.subr.mxu0 0.0
    %2427 = vmatpush1.msra.mxu0 0.0
    %2428 = vmatprep.subr.mxu0 0.0
    %2429 = vmatpush1.msra.mxu0 0.0
    %2430 = vmatprep.subr.mxu0 0.0
    %2431 = vmatpush1.msra.mxu0 0.0
    %2432 = vmatprep.subr.mxu0 0.0
    %2433 = vmatpush1.msra.mxu0 0.0
    %2434 = vmatprep.subr.mxu0 0.0
    %2435 = vmatpush1.msra.mxu0 0.0
    %2436 = vmatprep.subr.mxu0 0.0
    %2437 = vmatpush1.msra.mxu0 0.0
    %2438 = vmatprep.subr.mxu0 0.0
    %2439 = vmatpush1.msra.mxu0 0.0
    %2440 = vmatprep.subr.mxu0 0.0
    %2441 = vmatpush1.msra.mxu0 0.0
    %2442 = vmatprep.subr.mxu0 0.0
    %2443 = vmatpush1.msra.mxu0 0.0
    %2444 = vmatprep.subr.mxu0 0.0
    %2445 = vmatpush1.msra.mxu0 0.0
    %2446 = vmatprep.subr.mxu0 0.0
    %2447 = vmatpush1.msra.mxu0 0.0
    %2448 = vmatprep.subr.mxu0 0.0
    %2449 = vmatpush1.msra.mxu0 0.0
    %2450 = vmatprep.subr.mxu0 0.0
    %2451 = vmatpush1.msra.mxu0 0.0
    %2452 = vmatprep.subr.mxu0 0.0
    %2453 = vmatpush1.msra.mxu0 0.0
    %2454 = vmatprep.subr.mxu0 0.0
    %2455 = vmatpush1.msra.mxu0 0.0
    %2456 = vmatprep.mubr.f32.mxu0 0.0
    %2457 = vmatmul.mubr.f32.gmra.mrb[0].mxu0 %v2345
    %v2458 = vpop.f32.mrb[0].mxu0
    %v2459 = vadd.f32 0.0, %v2458
    %v2460 = vpop.f32.mrb[0].mxu0
    %2461 = vmatprep.mubr.f32.mxu0 0.0
    %2462 = vmatmul.mubr.f32.gmra.mrb[0].mxu0 %v2348
    %v2463 = vpop.f32.mrb[0].mxu0
    %v2464 = vadd.f32 0.0, %v2463
    %v2465 = vpop.f32.mrb[0].mxu0
    %2466 = vmatprep.mubr.f32.mxu0 0.0
    %2467 = vmatmul.mubr.f32.gmra.mrb[0].mxu0 %v2351
    %v2468 = vpop.f32.mrb[0].mxu0
    %v2469 = vadd.f32 0.0, %v2468
    %v2470 = vpop.f32.mrb[0].mxu0
    %2471 = vmatprep.mubr.f32.mxu0 0.0
    %2472 = vmatmul.mubr.f32.gmra.mrb[0].mxu0 %v2354
    %v2473 = vpop.f32.mrb[0].mxu0
    %v2474 = vadd.f32 0.0, %v2473
    %v2475 = vpop.f32.mrb[0].mxu0
    %2476 = vmatprep.mubr.f32.mxu0 0.0
    %2477 = vmatmul.mubr.f32.gmra.mrb[0].mxu0 %v2357
    %v2478 = vpop.f32.mrb[0].mxu0
    %v2479 = vadd.f32 0.0, %v2478
    %v2480 = vpop.f32.mrb[0].mxu0
    %2481 = vmatprep.mubr.f32.mxu0 0.0
    %2482 = vmatmul.mubr.f32.gmra.mrb[0].mxu0 %v2360
    %v2483 = vpop.f32.mrb[0].mxu0
    %v2484 = vadd.f32 0.0, %v2483
    %v2485 = vpop.f32.mrb[0].mxu0
    %2486 = vmatprep.mubr.f32.mxu0 0.0
    %2487 = vmatmul.mubr.f32.gmra.mrb[0].mxu0 %v2363
    %v2488 = vpop.f32.mrb[0].mxu0
    %v2489 = vadd.f32 0.0, %v2488
    %v2490 = vpop.f32.mrb[0].mxu0
    %2491 = vmatprep.mubr.f32.mxu0 0.0
    %2492 = vmatmul.mubr.f32.gmra.mrb[0].mxu0 %v2366
    %v2493 = vpop.f32.mrb[0].mxu0
    %v2494 = vadd.f32 0.0, %v2493
    %v2495 = vpop.f32.mrb[0].mxu0
    %2496 = vmatprep.mubr.f32.mxu0 0.0
    %2497 = vmatmul.mubr.f32.gmra.mrb[0].mxu0 %v2369
    %v2498 = vpop.f32.mrb[0].mxu0
    %v2499 = vadd.f32 0.0, %v2498
    %v2500 = vpop.f32.mrb[0].mxu0
    %2501 = vmatprep.mubr.f32.mxu0 0.0
    %2502 = vmatmul.mubr.f32.gmra.mrb[0].mxu0 %v2372
    %v2503 = vpop.f32.mrb[0].mxu0
    %v2504 = vadd.f32 0.0, %v2503
    %v2505 = vpop.f32.mrb[0].mxu0
    %2506 = vmatprep.mubr.f32.mxu0 0.0
    %2507 = vmatmul.mubr.f32.gmra.mrb[0].mxu0 %v2375
    %v2508 = vpop.f32.mrb[0].mxu0
    %v2509 = vadd.f32 0.0, %v2508
    %v2510 = vpop.f32.mrb[0].mxu0
    %2511 = vmatprep.mubr.f32.mxu0 0.0
    %2512 = vmatmul.mubr.f32.gmra.mrb[0].mxu0 %v2378
    %v2513 = vpop.f32.mrb[0].mxu0
    %v2514 = vadd.f32 0.0, %v2513
    %v2515 = vpop.f32.mrb[0].mxu0
    %2516 = vmatprep.mubr.f32.mxu0 0.0
    %2517 = vmatmul.mubr.f32.gmra.mrb[0].mxu0 %v2381
    %v2518 = vpop.f32.mrb[0].mxu0
    %v2519 = vadd.f32 0.0, %v2518
    %v2520 = vpop.f32.mrb[0].mxu0
    %2521 = vmatprep.mubr.f32.mxu0 0.0
    %2522 = vmatmul.mubr.f32.gmra.mrb[0].mxu0 %v2384
    %v2523 = vpop.f32.mrb[0].mxu0
    %v2524 = vadd.f32 0.0, %v2523
    %v2525 = vpop.f32.mrb[0].mxu0
    %2526 = vmatprep.mubr.f32.mxu0 0.0
    %2527 = vmatmul.mubr.f32.gmra.mrb[0].mxu0 %v2387
    %v2528 = vpop.f32.mrb[0].mxu0
    %v2529 = vadd.f32 0.0, %v2528
    %v2530 = vpop.f32.mrb[0].mxu0
    %2531 = vmatprep.mubr.f32.mxu0 0.0
    %2532 = vmatmul.mubr.f32.gmra.mrb[0].mxu0 %v2390
    %v2533 = vpop.f32.mrb[0].mxu0
    %v2534 = vadd.f32 0.0, %v2533
    %v2535 = vpop.f32.mrb[0].mxu0
    %2536 = vdwg.mxu0
    %v2537 = vmax.f32 %v2459, %v2479
    %v2538 = vmax.f32 %v2464, %v2484
    %v2539 = vmax.f32 %v2469, %v2489
    %v2540 = vmax.f32 %v2474, %v2494
    %v2541 = vmax.f32 %v2537, %v2499
    %v2542 = vmax.f32 %v2538, %v2504
    %v2543 = vmax.f32 %v2539, %v2509
    %v2544 = vmax.f32 %v2540, %v2514
    %v2545 = vmax.f32 %v2541, %v2519
    %v2546 = vmax.f32 %v2542, %v2524
    %v2547 = vmax.f32 %v2543, %v2529
    %v2548 = vmax.f32 %v2544, %v2534
    %v2549 = vmax.f32 %v2545, %v2546
    %v2550 = vmax.f32 %v2547, %v2548
    %v2551 = vmax.f32 %v2549, %v2550
    %v2552 = vrot.slane %v2551, 4
    %v2553 = vmax.f32 %v2551, %v2552
    %v2554 = vrot.slane %v2553, 2
    %v2555 = vmax.f32 %v2553, %v2554
    %v2556 = vrot.slane %v2555, 1
    %v2557 = vmax.f32 %v2555, %v2556
    %v2558 = vsub.f32 %v2459, %v2557
    %v2559 = vsub.f32 %v2464, %v2557
    %v2560 = vsub.f32 %v2469, %v2557
    %v2561 = vsub.f32 %v2474, %v2557
    %v2562 = vsub.f32 %v2479, %v2557
    %v2563 = vsub.f32 %v2484, %v2557
    %v2564 = vsub.f32 %v2489, %v2557
    %v2565 = vsub.f32 %v2494, %v2557
    %v2566 = vsub.f32 %v2499, %v2557
    %v2567 = vsub.f32 %v2504, %v2557
    %v2568 = vsub.f32 %v2509, %v2557
    %v2569 = vsub.f32 %v2514, %v2557
    %v2570 = vsub.f32 %v2519, %v2557
    %v2571 = vsub.f32 %v2524, %v2557
    %v2572 = vsub.f32 %v2529, %v2557
    %v2573 = vsub.f32 %v2534, %v2557
    %v2574 = vmul.f32 %v2558, 1.442695
    %v2575 = vpow.pop %v2574
    %v2576 = vmul.f32 %v2559, 1.442695
    %v2577 = vpow.pop %v2576
    %v2578 = vmul.f32 %v2560, 1.442695
    %v2579 = vpow.pop %v2578
    %v2580 = vmul.f32 %v2561, 1.442695
    %v2581 = vpow.pop %v2580
    %v2582 = vmul.f32 %v2562, 1.442695
    %v2583 = vpow.pop %v2582
    %v2584 = vmul.f32 %v2563, 1.442695
    %v2585 = vpow.pop %v2584
    %v2586 = vmul.f32 %v2564, 1.442695
    %v2587 = vpow.pop %v2586
    %v2588 = vmul.f32 %v2565, 1.442695
    %v2589 = vpow.pop %v2588
    %v2590 = vmul.f32 %v2566, 1.442695
    %v2591 = vpow.pop %v2590
    %v2592 = vmul.f32 %v2567, 1.442695
    %v2593 = vpow.pop %v2592
    %v2594 = vmul.f32 %v2568, 1.442695
    %v2595 = vpow.pop %v2594
    %v2596 = vmul.f32 %v2569, 1.442695
    %v2597 = vpow.pop %v2596
    %v2598 = vmul.f32 %v2570, 1.442695
    %v2599 = vpow.pop %v2598
    %v2600 = vmul.f32 %v2571, 1.442695
    %v2601 = vpow.pop %v2600
    %v2602 = vmul.f32 %v2572, 1.442695
    %v2603 = vpow.pop %v2602
    %v2604 = vmul.f32 %v2573, 1.442695
    %v2605 = vpow.pop %v2604
    %v2606 = vadd.f32 %v2575, %v2577
    %v2607 = vadd.f32 %v2606, %v2579
    %v2608 = vadd.f32 %v2607, %v2581
    %v2609 = vadd.f32 %v2608, %v2583
    %v2610 = vadd.f32 %v2609, %v2585
    %v2611 = vadd.f32 %v2610, %v2587
    %v2612 = vadd.f32 %v2611, %v2589
    %v2613 = vadd.f32 %v2612, %v2591
    %v2614 = vadd.f32 %v2613, %v2593
    %v2615 = vadd.f32 %v2614, %v2595
    %v2616 = vadd.f32 %v2615, %v2597
    %v2617 = vadd.f32 %v2616, %v2599
    %v2618 = vadd.f32 %v2617, %v2601
    %v2619 = vadd.f32 %v2618, %v2603
    %v2620 = vadd.f32 %v2619, %v2605
    %v2621 = vrot.slane %v2620, 4
    %v2622 = vadd.f32 %v2620, %v2621
    %v2623 = vrot.slane %v2622, 2
    %v2624 = vadd.f32 %v2622, %v2623
    %v2625 = vrot.slane %v2624, 1
    %v2626 = vadd.f32 %v2624, %v2625
    %v2627 = vrcp.pop %v2626
    %v2628 = vmul.f32 %v2626, %v2627
    %v2629 = vsub.f32 2.0, %v2628
    %v2630 = vmul.f32 %v2627, %v2629
    %v2631 = vmul.f32 %v2575, %v2630
    %v2632 = vmul.f32 %v2577, %v2630
    %v2633 = vmul.f32 %v2579, %v2630
    %v2634 = vmul.f32 %v2581, %v2630
    %v2635 = vmul.f32 %v2583, %v2630
    %v2636 = vmul.f32 %v2585, %v2630
    %v2637 = vmul.f32 %v2587, %v2630
    %v2638 = vmul.f32 %v2589, %v2630
    %v2639 = vmul.f32 %v2591, %v2630
    %v2640 = vmul.f32 %v2593, %v2630
    %v2641 = vmul.f32 %v2595, %v2630
    %v2642 = vmul.f32 %v2597, %v2630
    %v2643 = vmul.f32 %v2599, %v2630
    %v2644 = vmul.f32 %v2601, %v2630
    %v2645 = vmul.f32 %v2603, %v2630
    %v2646 = vmul.f32 %v2605, %v2630
    %v2647 = vpack.c.bf16 %v2632, %v2631
    %v2648 = vpack.c.bf16 %v2634, %v2633
    %v2649 = vpack.c.bf16 %v2636, %v2635
    %v2650 = vpack.c.bf16 %v2638, %v2637
    %v2651 = vpack.c.bf16 %v2640, %v2639
    %v2652 = vpack.c.bf16 %v2642, %v2641
    %v2653 = vpack.c.bf16 %v2644, %v2643
    %v2654 = vpack.c.bf16 %v2646, %v2645
    %v2655 = vpack.c.bf16 %v2294, %v2294
    %v2657 = vsel %vm653, %v2655, 0
    %2659 = vmatprep.subr.bf16.mxu0 0
    %2660 = vmatpush1.bf16.msra.mxu0 %v2657
    %2661 = vmatprep.subr.bf16.mxu0 0
    %2662 = vmatpush1.bf16.msra.mxu0 0
    %2663 = vmatprep.subr.bf16.mxu0 0
    %2664 = vmatpush1.bf16.msra.mxu0 0
    %2665 = vmatprep.subr.bf16.mxu0 0
    %2666 = vmatpush1.bf16.msra.mxu0 0
    %2667 = vmatprep.subr.bf16.mxu0 0
    %2668 = vmatpush1.bf16.msra.mxu0 0
    %2669 = vmatprep.subr.bf16.mxu0 0
    %2670 = vmatpush1.bf16.msra.mxu0 0
    %2671 = vmatprep.subr.bf16.mxu0 0
    %2672 = vmatpush1.bf16.msra.mxu0 0
    %2673 = vmatprep.subr.bf16.mxu0 0
    %2674 = vmatpush1.bf16.msra.mxu0 0
    %2675 = vmatprep.subr.bf16.mxu0 0
    %2676 = vmatpush1.bf16.msra.mxu0 0
    %2677 = vmatprep.subr.bf16.mxu0 0
    %2678 = vmatpush1.bf16.msra.mxu0 0
    %2679 = vmatprep.subr.bf16.mxu0 0
    %2680 = vmatpush1.bf16.msra.mxu0 0
    %2681 = vmatprep.subr.bf16.mxu0 0
    %2682 = vmatpush1.bf16.msra.mxu0 0
    %2683 = vmatprep.subr.bf16.mxu0 0
    %2684 = vmatpush1.bf16.msra.mxu0 0
    %2685 = vmatprep.subr.bf16.mxu0 0
    %2686 = vmatpush1.bf16.msra.mxu0 0
    %2687 = vmatprep.subr.bf16.mxu0 0
    %2688 = vmatpush1.bf16.msra.mxu0 0
    %2689 = vmatprep.subr.bf16.mxu0 0
    %2690 = vmatpush1.bf16.msra.mxu0 0
    %2691 = vmatprep.mubr.bf16.mxu0 0
    %2692 = vmatmul.mubr.bf16.gmra.mrb[0].mxu0 %v648
    %v2693 = vpop.f32.mrb[0].mxu0
    %v2694 = vadd.f32 0.0, %v2693
    %v2695 = vpop.f32.mrb[0].mxu0
    %v2696 = vpop.f32.mrb[0].mxu0
    %v2697 = vadd.f32 0.0, %v2696
    %v2698 = vpop.f32.mrb[0].mxu0
    %2699 = vmatprep.mubr.bf16.mxu0 0
    %2700 = vmatmul.mubr.bf16.gmra.mrb[0].mxu0 %v651
    %v2701 = vpop.f32.mrb[0].mxu0
    %v2702 = vadd.f32 0.0, %v2701
    %v2703 = vpop.f32.mrb[0].mxu0
    %v2704 = vpop.f32.mrb[0].mxu0
    %v2705 = vadd.f32 0.0, %v2704
    %v2706 = vpop.f32.mrb[0].mxu0
    %2707 = vdwg.mxu0
    %v2708 = vpack.c.bf16 %v2697, %v2694
    %v2709 = vpack.c.bf16 %v2705, %v2702
    %2710 = vxpose.xlu0.b32.start [1/16] %v2279, 128
    %2711 = vxpose.xlu0.b32.cont [2/16] 0.0, 128
    %2712 = vxpose.xlu0.b32.cont [3/16] 0.0, 128
    %2713 = vxpose.xlu0.b32.cont [4/16] 0.0, 128
    %2714 = vxpose.xlu0.b32.cont [5/16] 0.0, 128
    %2715 = vxpose.xlu0.b32.cont [6/16] 0.0, 128
    %2716 = vxpose.xlu0.b32.cont [7/16] 0.0, 128
    %2717 = vxpose.xlu0.b32.cont [8/16] 0.0, 128
    %2718 = vxpose.xlu0.b32.cont [9/16] 0.0, 128
    %2719 = vxpose.xlu0.b32.cont [10/16] 0.0, 128
    %2720 = vxpose.xlu0.b32.cont [11/16] 0.0, 128
    %2721 = vxpose.xlu0.b32.cont [12/16] 0.0, 128
    %2722 = vxpose.xlu0.b32.cont [13/16] 0.0, 128
    %2723 = vxpose.xlu0.b32.cont [14/16] 0.0, 128
    %2724 = vxpose.xlu0.b32.cont [15/16] 0.0, 128
    %2725 = vxpose.xlu0.b32.end [16/16] 0.0, 128
    %v2726 = vpop.trf.xlu0
    %v2727 = vpop.trf.xlu0
    %v2728 = vpop.trf.xlu0
    %v2729 = vpop.trf.xlu0
    %v2730 = vpop.trf.xlu0
    %v2731 = vpop.trf.xlu0
    %v2732 = vpop.trf.xlu0
    %v2733 = vpop.trf.xlu0
    %v2734 = vpop.trf.xlu0
    %v2735 = vpop.trf.xlu0
    %v2736 = vpop.trf.xlu0
    %v2737 = vpop.trf.xlu0
    %v2738 = vpop.trf.xlu0
    %v2739 = vpop.trf.xlu0
    %v2740 = vpop.trf.xlu0
    %v2741 = vpop.trf.xlu0
    %v2743 = vsel %vm324, %v2726, 0
    %v2746 = vsel %vm324, %v2727, 0
    %v2749 = vsel %vm324, %v2728, 0
    %v2752 = vsel %vm324, %v2729, 0
    %v2755 = vsel %vm324, %v2730, 0
    %v2758 = vsel %vm324, %v2731, 0
    %v2761 = vsel %vm324, %v2732, 0
    %v2764 = vsel %vm324, %v2733, 0
    %v2767 = vsel %vm324, %v2734, 0
    %v2770 = vsel %vm324, %v2735, 0
    %v2773 = vsel %vm324, %v2736, 0
    %v2776 = vsel %vm324, %v2737, 0
    %v2779 = vsel %vm324, %v2738, 0
    %v2782 = vsel %vm324, %v2739, 0
    %v2785 = vsel %vm324, %v2740, 0
    %v2788 = vsel %vm324, %v2741, 0
    %2790 = vmatprep.subr.mxu0 0.0
    %2791 = vmatpush1.msra.mxu0 %v2259
    %2792 = vmatprep.subr.mxu0 0.0
    %2793 = vmatpush1.msra.mxu0 0.0
    %2794 = vmatprep.subr.mxu0 0.0
    %2795 = vmatpush1.msra.mxu0 0.0
    %2796 = vmatprep.subr.mxu0 0.0
    %2797 = vmatpush1.msra.mxu0 0.0
    %2798 = vmatprep.subr.mxu0 0.0
    %2799 = vmatpush1.msra.mxu0 0.0
    %2800 = vmatprep.subr.mxu0 0.0
    %2801 = vmatpush1.msra.mxu0 0.0
    %2802 = vmatprep.subr.mxu0 0.0
    %2803 = vmatpush1.msra.mxu0 0.0
    %2804 = vmatprep.subr.mxu0 0.0
    %2805 = vmatpush1.msra.mxu0 0.0
    %2806 = vmatprep.subr.mxu0 0.0
    %2807 = vmatpush1.msra.mxu0 0.0
    %2808 = vmatprep.subr.mxu0 0.0
    %2809 = vmatpush1.msra.mxu0 0.0
    %2810 = vmatprep.subr.mxu0 0.0
    %2811 = vmatpush1.msra.mxu0 0.0
    %2812 = vmatprep.subr.mxu0 0.0
    %2813 = vmatpush1.msra.mxu0 0.0
    %2814 = vmatprep.subr.mxu0 0.0
    %2815 = vmatpush1.msra.mxu0 0.0
    %2816 = vmatprep.subr.mxu0 0.0
    %2817 = vmatpush1.msra.mxu0 0.0
    %2818 = vmatprep.subr.mxu0 0.0
    %2819 = vmatpush1.msra.mxu0 0.0
    %2820 = vmatprep.subr.mxu0 0.0
    %2821 = vmatpush1.msra.mxu0 0.0
    %2822 = vmatprep.subr.mxu0 0.0
    %2823 = vmatpush1.msra.mxu0 0.0
    %2824 = vmatprep.subr.mxu0 0.0
    %2825 = vmatpush1.msra.mxu0 0.0
    %2826 = vmatprep.subr.mxu0 0.0
    %2827 = vmatpush1.msra.mxu0 0.0
    %2828 = vmatprep.subr.mxu0 0.0
    %2829 = vmatpush1.msra.mxu0 0.0
    %2830 = vmatprep.subr.mxu0 0.0
    %2831 = vmatpush1.msra.mxu0 0.0
    %2832 = vmatprep.subr.mxu0 0.0
    %2833 = vmatpush1.msra.mxu0 0.0
    %2834 = vmatprep.subr.mxu0 0.0
    %2835 = vmatpush1.msra.mxu0 0.0
    %2836 = vmatprep.subr.mxu0 0.0
    %2837 = vmatpush1.msra.mxu0 0.0
    %2838 = vmatprep.subr.mxu0 0.0
    %2839 = vmatpush1.msra.mxu0 0.0
    %2840 = vmatprep.subr.mxu0 0.0
    %2841 = vmatpush1.msra.mxu0 0.0
    %2842 = vmatprep.subr.mxu0 0.0
    %2843 = vmatpush1.msra.mxu0 0.0
    %2844 = vmatprep.subr.mxu0 0.0
    %2845 = vmatpush1.msra.mxu0 0.0
    %2846 = vmatprep.subr.mxu0 0.0
    %2847 = vmatpush1.msra.mxu0 0.0
    %2848 = vmatprep.subr.mxu0 0.0
    %2849 = vmatpush1.msra.mxu0 0.0
    %2850 = vmatprep.subr.mxu0 0.0
    %2851 = vmatpush1.msra.mxu0 0.0
    %2852 = vmatprep.subr.mxu0 0.0
    %2853 = vmatpush1.msra.mxu0 0.0
    %2854 = vmatprep.mubr.f32.mxu0 0.0
    %2855 = vmatmul.mubr.f32.gmra.mrb[0].mxu0 %v2743
    %v2856 = vpop.f32.mrb[0].mxu0
    %v2857 = vadd.f32 0.0, %v2856
    %v2858 = vpop.f32.mrb[0].mxu0
    %2859 = vmatprep.mubr.f32.mxu0 0.0
    %2860 = vmatmul.mubr.f32.gmra.mrb[0].mxu0 %v2746
    %v2861 = vpop.f32.mrb[0].mxu0
    %v2862 = vadd.f32 0.0, %v2861
    %v2863 = vpop.f32.mrb[0].mxu0
    %2864 = vmatprep.mubr.f32.mxu0 0.0
    %2865 = vmatmul.mubr.f32.gmra.mrb[0].mxu0 %v2749
    %v2866 = vpop.f32.mrb[0].mxu0
    %v2867 = vadd.f32 0.0, %v2866
    %v2868 = vpop.f32.mrb[0].mxu0
    %2869 = vmatprep.mubr.f32.mxu0 0.0
    %2870 = vmatmul.mubr.f32.gmra.mrb[0].mxu0 %v2752
    %v2871 = vpop.f32.mrb[0].mxu0
    %v2872 = vadd.f32 0.0, %v2871
    %v2873 = vpop.f32.mrb[0].mxu0
    %2874 = vmatprep.mubr.f32.mxu0 0.0
    %2875 = vmatmul.mubr.f32.gmra.mrb[0].mxu0 %v2755
    %v2876 = vpop.f32.mrb[0].mxu0
    %v2877 = vadd.f32 0.0, %v2876
    %v2878 = vpop.f32.mrb[0].mxu0
    %2879 = vmatprep.mubr.f32.mxu0 0.0
    %2880 = vmatmul.mubr.f32.gmra.mrb[0].mxu0 %v2758
    %v2881 = vpop.f32.mrb[0].mxu0
    %v2882 = vadd.f32 0.0, %v2881
    %v2883 = vpop.f32.mrb[0].mxu0
    %2884 = vmatprep.mubr.f32.mxu0 0.0
    %2885 = vmatmul.mubr.f32.gmra.mrb[0].mxu0 %v2761
    %v2886 = vpop.f32.mrb[0].mxu0
    %v2887 = vadd.f32 0.0, %v2886
    %v2888 = vpop.f32.mrb[0].mxu0
    %2889 = vmatprep.mubr.f32.mxu0 0.0
    %2890 = vmatmul.mubr.f32.gmra.mrb[0].mxu0 %v2764
    %v2891 = vpop.f32.mrb[0].mxu0
    %v2892 = vadd.f32 0.0, %v2891
    %v2893 = vpop.f32.mrb[0].mxu0
    %2894 = vmatprep.mubr.f32.mxu0 0.0
    %2895 = vmatmul.mubr.f32.gmra.mrb[0].mxu0 %v2767
    %v2896 = vpop.f32.mrb[0].mxu0
    %v2897 = vadd.f32 0.0, %v2896
    %v2898 = vpop.f32.mrb[0].mxu0
    %2899 = vmatprep.mubr.f32.mxu0 0.0
    %2900 = vmatmul.mubr.f32.gmra.mrb[0].mxu0 %v2770
    %v2901 = vpop.f32.mrb[0].mxu0
    %v2902 = vadd.f32 0.0, %v2901
    %v2903 = vpop.f32.mrb[0].mxu0
    %2904 = vmatprep.mubr.f32.mxu0 0.0
    %2905 = vmatmul.mubr.f32.gmra.mrb[0].mxu0 %v2773
    %v2906 = vpop.f32.mrb[0].mxu0
    %v2907 = vadd.f32 0.0, %v2906
    %v2908 = vpop.f32.mrb[0].mxu0
    %2909 = vmatprep.mubr.f32.mxu0 0.0
    %2910 = vmatmul.mubr.f32.gmra.mrb[0].mxu0 %v2776
    %v2911 = vpop.f32.mrb[0].mxu0
    %v2912 = vadd.f32 0.0, %v2911
    %v2913 = vpop.f32.mrb[0].mxu0
    %2914 = vmatprep.mubr.f32.mxu0 0.0
    %2915 = vmatmul.mubr.f32.gmra.mrb[0].mxu0 %v2779
    %v2916 = vpop.f32.mrb[0].mxu0
    %v2917 = vadd.f32 0.0, %v2916
    %v2918 = vpop.f32.mrb[0].mxu0
    %2919 = vmatprep.mubr.f32.mxu0 0.0
    %2920 = vmatmul.mubr.f32.gmra.mrb[0].mxu0 %v2782
    %v2921 = vpop.f32.mrb[0].mxu0
    %v2922 = vadd.f32 0.0, %v2921
    %v2923 = vpop.f32.mrb[0].mxu0
    %2924 = vmatprep.mubr.f32.mxu0 0.0
    %2925 = vmatmul.mubr.f32.gmra.mrb[0].mxu0 %v2785
    %v2926 = vpop.f32.mrb[0].mxu0
    %v2927 = vadd.f32 0.0, %v2926
    %v2928 = vpop.f32.mrb[0].mxu0
    %2929 = vmatprep.mubr.f32.mxu0 0.0
    %2930 = vmatmul.mubr.f32.gmra.mrb[0].mxu0 %v2788
    %v2931 = vpop.f32.mrb[0].mxu0
    %v2932 = vadd.f32 0.0, %v2931
    %v2933 = vpop.f32.mrb[0].mxu0
    %2934 = vdwg.mxu0
    %v2935 = vmax.f32 %v2857, %v2877
    %v2936 = vmax.f32 %v2862, %v2882
    %v2937 = vmax.f32 %v2867, %v2887
    %v2938 = vmax.f32 %v2872, %v2892
    %v2939 = vmax.f32 %v2935, %v2897
    %v2940 = vmax.f32 %v2936, %v2902
    %v2941 = vmax.f32 %v2937, %v2907
    %v2942 = vmax.f32 %v2938, %v2912
    %v2943 = vmax.f32 %v2939, %v2917
    %v2944 = vmax.f32 %v2940, %v2922
    %v2945 = vmax.f32 %v2941, %v2927
    %v2946 = vmax.f32 %v2942, %v2932
    %v2947 = vmax.f32 %v2943, %v2944
    %v2948 = vmax.f32 %v2945, %v2946
    %v2949 = vmax.f32 %v2947, %v2948
    %v2950 = vrot.slane %v2949, 4
    %v2951 = vmax.f32 %v2949, %v2950
    %v2952 = vrot.slane %v2951, 2
    %v2953 = vmax.f32 %v2951, %v2952
    %v2954 = vrot.slane %v2953, 1
    %v2955 = vmax.f32 %v2953, %v2954
    %v2956 = vsub.f32 %v2857, %v2955
    %v2957 = vsub.f32 %v2862, %v2955
    %v2958 = vsub.f32 %v2867, %v2955
    %v2959 = vsub.f32 %v2872, %v2955
    %v2960 = vsub.f32 %v2877, %v2955
    %v2961 = vsub.f32 %v2882, %v2955
    %v2962 = vsub.f32 %v2887, %v2955
    %v2963 = vsub.f32 %v2892, %v2955
    %v2964 = vsub.f32 %v2897, %v2955
    %v2965 = vsub.f32 %v2902, %v2955
    %v2966 = vsub.f32 %v2907, %v2955
    %v2967 = vsub.f32 %v2912, %v2955
    %v2968 = vsub.f32 %v2917, %v2955
    %v2969 = vsub.f32 %v2922, %v2955
    %v2970 = vsub.f32 %v2927, %v2955
    %v2971 = vsub.f32 %v2932, %v2955
    %v2972 = vmul.f32 %v2956, 1.442695
    %v2973 = vpow.pop %v2972
    %v2974 = vmul.f32 %v2957, 1.442695
    %v2975 = vpow.pop %v2974
    %v2976 = vmul.f32 %v2958, 1.442695
    %v2977 = vpow.pop %v2976
    %v2978 = vmul.f32 %v2959, 1.442695
    %v2979 = vpow.pop %v2978
    %v2980 = vmul.f32 %v2960, 1.442695
    %v2981 = vpow.pop %v2980
    %v2982 = vmul.f32 %v2961, 1.442695
    %v2983 = vpow.pop %v2982
    %v2984 = vmul.f32 %v2962, 1.442695
    %v2985 = vpow.pop %v2984
    %v2986 = vmul.f32 %v2963, 1.442695
    %v2987 = vpow.pop %v2986
    %v2988 = vmul.f32 %v2964, 1.442695
    %v2989 = vpow.pop %v2988
    %v2990 = vmul.f32 %v2965, 1.442695
    %v2991 = vpow.pop %v2990
    %v2992 = vmul.f32 %v2966, 1.442695
    %v2993 = vpow.pop %v2992
    %v2994 = vmul.f32 %v2967, 1.442695
    %v2995 = vpow.pop %v2994
    %v2996 = vmul.f32 %v2968, 1.442695
    %v2997 = vpow.pop %v2996
    %v2998 = vmul.f32 %v2969, 1.442695
    %v2999 = vpow.pop %v2998
    %v3000 = vmul.f32 %v2970, 1.442695
    %v3001 = vpow.pop %v3000
    %v3002 = vmul.f32 %v2971, 1.442695
    %v3003 = vpow.pop %v3002
    %v3004 = vadd.f32 %v2973, %v2975
    %v3005 = vadd.f32 %v3004, %v2977
    %v3006 = vadd.f32 %v3005, %v2979
    %v3007 = vadd.f32 %v3006, %v2981
    %v3008 = vadd.f32 %v3007, %v2983
    %v3009 = vadd.f32 %v3008, %v2985
    %v3010 = vadd.f32 %v3009, %v2987
    %v3011 = vadd.f32 %v3010, %v2989
    %v3012 = vadd.f32 %v3011, %v2991
    %v3013 = vadd.f32 %v3012, %v2993
    %v3014 = vadd.f32 %v3013, %v2995
    %v3015 = vadd.f32 %v3014, %v2997
    %v3016 = vadd.f32 %v3015, %v2999
    %v3017 = vadd.f32 %v3016, %v3001
    %v3018 = vadd.f32 %v3017, %v3003
    %v3019 = vrot.slane %v3018, 4
    %v3020 = vadd.f32 %v3018, %v3019
    %v3021 = vrot.slane %v3020, 2
    %v3022 = vadd.f32 %v3020, %v3021
    %v3023 = vrot.slane %v3022, 1
    %v3024 = vadd.f32 %v3022, %v3023
    %v3025 = vrcp.pop %v3024
    %v3026 = vmul.f32 %v3024, %v3025
    %v3027 = vsub.f32 2.0, %v3026
    %v3028 = vmul.f32 %v3025, %v3027
    %v3029 = vmul.f32 %v2973, %v3028
    %v3030 = vmul.f32 %v2975, %v3028
    %v3031 = vmul.f32 %v2977, %v3028
    %v3032 = vmul.f32 %v2979, %v3028
    %v3033 = vmul.f32 %v2981, %v3028
    %v3034 = vmul.f32 %v2983, %v3028
    %v3035 = vmul.f32 %v2985, %v3028
    %v3036 = vmul.f32 %v2987, %v3028
    %v3037 = vmul.f32 %v2989, %v3028
    %v3038 = vmul.f32 %v2991, %v3028
    %v3039 = vmul.f32 %v2993, %v3028
    %v3040 = vmul.f32 %v2995, %v3028
    %v3041 = vmul.f32 %v2997, %v3028
    %v3042 = vmul.f32 %v2999, %v3028
    %v3043 = vmul.f32 %v3001, %v3028
    %v3044 = vmul.f32 %v3003, %v3028
    %v3045 = vpack.c.bf16 %v3030, %v3029
    %v3046 = vpack.c.bf16 %v3032, %v3031
    %v3047 = vpack.c.bf16 %v3034, %v3033
    %v3048 = vpack.c.bf16 %v3036, %v3035
    %v3049 = vpack.c.bf16 %v3038, %v3037
    %v3050 = vpack.c.bf16 %v3040, %v3039
    %v3051 = vpack.c.bf16 %v3042, %v3041
    %v3052 = vpack.c.bf16 %v3044, %v3043
    %v3053 = vpack.c.bf16 %v2299, %v2299
    %v3055 = vsel %vm653, %v3053, 0
    %3057 = vmatprep.subr.bf16.mxu0 0
    %3058 = vmatpush1.bf16.msra.mxu0 %v3055
    %3059 = vmatprep.subr.bf16.mxu0 0
    %3060 = vmatpush1.bf16.msra.mxu0 0
    %3061 = vmatprep.subr.bf16.mxu0 0
    %3062 = vmatpush1.bf16.msra.mxu0 0
    %3063 = vmatprep.subr.bf16.mxu0 0
    %3064 = vmatpush1.bf16.msra.mxu0 0
    %3065 = vmatprep.subr.bf16.mxu0 0
    %3066 = vmatpush1.bf16.msra.mxu0 0
    %3067 = vmatprep.subr.bf16.mxu0 0
    %3068 = vmatpush1.bf16.msra.mxu0 0
    %3069 = vmatprep.subr.bf16.mxu0 0
    %3070 = vmatpush1.bf16.msra.mxu0 0
    %3071 = vmatprep.subr.bf16.mxu0 0
    %3072 = vmatpush1.bf16.msra.mxu0 0
    %3073 = vmatprep.subr.bf16.mxu0 0
    %3074 = vmatpush1.bf16.msra.mxu0 0
    %3075 = vmatprep.subr.bf16.mxu0 0
    %3076 = vmatpush1.bf16.msra.mxu0 0
    %3077 = vmatprep.subr.bf16.mxu0 0
    %3078 = vmatpush1.bf16.msra.mxu0 0
    %3079 = vmatprep.subr.bf16.mxu0 0
    %3080 = vmatpush1.bf16.msra.mxu0 0
    %3081 = vmatprep.subr.bf16.mxu0 0
    %3082 = vmatpush1.bf16.msra.mxu0 0
    %3083 = vmatprep.subr.bf16.mxu0 0
    %3084 = vmatpush1.bf16.msra.mxu0 0
    %3085 = vmatprep.subr.bf16.mxu0 0
    %3086 = vmatpush1.bf16.msra.mxu0 0
    %3087 = vmatprep.subr.bf16.mxu0 0
    %3088 = vmatpush1.bf16.msra.mxu0 0
    %3089 = vmatprep.mubr.bf16.mxu0 0
    %3090 = vmatmul.mubr.bf16.gmra.mrb[0].mxu0 %v1063
    %v3091 = vpop.f32.mrb[0].mxu0
    %v3092 = vadd.f32 0.0, %v3091
    %v3093 = vpop.f32.mrb[0].mxu0
    %v3094 = vpop.f32.mrb[0].mxu0
    %v3095 = vadd.f32 0.0, %v3094
    %v3096 = vpop.f32.mrb[0].mxu0
    %3097 = vmatprep.mubr.bf16.mxu0 0
    %3098 = vmatmul.mubr.bf16.gmra.mrb[0].mxu0 %v1066
    %v3099 = vpop.f32.mrb[0].mxu0
    %v3100 = vadd.f32 0.0, %v3099
    %v3101 = vpop.f32.mrb[0].mxu0
    %v3102 = vpop.f32.mrb[0].mxu0
    %v3103 = vadd.f32 0.0, %v3102
    %v3104 = vpop.f32.mrb[0].mxu0
    %3105 = vdwg.mxu0
    %v3106 = vpack.c.bf16 %v3095, %v3092
    %v3107 = vpack.c.bf16 %v3103, %v3100
    %3108 = vmatprep.subr.bf16.mxu0 0
    %3109 = vmatpush1.bf16.msra.mxu0 %v3045
    %3110 = vmatprep.subr.bf16.mxu0 0
    %3111 = vmatpush1.bf16.msra.mxu0 %v3046
    %3112 = vmatprep.subr.bf16.mxu0 0
    %3113 = vmatpush1.bf16.msra.mxu0 %v3047
    %3114 = vmatprep.subr.bf16.mxu0 0
    %3115 = vmatpush1.bf16.msra.mxu0 %v3048
    %3116 = vmatprep.subr.bf16.mxu0 0
    %3117 = vmatpush1.bf16.msra.mxu0 %v3049
    %3118 = vmatprep.subr.bf16.mxu0 0
    %3119 = vmatpush1.bf16.msra.mxu0 %v3050
    %3120 = vmatprep.subr.bf16.mxu0 0
    %3121 = vmatpush1.bf16.msra.mxu0 %v3051
    %3122 = vmatprep.subr.bf16.mxu0 0
    %3123 = vmatpush1.bf16.msra.mxu0 %v3052
    %3124 = vmatprep.subr.bf16.mxu0 0
    %3125 = vmatpush1.bf16.msra.mxu0 0
    %3126 = vmatprep.subr.bf16.mxu0 0
    %3127 = vmatpush1.bf16.msra.mxu0 0
    %3128 = vmatprep.subr.bf16.mxu0 0
    %3129 = vmatpush1.bf16.msra.mxu0 0
    %3130 = vmatprep.subr.bf16.mxu0 0
    %3131 = vmatpush1.bf16.msra.mxu0 0
    %3132 = vmatprep.subr.bf16.mxu0 0
    %3133 = vmatpush1.bf16.msra.mxu0 0
    %3134 = vmatprep.subr.bf16.mxu0 0
    %3135 = vmatpush1.bf16.msra.mxu0 0
    %3136 = vmatprep.subr.bf16.mxu0 0
    %3137 = vmatpush1.bf16.msra.mxu0 0
    %3138 = vmatprep.subr.bf16.mxu0 0
    %3139 = vmatpush1.bf16.msra.mxu0 0
    %3140 = vmatprep.mubr.bf16.mxu0 0
    %3141 = vmatmul.mubr.bf16.gmra.mrb[0].mxu0 %v3106
    %v3142 = vpop.f32.mrb[0].mxu0
    %v3143 = vadd.f32 0.0, %v3142
    %v3144 = vpop.f32.mrb[0].mxu0
    %v3145 = vpop.f32.mrb[0].mxu0
    %v3146 = vadd.f32 0.0, %v3145
    %v3147 = vpop.f32.mrb[0].mxu0
    %3148 = vmatprep.mubr.bf16.mxu0 0
    %3149 = vmatmul.mubr.bf16.gmra.mrb[0].mxu0 %v3107
    %v3150 = vpop.f32.mrb[0].mxu0
    %v3151 = vadd.f32 0.0, %v3150
    %v3152 = vpop.f32.mrb[0].mxu0
    %v3153 = vpop.f32.mrb[0].mxu0
    %v3154 = vadd.f32 0.0, %v3153
    %v3155 = vpop.f32.mrb[0].mxu0
    %3156 = vdwg.mxu0
    %3157 = vmatprep.subr.bf16.mxu0 0
    %3158 = vmatpush1.bf16.msra.mxu0 %v2647
    %3159 = vmatprep.subr.bf16.mxu0 0
    %3160 = vmatpush1.bf16.msra.mxu0 %v2648
    %3161 = vmatprep.subr.bf16.mxu0 0
    %3162 = vmatpush1.bf16.msra.mxu0 %v2649
    %3163 = vmatprep.subr.bf16.mxu0 0
    %3164 = vmatpush1.bf16.msra.mxu0 %v2650
    %3165 = vmatprep.subr.bf16.mxu0 0
    %3166 = vmatpush1.bf16.msra.mxu0 %v2651
    %3167 = vmatprep.subr.bf16.mxu0 0
    %3168 = vmatpush1.bf16.msra.mxu0 %v2652
    %3169 = vmatprep.subr.bf16.mxu0 0
    %3170 = vmatpush1.bf16.msra.mxu0 %v2653
    %3171 = vmatprep.subr.bf16.mxu0 0
    %3172 = vmatpush1.bf16.msra.mxu0 %v2654
    %3173 = vmatprep.subr.bf16.mxu0 0
    %3174 = vmatpush1.bf16.msra.mxu0 0
    %3175 = vmatprep.subr.bf16.mxu0 0
    %3176 = vmatpush1.bf16.msra.mxu0 0
    %3177 = vmatprep.subr.bf16.mxu0 0
    %3178 = vmatpush1.bf16.msra.mxu0 0
    %3179 = vmatprep.subr.bf16.mxu0 0
    %3180 = vmatpush1.bf16.msra.mxu0 0
    %3181 = vmatprep.subr.bf16.mxu0 0
    %3182 = vmatpush1.bf16.msra.mxu0 0
    %3183 = vmatprep.subr.bf16.mxu0 0
    %3184 = vmatpush1.bf16.msra.mxu0 0
    %3185 = vmatprep.subr.bf16.mxu0 0
    %3186 = vmatpush1.bf16.msra.mxu0 0
    %3187 = vmatprep.subr.bf16.mxu0 0
    %3188 = vmatpush1.bf16.msra.mxu0 0
    %3189 = vmatprep.mubr.bf16.mxu0 0
    %3190 = vmatmul.mubr.bf16.gmra.mrb[0].mxu0 %v2708
    %v3191 = vpop.f32.mrb[0].mxu0
    %v3192 = vadd.f32 %v3143, %v3191
    %v3193 = vpop.f32.mrb[0].mxu0
    %v3194 = vpop.f32.mrb[0].mxu0
    %v3195 = vadd.f32 %v3146, %v3194
    %v3196 = vpop.f32.mrb[0].mxu0
    %3197 = vmatprep.mubr.bf16.mxu0 0
    %3198 = vmatmul.mubr.bf16.gmra.mrb[0].mxu0 %v2709
    %v3199 = vpop.f32.mrb[0].mxu0
    %v3200 = vadd.f32 %v3151, %v3199
    %v3201 = vpop.f32.mrb[0].mxu0
    %v3202 = vpop.f32.mrb[0].mxu0
    %v3203 = vadd.f32 %v3154, %v3202
    %v3204 = vpop.f32.mrb[0].mxu0
    %3205 = vdwg.mxu0
    %3206 = vxpose.xlu0.b32.start [1/16] %v2284, 128
    %3207 = vxpose.xlu0.b32.cont [2/16] 0.0, 128
    %3208 = vxpose.xlu0.b32.cont [3/16] 0.0, 128
    %3209 = vxpose.xlu0.b32.cont [4/16] 0.0, 128
    %3210 = vxpose.xlu0.b32.cont [5/16] 0.0, 128
    %3211 = vxpose.xlu0.b32.cont [6/16] 0.0, 128
    %3212 = vxpose.xlu0.b32.cont [7/16] 0.0, 128
    %3213 = vxpose.xlu0.b32.cont [8/16] 0.0, 128
    %3214 = vxpose.xlu0.b32.cont [9/16] 0.0, 128
    %3215 = vxpose.xlu0.b32.cont [10/16] 0.0, 128
    %3216 = vxpose.xlu0.b32.cont [11/16] 0.0, 128
    %3217 = vxpose.xlu0.b32.cont [12/16] 0.0, 128
    %3218 = vxpose.xlu0.b32.cont [13/16] 0.0, 128
    %3219 = vxpose.xlu0.b32.cont [14/16] 0.0, 128
    %3220 = vxpose.xlu0.b32.cont [15/16] 0.0, 128
    %3221 = vxpose.xlu0.b32.end [16/16] 0.0, 128
    %v3222 = vpop.trf.xlu0
    %v3223 = vpop.trf.xlu0
    %v3224 = vpop.trf.xlu0
    %v3225 = vpop.trf.xlu0
    %v3226 = vpop.trf.xlu0
    %v3227 = vpop.trf.xlu0
    %v3228 = vpop.trf.xlu0
    %v3229 = vpop.trf.xlu0
    %v3230 = vpop.trf.xlu0
    %v3231 = vpop.trf.xlu0
    %v3232 = vpop.trf.xlu0
    %v3233 = vpop.trf.xlu0
    %v3234 = vpop.trf.xlu0
    %v3235 = vpop.trf.xlu0
    %v3236 = vpop.trf.xlu0
    %v3237 = vpop.trf.xlu0
    %v3239 = vsel %vm324, %v3222, 0
    %v3242 = vsel %vm324, %v3223, 0
    %v3245 = vsel %vm324, %v3224, 0
    %v3248 = vsel %vm324, %v3225, 0
    %v3251 = vsel %vm324, %v3226, 0
    %v3254 = vsel %vm324, %v3227, 0
    %v3257 = vsel %vm324, %v3228, 0
    %v3260 = vsel %vm324, %v3229, 0
    %v3263 = vsel %vm324, %v3230, 0
    %v3266 = vsel %vm324, %v3231, 0
    %v3269 = vsel %vm324, %v3232, 0
    %v3272 = vsel %vm324, %v3233, 0
    %v3275 = vsel %vm324, %v3234, 0
    %v3278 = vsel %vm324, %v3235, 0
    %v3281 = vsel %vm324, %v3236, 0
    %v3284 = vsel %vm324, %v3237, 0
    %3286 = vmatprep.subr.mxu0 0.0
    %3287 = vmatpush1.msra.mxu0 %v2264
    %3288 = vmatprep.subr.mxu0 0.0
    %3289 = vmatpush1.msra.mxu0 0.0
    %3290 = vmatprep.subr.mxu0 0.0
    %3291 = vmatpush1.msra.mxu0 0.0
    %3292 = vmatprep.subr.mxu0 0.0
    %3293 = vmatpush1.msra.mxu0 0.0
    %3294 = vmatprep.subr.mxu0 0.0
    %3295 = vmatpush1.msra.mxu0 0.0
    %3296 = vmatprep.subr.mxu0 0.0
    %3297 = vmatpush1.msra.mxu0 0.0
    %3298 = vmatprep.subr.mxu0 0.0
    %3299 = vmatpush1.msra.mxu0 0.0
    %3300 = vmatprep.subr.mxu0 0.0
    %3301 = vmatpush1.msra.mxu0 0.0
    %3302 = vmatprep.subr.mxu0 0.0
    %3303 = vmatpush1.msra.mxu0 0.0
    %3304 = vmatprep.subr.mxu0 0.0
    %3305 = vmatpush1.msra.mxu0 0.0
    %3306 = vmatprep.subr.mxu0 0.0
    %3307 = vmatpush1.msra.mxu0 0.0
    %3308 = vmatprep.subr.mxu0 0.0
    %3309 = vmatpush1.msra.mxu0 0.0
    %3310 = vmatprep.subr.mxu0 0.0
    %3311 = vmatpush1.msra.mxu0 0.0
    %3312 = vmatprep.subr.mxu0 0.0
    %3313 = vmatpush1.msra.mxu0 0.0
    %3314 = vmatprep.subr.mxu0 0.0
    %3315 = vmatpush1.msra.mxu0 0.0
    %3316 = vmatprep.subr.mxu0 0.0
    %3317 = vmatpush1.msra.mxu0 0.0
    %3318 = vmatprep.subr.mxu0 0.0
    %3319 = vmatpush1.msra.mxu0 0.0
    %3320 = vmatprep.subr.mxu0 0.0
    %3321 = vmatpush1.msra.mxu0 0.0
    %3322 = vmatprep.subr.mxu0 0.0
    %3323 = vmatpush1.msra.mxu0 0.0
    %3324 = vmatprep.subr.mxu0 0.0
    %3325 = vmatpush1.msra.mxu0 0.0
    %3326 = vmatprep.subr.mxu0 0.0
    %3327 = vmatpush1.msra.mxu0 0.0
    %3328 = vmatprep.subr.mxu0 0.0
    %3329 = vmatpush1.msra.mxu0 0.0
    %3330 = vmatprep.subr.mxu0 0.0
    %3331 = vmatpush1.msra.mxu0 0.0
    %3332 = vmatprep.subr.mxu0 0.0
    %3333 = vmatpush1.msra.mxu0 0.0
    %3334 = vmatprep.subr.mxu0 0.0
    %3335 = vmatpush1.msra.mxu0 0.0
    %3336 = vmatprep.subr.mxu0 0.0
    %3337 = vmatpush1.msra.mxu0 0.0
    %3338 = vmatprep.subr.mxu0 0.0
    %3339 = vmatpush1.msra.mxu0 0.0
    %3340 = vmatprep.subr.mxu0 0.0
    %3341 = vmatpush1.msra.mxu0 0.0
    %3342 = vmatprep.subr.mxu0 0.0
    %3343 = vmatpush1.msra.mxu0 0.0
    %3344 = vmatprep.subr.mxu0 0.0
    %3345 = vmatpush1.msra.mxu0 0.0
    %3346 = vmatprep.subr.mxu0 0.0
    %3347 = vmatpush1.msra.mxu0 0.0
    %3348 = vmatprep.subr.mxu0 0.0
    %3349 = vmatpush1.msra.mxu0 0.0
    %3350 = vmatprep.mubr.f32.mxu0 0.0
    %3351 = vmatmul.mubr.f32.gmra.mrb[0].mxu0 %v3239
    %v3352 = vpop.f32.mrb[0].mxu0
    %v3353 = vadd.f32 0.0, %v3352
    %v3354 = vpop.f32.mrb[0].mxu0
    %3355 = vmatprep.mubr.f32.mxu0 0.0
    %3356 = vmatmul.mubr.f32.gmra.mrb[0].mxu0 %v3242
    %v3357 = vpop.f32.mrb[0].mxu0
    %v3358 = vadd.f32 0.0, %v3357
    %v3359 = vpop.f32.mrb[0].mxu0
    %3360 = vmatprep.mubr.f32.mxu0 0.0
    %3361 = vmatmul.mubr.f32.gmra.mrb[0].mxu0 %v3245
    %v3362 = vpop.f32.mrb[0].mxu0
    %v3363 = vadd.f32 0.0, %v3362
    %v3364 = vpop.f32.mrb[0].mxu0
    %3365 = vmatprep.mubr.f32.mxu0 0.0
    %3366 = vmatmul.mubr.f32.gmra.mrb[0].mxu0 %v3248
    %v3367 = vpop.f32.mrb[0].mxu0
    %v3368 = vadd.f32 0.0, %v3367
    %v3369 = vpop.f32.mrb[0].mxu0
    %3370 = vmatprep.mubr.f32.mxu0 0.0
    %3371 = vmatmul.mubr.f32.gmra.mrb[0].mxu0 %v3251
    %v3372 = vpop.f32.mrb[0].mxu0
    %v3373 = vadd.f32 0.0, %v3372
    %v3374 = vpop.f32.mrb[0].mxu0
    %3375 = vmatprep.mubr.f32.mxu0 0.0
    %3376 = vmatmul.mubr.f32.gmra.mrb[0].mxu0 %v3254
    %v3377 = vpop.f32.mrb[0].mxu0
    %v3378 = vadd.f32 0.0, %v3377
    %v3379 = vpop.f32.mrb[0].mxu0
    %3380 = vmatprep.mubr.f32.mxu0 0.0
    %3381 = vmatmul.mubr.f32.gmra.mrb[0].mxu0 %v3257
    %v3382 = vpop.f32.mrb[0].mxu0
    %v3383 = vadd.f32 0.0, %v3382
    %v3384 = vpop.f32.mrb[0].mxu0
    %3385 = vmatprep.mubr.f32.mxu0 0.0
    %3386 = vmatmul.mubr.f32.gmra.mrb[0].mxu0 %v3260
    %v3387 = vpop.f32.mrb[0].mxu0
    %v3388 = vadd.f32 0.0, %v3387
    %v3389 = vpop.f32.mrb[0].mxu0
    %3390 = vmatprep.mubr.f32.mxu0 0.0
    %3391 = vmatmul.mubr.f32.gmra.mrb[0].mxu0 %v3263
    %v3392 = vpop.f32.mrb[0].mxu0
    %v3393 = vadd.f32 0.0, %v3392
    %v3394 = vpop.f32.mrb[0].mxu0
    %3395 = vmatprep.mubr.f32.mxu0 0.0
    %3396 = vmatmul.mubr.f32.gmra.mrb[0].mxu0 %v3266
    %v3397 = vpop.f32.mrb[0].mxu0
    %v3398 = vadd.f32 0.0, %v3397
    %v3399 = vpop.f32.mrb[0].mxu0
    %3400 = vmatprep.mubr.f32.mxu0 0.0
    %3401 = vmatmul.mubr.f32.gmra.mrb[0].mxu0 %v3269
    %v3402 = vpop.f32.mrb[0].mxu0
    %v3403 = vadd.f32 0.0, %v3402
    %v3404 = vpop.f32.mrb[0].mxu0
    %3405 = vmatprep.mubr.f32.mxu0 0.0
    %3406 = vmatmul.mubr.f32.gmra.mrb[0].mxu0 %v3272
    %v3407 = vpop.f32.mrb[0].mxu0
    %v3408 = vadd.f32 0.0, %v3407
    %v3409 = vpop.f32.mrb[0].mxu0
    %3410 = vmatprep.mubr.f32.mxu0 0.0
    %3411 = vmatmul.mubr.f32.gmra.mrb[0].mxu0 %v3275
    %v3412 = vpop.f32.mrb[0].mxu0
    %v3413 = vadd.f32 0.0, %v3412
    %v3414 = vpop.f32.mrb[0].mxu0
    %3415 = vmatprep.mubr.f32.mxu0 0.0
    %3416 = vmatmul.mubr.f32.gmra.mrb[0].mxu0 %v3278
    %v3417 = vpop.f32.mrb[0].mxu0
    %v3418 = vadd.f32 0.0, %v3417
    %v3419 = vpop.f32.mrb[0].mxu0
    %3420 = vmatprep.mubr.f32.mxu0 0.0
    %3421 = vmatmul.mubr.f32.gmra.mrb[0].mxu0 %v3281
    %v3422 = vpop.f32.mrb[0].mxu0
    %v3423 = vadd.f32 0.0, %v3422
    %v3424 = vpop.f32.mrb[0].mxu0
    %3425 = vmatprep.mubr.f32.mxu0 0.0
    %3426 = vmatmul.mubr.f32.gmra.mrb[0].mxu0 %v3284
    %v3427 = vpop.f32.mrb[0].mxu0
    %v3428 = vadd.f32 0.0, %v3427
    %v3429 = vpop.f32.mrb[0].mxu0
    %3430 = vdwg.mxu0
    %v3431 = vmax.f32 %v3353, %v3373
    %v3432 = vmax.f32 %v3358, %v3378
    %v3433 = vmax.f32 %v3363, %v3383
    %v3434 = vmax.f32 %v3368, %v3388
    %v3435 = vmax.f32 %v3431, %v3393
    %v3436 = vmax.f32 %v3432, %v3398
    %v3437 = vmax.f32 %v3433, %v3403
    %v3438 = vmax.f32 %v3434, %v3408
    %v3439 = vmax.f32 %v3435, %v3413
    %v3440 = vmax.f32 %v3436, %v3418
    %v3441 = vmax.f32 %v3437, %v3423
    %v3442 = vmax.f32 %v3438, %v3428
    %v3443 = vmax.f32 %v3439, %v3440
    %v3444 = vmax.f32 %v3441, %v3442
    %v3445 = vmax.f32 %v3443, %v3444
    %v3446 = vrot.slane %v3445, 4
    %v3447 = vmax.f32 %v3445, %v3446
    %v3448 = vrot.slane %v3447, 2
    %v3449 = vmax.f32 %v3447, %v3448
    %v3450 = vrot.slane %v3449, 1
    %v3451 = vmax.f32 %v3449, %v3450
    %v3452 = vsub.f32 %v3353, %v3451
    %v3453 = vsub.f32 %v3358, %v3451
    %v3454 = vsub.f32 %v3363, %v3451
    %v3455 = vsub.f32 %v3368, %v3451
    %v3456 = vsub.f32 %v3373, %v3451
    %v3457 = vsub.f32 %v3378, %v3451
    %v3458 = vsub.f32 %v3383, %v3451
    %v3459 = vsub.f32 %v3388, %v3451
    %v3460 = vsub.f32 %v3393, %v3451
    %v3461 = vsub.f32 %v3398, %v3451
    %v3462 = vsub.f32 %v3403, %v3451
    %v3463 = vsub.f32 %v3408, %v3451
    %v3464 = vsub.f32 %v3413, %v3451
    %v3465 = vsub.f32 %v3418, %v3451
    %v3466 = vsub.f32 %v3423, %v3451
    %v3467 = vsub.f32 %v3428, %v3451
    %v3468 = vmul.f32 %v3452, 1.442695
    %v3469 = vpow.pop %v3468
    %v3470 = vmul.f32 %v3453, 1.442695
    %v3471 = vpow.pop %v3470
    %v3472 = vmul.f32 %v3454, 1.442695
    %v3473 = vpow.pop %v3472
    %v3474 = vmul.f32 %v3455, 1.442695
    %v3475 = vpow.pop %v3474
    %v3476 = vmul.f32 %v3456, 1.442695
    %v3477 = vpow.pop %v3476
    %v3478 = vmul.f32 %v3457, 1.442695
    %v3479 = vpow.pop %v3478
    %v3480 = vmul.f32 %v3458, 1.442695
    %v3481 = vpow.pop %v3480
    %v3482 = vmul.f32 %v3459, 1.442695
    %v3483 = vpow.pop %v3482
    %v3484 = vmul.f32 %v3460, 1.442695
    %v3485 = vpow.pop %v3484
    %v3486 = vmul.f32 %v3461, 1.442695
    %v3487 = vpow.pop %v3486
    %v3488 = vmul.f32 %v3462, 1.442695
    %v3489 = vpow.pop %v3488
    %v3490 = vmul.f32 %v3463, 1.442695
    %v3491 = vpow.pop %v3490
    %v3492 = vmul.f32 %v3464, 1.442695
    %v3493 = vpow.pop %v3492
    %v3494 = vmul.f32 %v3465, 1.442695
    %v3495 = vpow.pop %v3494
    %v3496 = vmul.f32 %v3466, 1.442695
    %v3497 = vpow.pop %v3496
    %v3498 = vmul.f32 %v3467, 1.442695
    %v3499 = vpow.pop %v3498
    %v3500 = vadd.f32 %v3469, %v3471
    %v3501 = vadd.f32 %v3500, %v3473
    %v3502 = vadd.f32 %v3501, %v3475
    %v3503 = vadd.f32 %v3502, %v3477
    %v3504 = vadd.f32 %v3503, %v3479
    %v3505 = vadd.f32 %v3504, %v3481
    %v3506 = vadd.f32 %v3505, %v3483
    %v3507 = vadd.f32 %v3506, %v3485
    %v3508 = vadd.f32 %v3507, %v3487
    %v3509 = vadd.f32 %v3508, %v3489
    %v3510 = vadd.f32 %v3509, %v3491
    %v3511 = vadd.f32 %v3510, %v3493
    %v3512 = vadd.f32 %v3511, %v3495
    %v3513 = vadd.f32 %v3512, %v3497
    %v3514 = vadd.f32 %v3513, %v3499
    %v3515 = vrot.slane %v3514, 4
    %v3516 = vadd.f32 %v3514, %v3515
    %v3517 = vrot.slane %v3516, 2
    %v3518 = vadd.f32 %v3516, %v3517
    %v3519 = vrot.slane %v3518, 1
    %v3520 = vadd.f32 %v3518, %v3519
    %v3521 = vrcp.pop %v3520
    %v3522 = vmul.f32 %v3520, %v3521
    %v3523 = vsub.f32 2.0, %v3522
    %v3524 = vmul.f32 %v3521, %v3523
    %v3525 = vmul.f32 %v3469, %v3524
    %v3526 = vmul.f32 %v3471, %v3524
    %v3527 = vmul.f32 %v3473, %v3524
    %v3528 = vmul.f32 %v3475, %v3524
    %v3529 = vmul.f32 %v3477, %v3524
    %v3530 = vmul.f32 %v3479, %v3524
    %v3531 = vmul.f32 %v3481, %v3524
    %v3532 = vmul.f32 %v3483, %v3524
    %v3533 = vmul.f32 %v3485, %v3524
    %v3534 = vmul.f32 %v3487, %v3524
    %v3535 = vmul.f32 %v3489, %v3524
    %v3536 = vmul.f32 %v3491, %v3524
    %v3537 = vmul.f32 %v3493, %v3524
    %v3538 = vmul.f32 %v3495, %v3524
    %v3539 = vmul.f32 %v3497, %v3524
    %v3540 = vmul.f32 %v3499, %v3524
    %v3541 = vpack.c.bf16 %v3526, %v3525
    %v3542 = vpack.c.bf16 %v3528, %v3527
    %v3543 = vpack.c.bf16 %v3530, %v3529
    %v3544 = vpack.c.bf16 %v3532, %v3531
    %v3545 = vpack.c.bf16 %v3534, %v3533
    %v3546 = vpack.c.bf16 %v3536, %v3535
    %v3547 = vpack.c.bf16 %v3538, %v3537
    %v3548 = vpack.c.bf16 %v3540, %v3539
    %v3549 = vpack.c.bf16 %v2304, %v2304
    %v3551 = vsel %vm653, %v3549, 0
    %3553 = vmatprep.subr.bf16.mxu0 0
    %3554 = vmatpush1.bf16.msra.mxu0 %v3551
    %3555 = vmatprep.subr.bf16.mxu0 0
    %3556 = vmatpush1.bf16.msra.mxu0 0
    %3557 = vmatprep.subr.bf16.mxu0 0
    %3558 = vmatpush1.bf16.msra.mxu0 0
    %3559 = vmatprep.subr.bf16.mxu0 0
    %3560 = vmatpush1.bf16.msra.mxu0 0
    %3561 = vmatprep.subr.bf16.mxu0 0
    %3562 = vmatpush1.bf16.msra.mxu0 0
    %3563 = vmatprep.subr.bf16.mxu0 0
    %3564 = vmatpush1.bf16.msra.mxu0 0
    %3565 = vmatprep.subr.bf16.mxu0 0
    %3566 = vmatpush1.bf16.msra.mxu0 0
    %3567 = vmatprep.subr.bf16.mxu0 0
    %3568 = vmatpush1.bf16.msra.mxu0 0
    %3569 = vmatprep.subr.bf16.mxu0 0
    %3570 = vmatpush1.bf16.msra.mxu0 0
    %3571 = vmatprep.subr.bf16.mxu0 0
    %3572 = vmatpush1.bf16.msra.mxu0 0
    %3573 = vmatprep.subr.bf16.mxu0 0
    %3574 = vmatpush1.bf16.msra.mxu0 0
    %3575 = vmatprep.subr.bf16.mxu0 0
    %3576 = vmatpush1.bf16.msra.mxu0 0
    %3577 = vmatprep.subr.bf16.mxu0 0
    %3578 = vmatpush1.bf16.msra.mxu0 0
    %3579 = vmatprep.subr.bf16.mxu0 0
    %3580 = vmatpush1.bf16.msra.mxu0 0
    %3581 = vmatprep.subr.bf16.mxu0 0
    %3582 = vmatpush1.bf16.msra.mxu0 0
    %3583 = vmatprep.subr.bf16.mxu0 0
    %3584 = vmatpush1.bf16.msra.mxu0 0
    %3585 = vmatprep.mubr.bf16.mxu0 0
    %3586 = vmatmul.mubr.bf16.gmra.mrb[0].mxu0 %v1575
    %v3587 = vpop.f32.mrb[0].mxu0
    %v3588 = vadd.f32 0.0, %v3587
    %v3589 = vpop.f32.mrb[0].mxu0
    %v3590 = vpop.f32.mrb[0].mxu0
    %v3591 = vadd.f32 0.0, %v3590
    %v3592 = vpop.f32.mrb[0].mxu0
    %3593 = vmatprep.mubr.bf16.mxu0 0
    %3594 = vmatmul.mubr.bf16.gmra.mrb[0].mxu0 %v1578
    %v3595 = vpop.f32.mrb[0].mxu0
    %v3596 = vadd.f32 0.0, %v3595
    %v3597 = vpop.f32.mrb[0].mxu0
    %v3598 = vpop.f32.mrb[0].mxu0
    %v3599 = vadd.f32 0.0, %v3598
    %v3600 = vpop.f32.mrb[0].mxu0
    %3601 = vdwg.mxu0
    %v3602 = vpack.c.bf16 %v3591, %v3588
    %v3603 = vpack.c.bf16 %v3599, %v3596
    %3604 = vmatprep.subr.bf16.mxu0 0
    %3605 = vmatpush1.bf16.msra.mxu0 %v3541
    %3606 = vmatprep.subr.bf16.mxu0 0
    %3607 = vmatpush1.bf16.msra.mxu0 %v3542
    %3608 = vmatprep.subr.bf16.mxu0 0
    %3609 = vmatpush1.bf16.msra.mxu0 %v3543
    %3610 = vmatprep.subr.bf16.mxu0 0
    %3611 = vmatpush1.bf16.msra.mxu0 %v3544
    %3612 = vmatprep.subr.bf16.mxu0 0
    %3613 = vmatpush1.bf16.msra.mxu0 %v3545
    %3614 = vmatprep.subr.bf16.mxu0 0
    %3615 = vmatpush1.bf16.msra.mxu0 %v3546
    %3616 = vmatprep.subr.bf16.mxu0 0
    %3617 = vmatpush1.bf16.msra.mxu0 %v3547
    %3618 = vmatprep.subr.bf16.mxu0 0
    %3619 = vmatpush1.bf16.msra.mxu0 %v3548
    %3620 = vmatprep.subr.bf16.mxu0 0
    %3621 = vmatpush1.bf16.msra.mxu0 0
    %3622 = vmatprep.subr.bf16.mxu0 0
    %3623 = vmatpush1.bf16.msra.mxu0 0
    %3624 = vmatprep.subr.bf16.mxu0 0
    %3625 = vmatpush1.bf16.msra.mxu0 0
    %3626 = vmatprep.subr.bf16.mxu0 0
    %3627 = vmatpush1.bf16.msra.mxu0 0
    %3628 = vmatprep.subr.bf16.mxu0 0
    %3629 = vmatpush1.bf16.msra.mxu0 0
    %3630 = vmatprep.subr.bf16.mxu0 0
    %3631 = vmatpush1.bf16.msra.mxu0 0
    %3632 = vmatprep.subr.bf16.mxu0 0
    %3633 = vmatpush1.bf16.msra.mxu0 0
    %3634 = vmatprep.subr.bf16.mxu0 0
    %3635 = vmatpush1.bf16.msra.mxu0 0
    %3636 = vmatprep.mubr.bf16.mxu0 0
    %3637 = vmatmul.mubr.bf16.gmra.mrb[0].mxu0 %v3602
    %v3638 = vpop.f32.mrb[0].mxu0
    %v3639 = vadd.f32 0.0, %v3638
    %v3640 = vpop.f32.mrb[0].mxu0
    %v3641 = vpop.f32.mrb[0].mxu0
    %v3642 = vadd.f32 0.0, %v3641
    %v3643 = vpop.f32.mrb[0].mxu0
    %3644 = vmatprep.mubr.bf16.mxu0 0
    %3645 = vmatmul.mubr.bf16.gmra.mrb[0].mxu0 %v3603
    %v3646 = vpop.f32.mrb[0].mxu0
    %v3647 = vadd.f32 0.0, %v3646
    %v3648 = vpop.f32.mrb[0].mxu0
    %v3649 = vpop.f32.mrb[0].mxu0
    %v3650 = vadd.f32 0.0, %v3649
    %v3651 = vpop.f32.mrb[0].mxu0
    %3652 = vdwg.mxu0
    %v3653 = vadd.f32 %v3192, %v3639
    %v3654 = vadd.f32 %v3195, %v3642
    %v3655 = vadd.f32 %v3200, %v3647
    %v3656 = vadd.f32 %v3203, %v3650
    %3657 = vxpose.xlu0.b32.start [1/16] %v2289, 128
    %3658 = vxpose.xlu0.b32.cont [2/16] 0.0, 128
    %3659 = vxpose.xlu0.b32.cont [3/16] 0.0, 128
    %3660 = vxpose.xlu0.b32.cont [4/16] 0.0, 128
    %3661 = vxpose.xlu0.b32.cont [5/16] 0.0, 128
    %3662 = vxpose.xlu0.b32.cont [6/16] 0.0, 128
    %3663 = vxpose.xlu0.b32.cont [7/16] 0.0, 128
    %3664 = vxpose.xlu0.b32.cont [8/16] 0.0, 128
    %3665 = vxpose.xlu0.b32.cont [9/16] 0.0, 128
    %3666 = vxpose.xlu0.b32.cont [10/16] 0.0, 128
    %3667 = vxpose.xlu0.b32.cont [11/16] 0.0, 128
    %3668 = vxpose.xlu0.b32.cont [12/16] 0.0, 128
    %3669 = vxpose.xlu0.b32.cont [13/16] 0.0, 128
    %3670 = vxpose.xlu0.b32.cont [14/16] 0.0, 128
    %3671 = vxpose.xlu0.b32.cont [15/16] 0.0, 128
    %3672 = vxpose.xlu0.b32.end [16/16] 0.0, 128
    %v3673 = vpop.trf.xlu0
    %v3674 = vpop.trf.xlu0
    %v3675 = vpop.trf.xlu0
    %v3676 = vpop.trf.xlu0
    %v3677 = vpop.trf.xlu0
    %v3678 = vpop.trf.xlu0
    %v3679 = vpop.trf.xlu0
    %v3680 = vpop.trf.xlu0
    %v3681 = vpop.trf.xlu0
    %v3682 = vpop.trf.xlu0
    %v3683 = vpop.trf.xlu0
    %v3684 = vpop.trf.xlu0
    %v3685 = vpop.trf.xlu0
    %v3686 = vpop.trf.xlu0
    %v3687 = vpop.trf.xlu0
    %v3688 = vpop.trf.xlu0
    %v3690 = vsel %vm324, %v3673, 0
    %v3693 = vsel %vm324, %v3674, 0
    %v3696 = vsel %vm324, %v3675, 0
    %v3699 = vsel %vm324, %v3676, 0
    %v3702 = vsel %vm324, %v3677, 0
    %v3705 = vsel %vm324, %v3678, 0
    %v3708 = vsel %vm324, %v3679, 0
    %v3711 = vsel %vm324, %v3680, 0
    %v3714 = vsel %vm324, %v3681, 0
    %v3717 = vsel %vm324, %v3682, 0
    %v3720 = vsel %vm324, %v3683, 0
    %v3723 = vsel %vm324, %v3684, 0
    %v3726 = vsel %vm324, %v3685, 0
    %v3729 = vsel %vm324, %v3686, 0
    %v3732 = vsel %vm324, %v3687, 0
    %v3735 = vsel %vm324, %v3688, 0
    %3737 = vmatprep.subr.mxu0 0.0
    %3738 = vmatpush1.msra.mxu0 %v2269
    %3739 = vmatprep.subr.mxu0 0.0
    %3740 = vmatpush1.msra.mxu0 0.0
    %3741 = vmatprep.subr.mxu0 0.0
    %3742 = vmatpush1.msra.mxu0 0.0
    %3743 = vmatprep.subr.mxu0 0.0
    %3744 = vmatpush1.msra.mxu0 0.0
    %3745 = vmatprep.subr.mxu0 0.0
    %3746 = vmatpush1.msra.mxu0 0.0
    %3747 = vmatprep.subr.mxu0 0.0
    %3748 = vmatpush1.msra.mxu0 0.0
    %3749 = vmatprep.subr.mxu0 0.0
    %3750 = vmatpush1.msra.mxu0 0.0
    %3751 = vmatprep.subr.mxu0 0.0
    %3752 = vmatpush1.msra.mxu0 0.0
    %3753 = vmatprep.subr.mxu0 0.0
    %3754 = vmatpush1.msra.mxu0 0.0
    %3755 = vmatprep.subr.mxu0 0.0
    %3756 = vmatpush1.msra.mxu0 0.0
    %3757 = vmatprep.subr.mxu0 0.0
    %3758 = vmatpush1.msra.mxu0 0.0
    %3759 = vmatprep.subr.mxu0 0.0
    %3760 = vmatpush1.msra.mxu0 0.0
    %3761 = vmatprep.subr.mxu0 0.0
    %3762 = vmatpush1.msra.mxu0 0.0
    %3763 = vmatprep.subr.mxu0 0.0
    %3764 = vmatpush1.msra.mxu0 0.0
    %3765 = vmatprep.subr.mxu0 0.0
    %3766 = vmatpush1.msra.mxu0 0.0
    %3767 = vmatprep.subr.mxu0 0.0
    %3768 = vmatpush1.msra.mxu0 0.0
    %3769 = vmatprep.subr.mxu0 0.0
    %3770 = vmatpush1.msra.mxu0 0.0
    %3771 = vmatprep.subr.mxu0 0.0
    %3772 = vmatpush1.msra.mxu0 0.0
    %3773 = vmatprep.subr.mxu0 0.0
    %3774 = vmatpush1.msra.mxu0 0.0
    %3775 = vmatprep.subr.mxu0 0.0
    %3776 = vmatpush1.msra.mxu0 0.0
    %3777 = vmatprep.subr.mxu0 0.0
    %3778 = vmatpush1.msra.mxu0 0.0
    %3779 = vmatprep.subr.mxu0 0.0
    %3780 = vmatpush1.msra.mxu0 0.0
    %3781 = vmatprep.subr.mxu0 0.0
    %3782 = vmatpush1.msra.mxu0 0.0
    %3783 = vmatprep.subr.mxu0 0.0
    %3784 = vmatpush1.msra.mxu0 0.0
    %3785 = vmatprep.subr.mxu0 0.0
    %3786 = vmatpush1.msra.mxu0 0.0
    %3787 = vmatprep.subr.mxu0 0.0
    %3788 = vmatpush1.msra.mxu0 0.0
    %3789 = vmatprep.subr.mxu0 0.0
    %3790 = vmatpush1.msra.mxu0 0.0
    %3791 = vmatprep.subr.mxu0 0.0
    %3792 = vmatpush1.msra.mxu0 0.0
    %3793 = vmatprep.subr.mxu0 0.0
    %3794 = vmatpush1.msra.mxu0 0.0
    %3795 = vmatprep.subr.mxu0 0.0
    %3796 = vmatpush1.msra.mxu0 0.0
    %3797 = vmatprep.subr.mxu0 0.0
    %3798 = vmatpush1.msra.mxu0 0.0
    %3799 = vmatprep.subr.mxu0 0.0
    %3800 = vmatpush1.msra.mxu0 0.0
    %3801 = vmatprep.mubr.f32.mxu0 0.0
    %3802 = vmatmul.mubr.f32.gmra.mrb[0].mxu0 %v3690
    %v3803 = vpop.f32.mrb[0].mxu0
    %v3804 = vadd.f32 0.0, %v3803
    %v3805 = vpop.f32.mrb[0].mxu0
    %3806 = vmatprep.mubr.f32.mxu0 0.0
    %3807 = vmatmul.mubr.f32.gmra.mrb[0].mxu0 %v3693
    %v3808 = vpop.f32.mrb[0].mxu0
    %v3809 = vadd.f32 0.0, %v3808
    %v3810 = vpop.f32.mrb[0].mxu0
    %3811 = vmatprep.mubr.f32.mxu0 0.0
    %3812 = vmatmul.mubr.f32.gmra.mrb[0].mxu0 %v3696
    %v3813 = vpop.f32.mrb[0].mxu0
    %v3814 = vadd.f32 0.0, %v3813
    %v3815 = vpop.f32.mrb[0].mxu0
    %3816 = vmatprep.mubr.f32.mxu0 0.0
    %3817 = vmatmul.mubr.f32.gmra.mrb[0].mxu0 %v3699
    %v3818 = vpop.f32.mrb[0].mxu0
    %v3819 = vadd.f32 0.0, %v3818
    %v3820 = vpop.f32.mrb[0].mxu0
    %3821 = vmatprep.mubr.f32.mxu0 0.0
    %3822 = vmatmul.mubr.f32.gmra.mrb[0].mxu0 %v3702
    %v3823 = vpop.f32.mrb[0].mxu0
    %v3824 = vadd.f32 0.0, %v3823
    %v3825 = vpop.f32.mrb[0].mxu0
    %3826 = vmatprep.mubr.f32.mxu0 0.0
    %3827 = vmatmul.mubr.f32.gmra.mrb[0].mxu0 %v3705
    %v3828 = vpop.f32.mrb[0].mxu0
    %v3829 = vadd.f32 0.0, %v3828
    %v3830 = vpop.f32.mrb[0].mxu0
    %3831 = vmatprep.mubr.f32.mxu0 0.0
    %3832 = vmatmul.mubr.f32.gmra.mrb[0].mxu0 %v3708
    %v3833 = vpop.f32.mrb[0].mxu0
    %v3834 = vadd.f32 0.0, %v3833
    %v3835 = vpop.f32.mrb[0].mxu0
    %3836 = vmatprep.mubr.f32.mxu0 0.0
    %3837 = vmatmul.mubr.f32.gmra.mrb[0].mxu0 %v3711
    %v3838 = vpop.f32.mrb[0].mxu0
    %v3839 = vadd.f32 0.0, %v3838
    %v3840 = vpop.f32.mrb[0].mxu0
    %3841 = vmatprep.mubr.f32.mxu0 0.0
    %3842 = vmatmul.mubr.f32.gmra.mrb[0].mxu0 %v3714
    %v3843 = vpop.f32.mrb[0].mxu0
    %v3844 = vadd.f32 0.0, %v3843
    %v3845 = vpop.f32.mrb[0].mxu0
    %3846 = vmatprep.mubr.f32.mxu0 0.0
    %3847 = vmatmul.mubr.f32.gmra.mrb[0].mxu0 %v3717
    %v3848 = vpop.f32.mrb[0].mxu0
    %v3849 = vadd.f32 0.0, %v3848
    %v3850 = vpop.f32.mrb[0].mxu0
    %3851 = vmatprep.mubr.f32.mxu0 0.0
    %3852 = vmatmul.mubr.f32.gmra.mrb[0].mxu0 %v3720
    %v3853 = vpop.f32.mrb[0].mxu0
    %v3854 = vadd.f32 0.0, %v3853
    %v3855 = vpop.f32.mrb[0].mxu0
    %3856 = vmatprep.mubr.f32.mxu0 0.0
    %3857 = vmatmul.mubr.f32.gmra.mrb[0].mxu0 %v3723
    %v3858 = vpop.f32.mrb[0].mxu0
    %v3859 = vadd.f32 0.0, %v3858
    %v3860 = vpop.f32.mrb[0].mxu0
    %3861 = vmatprep.mubr.f32.mxu0 0.0
    %3862 = vmatmul.mubr.f32.gmra.mrb[0].mxu0 %v3726
    %v3863 = vpop.f32.mrb[0].mxu0
    %v3864 = vadd.f32 0.0, %v3863
    %v3865 = vpop.f32.mrb[0].mxu0
    %3866 = vmatprep.mubr.f32.mxu0 0.0
    %3867 = vmatmul.mubr.f32.gmra.mrb[0].mxu0 %v3729
    %v3868 = vpop.f32.mrb[0].mxu0
    %v3869 = vadd.f32 0.0, %v3868
    %v3870 = vpop.f32.mrb[0].mxu0
    %3871 = vmatprep.mubr.f32.mxu0 0.0
    %3872 = vmatmul.mubr.f32.gmra.mrb[0].mxu0 %v3732
    %v3873 = vpop.f32.mrb[0].mxu0
    %v3874 = vadd.f32 0.0, %v3873
    %v3875 = vpop.f32.mrb[0].mxu0
    %3876 = vmatprep.mubr.f32.mxu0 0.0
    %3877 = vmatmul.mubr.f32.gmra.mrb[0].mxu0 %v3735
    %v3878 = vpop.f32.mrb[0].mxu0
    %v3879 = vadd.f32 0.0, %v3878
    %v3880 = vpop.f32.mrb[0].mxu0
    %3881 = vdwg.mxu0
    %v3882 = vmax.f32 %v3804, %v3824
    %v3883 = vmax.f32 %v3809, %v3829
    %v3884 = vmax.f32 %v3814, %v3834
    %v3885 = vmax.f32 %v3819, %v3839
    %v3886 = vmax.f32 %v3882, %v3844
    %v3887 = vmax.f32 %v3883, %v3849
    %v3888 = vmax.f32 %v3884, %v3854
    %v3889 = vmax.f32 %v3885, %v3859
    %v3890 = vmax.f32 %v3886, %v3864
    %v3891 = vmax.f32 %v3887, %v3869
    %v3892 = vmax.f32 %v3888, %v3874
    %v3893 = vmax.f32 %v3889, %v3879
    %v3894 = vmax.f32 %v3890, %v3891
    %v3895 = vmax.f32 %v3892, %v3893
    %v3896 = vmax.f32 %v3894, %v3895
    %v3897 = vrot.slane %v3896, 4
    %v3898 = vmax.f32 %v3896, %v3897
    %v3899 = vrot.slane %v3898, 2
    %v3900 = vmax.f32 %v3898, %v3899
    %v3901 = vrot.slane %v3900, 1
    %v3902 = vmax.f32 %v3900, %v3901
    %v3903 = vsub.f32 %v3804, %v3902
    %v3904 = vsub.f32 %v3809, %v3902
    %v3905 = vsub.f32 %v3814, %v3902
    %v3906 = vsub.f32 %v3819, %v3902
    %v3907 = vsub.f32 %v3824, %v3902
    %v3908 = vsub.f32 %v3829, %v3902
    %v3909 = vsub.f32 %v3834, %v3902
    %v3910 = vsub.f32 %v3839, %v3902
    %v3911 = vsub.f32 %v3844, %v3902
    %v3912 = vsub.f32 %v3849, %v3902
    %v3913 = vsub.f32 %v3854, %v3902
    %v3914 = vsub.f32 %v3859, %v3902
    %v3915 = vsub.f32 %v3864, %v3902
    %v3916 = vsub.f32 %v3869, %v3902
    %v3917 = vsub.f32 %v3874, %v3902
    %v3918 = vsub.f32 %v3879, %v3902
    %v3919 = vmul.f32 %v3903, 1.442695
    %v3920 = vpow.pop %v3919
    %v3921 = vmul.f32 %v3904, 1.442695
    %v3922 = vpow.pop %v3921
    %v3923 = vmul.f32 %v3905, 1.442695
    %v3924 = vpow.pop %v3923
    %v3925 = vmul.f32 %v3906, 1.442695
    %v3926 = vpow.pop %v3925
    %v3927 = vmul.f32 %v3907, 1.442695
    %v3928 = vpow.pop %v3927
    %v3929 = vmul.f32 %v3908, 1.442695
    %v3930 = vpow.pop %v3929
    %v3931 = vmul.f32 %v3909, 1.442695
    %v3932 = vpow.pop %v3931
    %v3933 = vmul.f32 %v3910, 1.442695
    %v3934 = vpow.pop %v3933
    %v3935 = vmul.f32 %v3911, 1.442695
    %v3936 = vpow.pop %v3935
    %v3937 = vmul.f32 %v3912, 1.442695
    %v3938 = vpow.pop %v3937
    %v3939 = vmul.f32 %v3913, 1.442695
    %v3940 = vpow.pop %v3939
    %v3941 = vmul.f32 %v3914, 1.442695
    %v3942 = vpow.pop %v3941
    %v3943 = vmul.f32 %v3915, 1.442695
    %v3944 = vpow.pop %v3943
    %v3945 = vmul.f32 %v3916, 1.442695
    %v3946 = vpow.pop %v3945
    %v3947 = vmul.f32 %v3917, 1.442695
    %v3948 = vpow.pop %v3947
    %v3949 = vmul.f32 %v3918, 1.442695
    %v3950 = vpow.pop %v3949
    %v3951 = vadd.f32 %v3920, %v3922
    %v3952 = vadd.f32 %v3951, %v3924
    %v3953 = vadd.f32 %v3952, %v3926
    %v3954 = vadd.f32 %v3953, %v3928
    %v3955 = vadd.f32 %v3954, %v3930
    %v3956 = vadd.f32 %v3955, %v3932
    %v3957 = vadd.f32 %v3956, %v3934
    %v3958 = vadd.f32 %v3957, %v3936
    %v3959 = vadd.f32 %v3958, %v3938
    %v3960 = vadd.f32 %v3959, %v3940
    %v3961 = vadd.f32 %v3960, %v3942
    %v3962 = vadd.f32 %v3961, %v3944
    %v3963 = vadd.f32 %v3962, %v3946
    %v3964 = vadd.f32 %v3963, %v3948
    %v3965 = vadd.f32 %v3964, %v3950
    %v3966 = vrot.slane %v3965, 4
    %v3967 = vadd.f32 %v3965, %v3966
    %v3968 = vrot.slane %v3967, 2
    %v3969 = vadd.f32 %v3967, %v3968
    %v3970 = vrot.slane %v3969, 1
    %v3971 = vadd.f32 %v3969, %v3970
    %v3972 = vrcp.pop %v3971
    %v3973 = vmul.f32 %v3971, %v3972
    %v3974 = vsub.f32 2.0, %v3973
    %v3975 = vmul.f32 %v3972, %v3974
    %v3976 = vmul.f32 %v3920, %v3975
    %v3977 = vmul.f32 %v3922, %v3975
    %v3978 = vmul.f32 %v3924, %v3975
    %v3979 = vmul.f32 %v3926, %v3975
    %v3980 = vmul.f32 %v3928, %v3975
    %v3981 = vmul.f32 %v3930, %v3975
    %v3982 = vmul.f32 %v3932, %v3975
    %v3983 = vmul.f32 %v3934, %v3975
    %v3984 = vmul.f32 %v3936, %v3975
    %v3985 = vmul.f32 %v3938, %v3975
    %v3986 = vmul.f32 %v3940, %v3975
    %v3987 = vmul.f32 %v3942, %v3975
    %v3988 = vmul.f32 %v3944, %v3975
    %v3989 = vmul.f32 %v3946, %v3975
    %v3990 = vmul.f32 %v3948, %v3975
    %v3991 = vmul.f32 %v3950, %v3975
    %v3992 = vpack.c.bf16 %v3977, %v3976
    %v3993 = vpack.c.bf16 %v3979, %v3978
    %v3994 = vpack.c.bf16 %v3981, %v3980
    %v3995 = vpack.c.bf16 %v3983, %v3982
    %v3996 = vpack.c.bf16 %v3985, %v3984
    %v3997 = vpack.c.bf16 %v3987, %v3986
    %v3998 = vpack.c.bf16 %v3989, %v3988
    %v3999 = vpack.c.bf16 %v3991, %v3990
    %v4000 = vpack.c.bf16 %v2309, %v2309
    %v4002 = vsel %vm653, %v4000, 0
    %4004 = vmatprep.subr.bf16.mxu0 0
    %4005 = vmatpush1.bf16.msra.mxu0 %v4002
    %4006 = vmatprep.subr.bf16.mxu0 0
    %4007 = vmatpush1.bf16.msra.mxu0 0
    %4008 = vmatprep.subr.bf16.mxu0 0
    %4009 = vmatpush1.bf16.msra.mxu0 0
    %4010 = vmatprep.subr.bf16.mxu0 0
    %4011 = vmatpush1.bf16.msra.mxu0 0
    %4012 = vmatprep.subr.bf16.mxu0 0
    %4013 = vmatpush1.bf16.msra.mxu0 0
    %4014 = vmatprep.subr.bf16.mxu0 0
    %4015 = vmatpush1.bf16.msra.mxu0 0
    %4016 = vmatprep.subr.bf16.mxu0 0
    %4017 = vmatpush1.bf16.msra.mxu0 0
    %4018 = vmatprep.subr.bf16.mxu0 0
    %4019 = vmatpush1.bf16.msra.mxu0 0
    %4020 = vmatprep.subr.bf16.mxu0 0
    %4021 = vmatpush1.bf16.msra.mxu0 0
    %4022 = vmatprep.subr.bf16.mxu0 0
    %4023 = vmatpush1.bf16.msra.mxu0 0
    %4024 = vmatprep.subr.bf16.mxu0 0
    %4025 = vmatpush1.bf16.msra.mxu0 0
    %4026 = vmatprep.subr.bf16.mxu0 0
    %4027 = vmatpush1.bf16.msra.mxu0 0
    %4028 = vmatprep.subr.bf16.mxu0 0
    %4029 = vmatpush1.bf16.msra.mxu0 0
    %4030 = vmatprep.subr.bf16.mxu0 0
    %4031 = vmatpush1.bf16.msra.mxu0 0
    %4032 = vmatprep.subr.bf16.mxu0 0
    %4033 = vmatpush1.bf16.msra.mxu0 0
    %4034 = vmatprep.subr.bf16.mxu0 0
    %4035 = vmatpush1.bf16.msra.mxu0 0
    %4036 = vmatprep.mubr.bf16.mxu0 0
    %4037 = vmatmul.mubr.bf16.gmra.mrb[0].mxu0 %v2042
    %v4038 = vpop.f32.mrb[0].mxu0
    %v4039 = vadd.f32 0.0, %v4038
    %v4040 = vpop.f32.mrb[0].mxu0
    %v4041 = vpop.f32.mrb[0].mxu0
    %v4042 = vadd.f32 0.0, %v4041
    %v4043 = vpop.f32.mrb[0].mxu0
    %4044 = vmatprep.mubr.bf16.mxu0 0
    %4045 = vmatmul.mubr.bf16.gmra.mrb[0].mxu0 %v2045
    %v4046 = vpop.f32.mrb[0].mxu0
    %v4047 = vadd.f32 0.0, %v4046
    %v4048 = vpop.f32.mrb[0].mxu0
    %v4049 = vpop.f32.mrb[0].mxu0
    %v4050 = vadd.f32 0.0, %v4049
    %v4051 = vpop.f32.mrb[0].mxu0
    %4052 = vdwg.mxu0
    %v4053 = vpack.c.bf16 %v4042, %v4039
    %v4054 = vpack.c.bf16 %v4050, %v4047
    %4055 = vmatprep.subr.bf16.mxu0 0
    %4056 = vmatpush1.bf16.msra.mxu0 %v3992
    %4057 = vmatprep.subr.bf16.mxu0 0
    %4058 = vmatpush1.bf16.msra.mxu0 %v3993
    %4059 = vmatprep.subr.bf16.mxu0 0
    %4060 = vmatpush1.bf16.msra.mxu0 %v3994
    %4061 = vmatprep.subr.bf16.mxu0 0
    %4062 = vmatpush1.bf16.msra.mxu0 %v3995
    %4063 = vmatprep.subr.bf16.mxu0 0
    %4064 = vmatpush1.bf16.msra.mxu0 %v3996
    %4065 = vmatprep.subr.bf16.mxu0 0
    %4066 = vmatpush1.bf16.msra.mxu0 %v3997
    %4067 = vmatprep.subr.bf16.mxu0 0
    %4068 = vmatpush1.bf16.msra.mxu0 %v3998
    %4069 = vmatprep.subr.bf16.mxu0 0
    %4070 = vmatpush1.bf16.msra.mxu0 %v3999
    %4071 = vmatprep.subr.bf16.mxu0 0
    %4072 = vmatpush1.bf16.msra.mxu0 0
    %4073 = vmatprep.subr.bf16.mxu0 0
    %4074 = vmatpush1.bf16.msra.mxu0 0
    %4075 = vmatprep.subr.bf16.mxu0 0
    %4076 = vmatpush1.bf16.msra.mxu0 0
    %4077 = vmatprep.subr.bf16.mxu0 0
    %4078 = vmatpush1.bf16.msra.mxu0 0
    %4079 = vmatprep.subr.bf16.mxu0 0
    %4080 = vmatpush1.bf16.msra.mxu0 0
    %4081 = vmatprep.subr.bf16.mxu0 0
    %4082 = vmatpush1.bf16.msra.mxu0 0
    %4083 = vmatprep.subr.bf16.mxu0 0
    %4084 = vmatpush1.bf16.msra.mxu0 0
    %4085 = vmatprep.subr.bf16.mxu0 0
    %4086 = vmatpush1.bf16.msra.mxu0 0
    %4087 = vmatprep.mubr.bf16.mxu0 0
    %4088 = vmatmul.mubr.bf16.gmra.mrb[0].mxu0 %v4053
    %v4089 = vpop.f32.mrb[0].mxu0
    %v4090 = vadd.f32 0.0, %v4089
    %v4091 = vpop.f32.mrb[0].mxu0
    %v4092 = vpop.f32.mrb[0].mxu0
    %v4093 = vadd.f32 0.0, %v4092
    %v4094 = vpop.f32.mrb[0].mxu0
    %4095 = vmatprep.mubr.bf16.mxu0 0
    %4096 = vmatmul.mubr.bf16.gmra.mrb[0].mxu0 %v4054
    %v4097 = vpop.f32.mrb[0].mxu0
    %v4098 = vadd.f32 0.0, %v4097
    %v4099 = vpop.f32.mrb[0].mxu0
    %v4100 = vpop.f32.mrb[0].mxu0
    %v4101 = vadd.f32 0.0, %v4100
    %v4102 = vpop.f32.mrb[0].mxu0
    %4103 = vdwg.mxu0
    %v4104 = vadd.f32 %v3653, %v4090
    %v4105 = vadd.f32 %v3654, %v4093
    %v4106 = vadd.f32 %v3655, %v4098
    %v4107 = vadd.f32 %v3656, %v4101
    %v4108 = vadd.f32 %v4104, %v2157
    %v4109 = vadd.f32 %v4105, %v2162
    %v4110 = vadd.f32 %v4106, %v2167
    %v4111 = vadd.f32 %v4107, %v2172
    %s4112 = scalar_lea.vmem [#allocation2], 32
    %4113 = vst [vmem:[%s4112] sm:$0xff] %v4108
    %4114 = vst [vmem:[%s4112 + $0x8] sm:$0xff] %v4109
    %4115 = vst [vmem:[%s4112 + $0x10] sm:$0xff] %v4110
    %4116 = vst [vmem:[%s4112 + $0x18] sm:$0xff] %v4111
    // Predicated region
    $region22: #{tpu_custom_call.1} parent=1 // pred_check
      _
    $region23: #{tpu_custom_call.1} parent=1 // pred_check_branch
      %4118 = sbr.rel (0) target = $region25
    $region24: #{tpu_custom_call.1} parent=1 // pred_region
      %s4120 = ssub.s32 1024, 1024
      %4121 = vsyncadd [#allocation3], %s4120
      %s4122 = sshll.u32 [#allocation2], 4
      %s4123 = int_to_ptr.vmem [resolvable:$true] %s4122
      %4128 = dma.vmem_to_hbm [thread:$0]  %s4123, 1024, %s5, [#allocation3], 128, 128, 8
    $region25: #{tpu_custom_call.1} parent=1 // pred_fallthru
      _
    // Predicated region
    $region26: #{tpu_custom_call.1} parent=1 // pred_check
      _
    $region27: #{tpu_custom_call.1} parent=1 // pred_check_branch
      %4130 = sbr.rel (0) target = $region29
    $region28: #{tpu_custom_call.1} parent=1 // pred_region
      %4131 = dma.done [#allocation3], 1024
    $region29: #{tpu_custom_call.1} parent=1 // pred_fallthru
      _
    %4132 = vsyncpa [#allocation3], 1

</llo_original>
